<compile_context>
chip_gen: v5e
topology: v5e:2x2
jax: 0.10.0
libtpu: 0.0.40
codegen_flags: <defaults>
</compile_context>

<pallas_src>
import jax
import jax.numpy as jnp
from jax.experimental import pallas as pl
from jax.experimental.pallas import tpu as pltpu

IN_F, HID_F, OUT_F = 28 * 28, 800, 10      # logical sizes
IN_P, HID_P, OUT_P = 896, 896, 128         # padded (lane/MXU aligned) sizes


def _round_up(n, m):
    return ((n + m - 1) // m) * m


def _pad2(a, shape):
    """Zero-pad a 2-D array up to `shape`."""
    out = jnp.zeros(shape, a.dtype)
    return out.at[: a.shape[0], : a.shape[1]].set(a)


def mlp_kernel(x_ref, w1_ref, b1_ref, w2_ref, b2_ref, w3_ref, b3_ref,
               o_ref, h1_ref, h2_ref):
    # fc1 + relu (bf16 x bf16 -> f32 accum), store activation as bf16 scratch.
    h1 = jnp.dot(x_ref[...], w1_ref[...], preferred_element_type=jnp.float32)
    h1_ref[...] = jnp.maximum(h1 + b1_ref[...], 0.0).astype(h1_ref.dtype)
    # fc2 + relu
    h2 = jnp.dot(h1_ref[...], w2_ref[...], preferred_element_type=jnp.float32)
    h2_ref[...] = jnp.maximum(h2 + b2_ref[...], 0.0).astype(h2_ref.dtype)
    # fc3 (logits, no activation) — lane-dense 128-wide store (real lanes: 0..9).
    o_ref[...] = (jnp.dot(h2_ref[...], w3_ref[...],
                          preferred_element_type=jnp.float32) + b3_ref[...]
                  ).astype(o_ref.dtype)


def net_forward(x, params, tb=512):
    """x: any shape whose trailing elements flatten to 784 per row (e.g. (B,1,28,28)).
    Returns logits of shape (B, 10), float32."""
    w1, b1, w2, b2, w3, b3 = params
    x2d = x.reshape(-1, IN_F)
    B = x2d.shape[0]

    # Batch tile: at most `tb` rows, at least an 8-row multiple; pad batch to a
    # multiple of TB so every grid step sees a full block.
    TB = min(tb, _round_up(B, 8))
    Bp = _round_up(B, TB)

    # One-time pad + cast of the operands (all plain XLA ops outside the kernel).
    xp = jnp.zeros((Bp, IN_P), jnp.bfloat16).at[:B, :IN_F].set(
        x2d.astype(jnp.bfloat16))
    w1p = _pad2(w1.astype(jnp.bfloat16), (IN_P, HID_P))
    w2p = _pad2(w2.astype(jnp.bfloat16), (HID_P, HID_P))
    w3p = _pad2(w3.astype(jnp.bfloat16), (HID_P, OUT_P))
    b1p = _pad2(b1.astype(jnp.float32), (1, HID_P))
    b2p = _pad2(b2.astype(jnp.float32), (1, HID_P))
    b3p = _pad2(b3.astype(jnp.float32), (1, OUT_P))

    const = lambda i: (0, 0)   # weights/biases: same block every step -> resident

    out = pl.pallas_call(
        mlp_kernel,
        out_shape=jax.ShapeDtypeStruct((Bp, OUT_P), jnp.float32),
        grid_spec=pltpu.PrefetchScalarGridSpec(
            num_scalar_prefetch=0,
            grid=(Bp // TB,),
            in_specs=[
                pl.BlockSpec((TB, IN_P), lambda i: (i, 0)),     # x tile
                pl.BlockSpec((IN_P, HID_P), const),             # w1
                pl.BlockSpec((1, HID_P), const),                # b1
                pl.BlockSpec((HID_P, HID_P), const),            # w2
                pl.BlockSpec((1, HID_P), const),                # b2
                pl.BlockSpec((HID_P, OUT_P), const),            # w3
                pl.BlockSpec((1, OUT_P), const),                # b3
            ],
            out_specs=pl.BlockSpec((TB, OUT_P), lambda i: (i, 0)),
            scratch_shapes=[
                pltpu.VMEM((TB, HID_P), jnp.bfloat16),          # h1
                pltpu.VMEM((TB, HID_P), jnp.bfloat16),          # h2
            ],
        ),
        compiler_params=pltpu.CompilerParams(
            dimension_semantics=("parallel",),   # megacore on v7x; no-op elsewhere
            vmem_limit_bytes=32 << 20,
        ),
    )(xp, w1p, b1p, w2p, b2p, w3p, b3p)

    return out[:B, :OUT_F]


def init_params(key):
    """Deterministic synthetic parameters matching nn.Linear fan-in init,
    stored transposed as (in, out) so each layer is x @ W + b."""
    k1, k2, k3, k4, k5, k6 = jax.random.split(key, 6)

    def lin(kw, kb, fan_in, fan_out):
        bound = 1.0 / jnp.sqrt(fan_in)
        w = jax.random.uniform(kw, (fan_in, fan_out), jnp.float32, -bound, bound)
        b = jax.random.uniform(kb, (1, fan_out), jnp.float32, -bound, bound)
        return w, b

    w1, b1 = lin(k1, k2, IN_F, HID_F)
    w2, b2 = lin(k3, k4, HID_F, HID_F)
    w3, b3 = lin(k5, k6, HID_F, OUT_F)
    return (w1, b1, w2, b2, w3, b3)


def reference_forward(x, params):
    """Pure-JAX reference mimicking the kernel's bf16 operands / f32 accumulation."""
    w1, b1, w2, b2, w3, b3 = params
    x2d = x.reshape(-1, IN_F).astype(jnp.bfloat16)
    h1 = jnp.maximum(
        jnp.dot(x2d, w1.astype(jnp.bfloat16),
                preferred_element_type=jnp.float32) + b1, 0.0)
    h2 = jnp.maximum(
        jnp.dot(h1.astype(jnp.bfloat16), w2.astype(jnp.bfloat16),
                preferred_element_type=jnp.float32) + b2, 0.0)
    return jnp.dot(h2.astype(jnp.bfloat16), w3.astype(jnp.bfloat16),
                   preferred_element_type=jnp.float32) + b3


if __name__ == "__main__":
    key = jax.random.PRNGKey(0)
    kx, kp = jax.random.split(key)

    # Small batch of MNIST-shaped inputs (NCHW), as the PyTorch module expects.
    B = 8
    x = jax.random.normal(kx, (B, 1, 28, 28), dtype=jnp.float32)
    params = init_params(kp)

    out = net_forward(x, params)
    out = jax.block_until_ready(out)

    ref = reference_forward(x, params)
    assert out.shape == (B, OUT_F), out.shape
    assert jnp.allclose(out, ref, atol=2e-2, rtol=2e-2), (
        "mismatch vs JAX reference: max abs diff = "
        f"{float(jnp.max(jnp.abs(out - ref)))}")

    print("KERNEL_OK")
</pallas_src>

<mosaic_0001>
module attributes {stable_mosaic.version = 11 : i64} {
  func.func @mlp_kernel(%arg0: i32, %arg1: memref<8x896xbf16, #tpu.memory_space<vmem>>, %arg2: memref<896x896xbf16, #tpu.memory_space<vmem>>, %arg3: memref<1x896xf32, #tpu.memory_space<vmem>>, %arg4: memref<896x896xbf16, #tpu.memory_space<vmem>>, %arg5: memref<1x896xf32, #tpu.memory_space<vmem>>, %arg6: memref<896x128xbf16, #tpu.memory_space<vmem>>, %arg7: memref<1x128xf32, #tpu.memory_space<vmem>>, %arg8: memref<8x128xf32, #tpu.memory_space<vmem>>, %arg9: memref<8x896xbf16, #tpu.memory_space<vmem>>, %arg10: memref<8x896xbf16, #tpu.memory_space<vmem>>) attributes {dimension_semantics = [#tpu.dimension_semantics<parallel>], iteration_bounds = array<i64: 1>, scalar_prefetch = 0 : i64, scratch_operands = 2 : i64, tpu.core_type = #tpu.core_type<tc>, window_params = [{transform_indices = @transform_0, window_bounds = array<i64: 8, 896>}, {pipeline_mode = #tpu.pipeline_mode<synchronous>, transform_indices = @transform_1, window_bounds = array<i64: 896, 896>}, {pipeline_mode = #tpu.pipeline_mode<synchronous>, transform_indices = @transform_2, window_bounds = array<i64: 1, 896>}, {pipeline_mode = #tpu.pipeline_mode<synchronous>, transform_indices = @transform_3, window_bounds = array<i64: 896, 896>}, {pipeline_mode = #tpu.pipeline_mode<synchronous>, transform_indices = @transform_4, window_bounds = array<i64: 1, 896>}, {pipeline_mode = #tpu.pipeline_mode<synchronous>, transform_indices = @transform_5, window_bounds = array<i64: 896, 128>}, {pipeline_mode = #tpu.pipeline_mode<synchronous>, transform_indices = @transform_6, window_bounds = array<i64: 1, 128>}, {transform_indices = @transform_7, window_bounds = array<i64: 8, 128>}]} {
    %c0 = arith.constant 0 : index
    %c0_0 = arith.constant 0 : index
    %0 = vector.load %arg1[%c0, %c0_0] : memref<8x896xbf16, #tpu.memory_space<vmem>>, vector<8x896xbf16>
    %c0_1 = arith.constant 0 : index
    %c0_2 = arith.constant 0 : index
    %1 = vector.load %arg2[%c0_1, %c0_2] : memref<896x896xbf16, #tpu.memory_space<vmem>>, vector<896x896xbf16>
    %cst = arith.constant dense<0.000000e+00> : vector<8x896xf32>
    %2 = tpu.matmul %0, %1, %cst {dimension_numbers = #tpu.dot_dimension_numbers<[1], [0], [0], [1], [0, 0, 1, 1], [], []>} : vector<8x896xbf16>, vector<896x896xbf16>, vector<8x896xf32> -> vector<8x896xf32>
    %c0_3 = arith.constant 0 : index
    %c0_4 = arith.constant 0 : index
    %3 = vector.load %arg3[%c0_3, %c0_4] : memref<1x896xf32, #tpu.memory_space<vmem>>, vector<1x896xf32>
    %4 = vector.broadcast %3 : vector<1x896xf32> to vector<8x896xf32>
    %5 = arith.addf %2, %4 : vector<8x896xf32>
    %cst_5 = arith.constant 0.000000e+00 : f32
    %6 = vector.broadcast %cst_5 : f32 to vector<8x896xf32>
    %7 = arith.maximumf %5, %6 : vector<8x896xf32>
    %8 = arith.truncf %7 : vector<8x896xf32> to vector<8x896xbf16>
    %c0_6 = arith.constant 0 : index
    %c0_7 = arith.constant 0 : index
    %9 = vector.load %arg9[%c0_6, %c0_7] : memref<8x896xbf16, #tpu.memory_space<vmem>>, vector<8x896xbf16>
    tpu.vector_store %arg9[%c0_6, %c0_7], %8 {strides = array<i32>} : memref<8x896xbf16, #tpu.memory_space<vmem>>, vector<8x896xbf16>,
    %c0_8 = arith.constant 0 : index
    %c0_9 = arith.constant 0 : index
    %10 = vector.load %arg9[%c0_8, %c0_9] : memref<8x896xbf16, #tpu.memory_space<vmem>>, vector<8x896xbf16>
    %c0_10 = arith.constant 0 : index
    %c0_11 = arith.constant 0 : index
    %11 = vector.load %arg4[%c0_10, %c0_11] : memref<896x896xbf16, #tpu.memory_space<vmem>>, vector<896x896xbf16>
    %cst_12 = arith.constant dense<0.000000e+00> : vector<8x896xf32>
    %12 = tpu.matmul %10, %11, %cst_12 {dimension_numbers = #tpu.dot_dimension_numbers<[1], [0], [0], [1], [0, 0, 1, 1], [], []>} : vector<8x896xbf16>, vector<896x896xbf16>, vector<8x896xf32> -> vector<8x896xf32>
    %c0_13 = arith.constant 0 : index
    %c0_14 = arith.constant 0 : index
    %13 = vector.load %arg5[%c0_13, %c0_14] : memref<1x896xf32, #tpu.memory_space<vmem>>, vector<1x896xf32>
    %14 = vector.broadcast %13 : vector<1x896xf32> to vector<8x896xf32>
    %15 = arith.addf %12, %14 : vector<8x896xf32>
    %cst_15 = arith.constant 0.000000e+00 : f32
    %16 = vector.broadcast %cst_15 : f32 to vector<8x896xf32>
    %17 = arith.maximumf %15, %16 : vector<8x896xf32>
    %18 = arith.truncf %17 : vector<8x896xf32> to vector<8x896xbf16>
    %c0_16 = arith.constant 0 : index
    %c0_17 = arith.constant 0 : index
    %19 = vector.load %arg10[%c0_16, %c0_17] : memref<8x896xbf16, #tpu.memory_space<vmem>>, vector<8x896xbf16>
    tpu.vector_store %arg10[%c0_16, %c0_17], %18 {strides = array<i32>} : memref<8x896xbf16, #tpu.memory_space<vmem>>, vector<8x896xbf16>,
    %c0_18 = arith.constant 0 : index
    %c0_19 = arith.constant 0 : index
    %20 = vector.load %arg10[%c0_18, %c0_19] : memref<8x896xbf16, #tpu.memory_space<vmem>>, vector<8x896xbf16>
    %c0_20 = arith.constant 0 : index
    %c0_21 = arith.constant 0 : index
    %21 = vector.load %arg6[%c0_20, %c0_21] : memref<896x128xbf16, #tpu.memory_space<vmem>>, vector<896x128xbf16>
    %cst_22 = arith.constant dense<0.000000e+00> : vector<8x128xf32>
    %22 = tpu.matmul %20, %21, %cst_22 {dimension_numbers = #tpu.dot_dimension_numbers<[1], [0], [0], [1], [0, 0, 1, 1], [], []>} : vector<8x896xbf16>, vector<896x128xbf16>, vector<8x128xf32> -> vector<8x128xf32>
    %c0_23 = arith.constant 0 : index
    %c0_24 = arith.constant 0 : index
    %23 = vector.load %arg7[%c0_23, %c0_24] : memref<1x128xf32, #tpu.memory_space<vmem>>, vector<1x128xf32>
    %24 = vector.broadcast %23 : vector<1x128xf32> to vector<8x128xf32>
    %25 = arith.addf %22, %24 : vector<8x128xf32>
    %c0_25 = arith.constant 0 : index
    %c0_26 = arith.constant 0 : index
    %26 = vector.load %arg8[%c0_25, %c0_26] : memref<8x128xf32, #tpu.memory_space<vmem>>, vector<8x128xf32>
    tpu.vector_store %arg8[%c0_25, %c0_26], %25 {strides = array<i32>} : memref<8x128xf32, #tpu.memory_space<vmem>>, vector<8x128xf32>,
    return
  }
  func.func @transform_0(%arg0: i32) -> (i32, i32) {
    %c0_i32 = arith.constant 0 : i32
    %c0_i32_0 = arith.constant 0 : i32
    return %arg0, %c0_i32 : i32, i32
  }
  func.func @transform_1(%arg0: i32) -> (i32, i32) {
    %c0_i32 = arith.constant 0 : i32
    %c0_i32_0 = arith.constant 0 : i32
    %c0_i32_1 = arith.constant 0 : i32
    return %c0_i32, %c0_i32_0 : i32, i32
  }
  func.func @transform_2(%arg0: i32) -> (i32, i32) {
    %c0_i32 = arith.constant 0 : i32
    %c0_i32_0 = arith.constant 0 : i32
    %c0_i32_1 = arith.constant 0 : i32
    return %c0_i32, %c0_i32_0 : i32, i32
  }
  func.func @transform_3(%arg0: i32) -> (i32, i32) {
    %c0_i32 = arith.constant 0 : i32
    %c0_i32_0 = arith.constant 0 : i32
    %c0_i32_1 = arith.constant 0 : i32
    return %c0_i32, %c0_i32_0 : i32, i32
  }
  func.func @transform_4(%arg0: i32) -> (i32, i32) {
    %c0_i32 = arith.constant 0 : i32
    %c0_i32_0 = arith.constant 0 : i32
    %c0_i32_1 = arith.constant 0 : i32
    return %c0_i32, %c0_i32_0 : i32, i32
  }
  func.func @transform_5(%arg0: i32) -> (i32, i32) {
    %c0_i32 = arith.constant 0 : i32
    %c0_i32_0 = arith.constant 0 : i32
    %c0_i32_1 = arith.constant 0 : i32
    return %c0_i32, %c0_i32_0 : i32, i32
  }
  func.func @transform_6(%arg0: i32) -> (i32, i32) {
    %c0_i32 = arith.constant 0 : i32
    %c0_i32_0 = arith.constant 0 : i32
    %c0_i32_1 = arith.constant 0 : i32
    return %c0_i32, %c0_i32_0 : i32, i32
  }
  func.func @transform_7(%arg0: i32) -> (i32, i32) {
    %c0_i32 = arith.constant 0 : i32
    %c0_i32_0 = arith.constant 0 : i32
    return %arg0, %c0_i32 : i32, i32
  }
}

</mosaic_0001>

<llo_original>
// kernel: tpu_custom_call.1
$region0: #{tpu_custom_call.1}
  #allocation0 [shape = 'u32[]', space=smem, size = 0x4, offset = 0x4, fixed_abs, tag = 'smem constant byte address 0x4 - core index']
  #allocation1 [shape = 'u32[72,128]{1,0:T(1,128)}', space=vmem, size = 0x9000, scoped, tag = 'internal scratch']
  #allocation2 [shape = 'bf16[8,896]{1,0:T(8,128)(2,1)}', space=vmem, size = 0x3800, scoped, tag = 'scratch operand']
  #allocation3 [shape = 'bf16[8,896]{1,0:T(8,128)(2,1)}', space=vmem, size = 0x3800, scoped, tag = 'scratch operand']
  %s0 = inlined_call_operand.hbm [shape: bf16[8,896], index: 0, kind: input, shape index: {}]
  %s1 = inlined_call_operand.hbm [shape: bf16[896,896], index: 1, kind: input, shape index: {}]
  %s2 = inlined_call_operand.hbm [shape: f32[1,896], index: 2, kind: input, shape index: {}]
  %s3 = inlined_call_operand.hbm [shape: bf16[896,896], index: 3, kind: input, shape index: {}]
  %s4 = inlined_call_operand.hbm [shape: f32[1,896], index: 4, kind: input, shape index: {}]
  %s5 = inlined_call_operand.hbm [shape: bf16[896,128], index: 5, kind: input, shape index: {}]
  %s6 = inlined_call_operand.hbm [shape: f32[1,128], index: 6, kind: input, shape index: {}]
  %s7 = inlined_call_operand.hbm [shape: f32[8,128], index: 7, kind: output, shape index: {}]
  %s8 = sld [smem:[#allocation0]]
  $region66: #{tpu_custom_call.1} parent=0
    _
  %s10 = ssub.s32 1, %s8
  %s11 = scalar_select 0, %s10, %s8
  $region1: #{tpu_custom_call.1} parent=0
    #allocation4 [shape = 'u8[14336]{0}', space=vmem, size = 0x3800, scoped, tag = 'input window, operand 0, single buffered']
    #allocation5 [shape = 's32[1]{0}', space=sflag, size = 0x4, scoped, tag = 'scoped memory for tpu_custom_call.1']
    #allocation6 [shape = 's32[1]{0}', space=sflag, size = 0x4, scoped, tag = 'scoped memory for tpu_custom_call.1']
    #allocation7 [shape = 'u8[1605632]{0}', space=vmem, size = 0x188000, scoped, tag = 'input window, operand 1, single buffered']
    #allocation8 [shape = 's32[1]{0}', space=sflag, size = 0x4, scoped, tag = 'scoped memory for tpu_custom_call.1']
    #allocation9 [shape = 'u8[3584]{0}', space=vmem, size = 0x1000, scoped, tag = 'input window, operand 2, single buffered']
    #allocation10 [shape = 'u8[1605632]{0}', space=vmem, size = 0x188000, scoped, tag = 'input window, operand 3, single buffered']
    #allocation11 [shape = 's32[1]{0}', space=sflag, size = 0x4, scoped, tag = 'scoped memory for tpu_custom_call.1']
    #allocation12 [shape = 'u8[3584]{0}', space=vmem, size = 0x1000, scoped, tag = 'input window, operand 4, single buffered']
    #allocation13 [shape = 'u8[229376]{0}', space=vmem, size = 0x38000, scoped, tag = 'input window, operand 5, single buffered']
    #allocation14 [shape = 's32[1]{0}', space=sflag, size = 0x4, scoped, tag = 'scoped memory for tpu_custom_call.1']
    #allocation15 [shape = 'u8[512]{0}', space=vmem, size = 0x400, scoped, tag = 'input window, operand 6, single buffered']
    #allocation16 [shape = 'u8[4096]{0}', space=vmem, size = 0x1000, scoped, tag = 'output window, operand 0, single buffered']
    %12 = vsyncpa [#allocation5], 0
    %13 = vsyncpa [#allocation8], 0
    %14 = vsyncpa [#allocation11], 0
    %15 = vsyncpa [#allocation14], 0
    %16 = vsyncpa [#allocation6], 0
    // Predicated region
    $region2: #{tpu_custom_call.1} parent=1 // pred_check
      _
    $region3: #{tpu_custom_call.1} parent=1 // pred_check_branch
      %18 = sbr.rel (0) target = $region5
    $region4: #{tpu_custom_call.1} parent=1 // pred_region
      %20 = vsyncadd [#allocation5], 0
      %s22 = sshll.u32 %s0, 4
      %s23 = int_to_ptr.hbm [resolvable:$true] %s22
      %s24 = sshll.u32 [#allocation4], 4
      %s25 = int_to_ptr.vmem [resolvable:$true] %s24
      %27 = dma.hbm_to_vmem [thread:$0]  %s23, 448, %s25, [#allocation5]
    $region5: #{tpu_custom_call.1} parent=1 // pred_fallthru
      _
    // Predicated region
    $region6: #{tpu_custom_call.1} parent=1 // pred_check
      _
    $region7: #{tpu_custom_call.1} parent=1 // pred_check_branch
      %29 = sbr.rel (0) target = $region9
    $region8: #{tpu_custom_call.1} parent=1 // pred_region
      %31 = vsyncadd [#allocation8], 0
      %s32 = sshll.u32 %s1, 4
      %s33 = int_to_ptr.hbm [resolvable:$true] %s32
      %s34 = sshll.u32 [#allocation7], 4
      %s35 = int_to_ptr.vmem [resolvable:$true] %s34
      %40 = dma.hbm_to_vmem [thread:$0]  %s33, 50176, %s35, [#allocation8], 448, 448, 28
    $region9: #{tpu_custom_call.1} parent=1 // pred_fallthru
      _
    // Predicated region
    $region10: #{tpu_custom_call.1} parent=1 // pred_check
      _
    $region11: #{tpu_custom_call.1} parent=1 // pred_check_branch
      %42 = sbr.rel (0) target = $region13
    $region12: #{tpu_custom_call.1} parent=1 // pred_region
      %44 = vsyncadd [#allocation8], 0
      %s46 = sshll.u32 %s2, 4
      %s47 = int_to_ptr.hbm [resolvable:$true] %s46
      %s48 = sshll.u32 [#allocation9], 4
      %s49 = int_to_ptr.vmem [resolvable:$true] %s48
      %51 = dma.hbm_to_vmem [thread:$0]  %s47, 112, %s49, [#allocation8]
    $region13: #{tpu_custom_call.1} parent=1 // pred_fallthru
      _
    // Predicated region
    $region14: #{tpu_custom_call.1} parent=1 // pred_check
      _
    $region15: #{tpu_custom_call.1} parent=1 // pred_check_branch
      %53 = sbr.rel (0) target = $region17
    $region16: #{tpu_custom_call.1} parent=1 // pred_region
      %55 = vsyncadd [#allocation11], 0
      %s56 = sshll.u32 %s3, 4
      %s57 = int_to_ptr.hbm [resolvable:$true] %s56
      %s58 = sshll.u32 [#allocation10], 4
      %s59 = int_to_ptr.vmem [resolvable:$true] %s58
      %64 = dma.hbm_to_vmem [thread:$0]  %s57, 50176, %s59, [#allocation11], 448, 448, 28
    $region17: #{tpu_custom_call.1} parent=1 // pred_fallthru
      _
    // Predicated region
    $region18: #{tpu_custom_call.1} parent=1 // pred_check
      _
    $region19: #{tpu_custom_call.1} parent=1 // pred_check_branch
      %66 = sbr.rel (0) target = $region21
    $region20: #{tpu_custom_call.1} parent=1 // pred_region
      %68 = vsyncadd [#allocation11], 0
      %s70 = sshll.u32 %s4, 4
      %s71 = int_to_ptr.hbm [resolvable:$true] %s70
      %s72 = sshll.u32 [#allocation12], 4
      %s73 = int_to_ptr.vmem [resolvable:$true] %s72
      %75 = dma.hbm_to_vmem [thread:$0]  %s71, 112, %s73, [#allocation11]
    $region21: #{tpu_custom_call.1} parent=1 // pred_fallthru
      _
    // Predicated region
    $region22: #{tpu_custom_call.1} parent=1 // pred_check
      _
    $region23: #{tpu_custom_call.1} parent=1 // pred_check_branch
      %77 = sbr.rel (0) target = $region25
    $region24: #{tpu_custom_call.1} parent=1 // pred_region
      %79 = vsyncadd [#allocation14], 0
      %s80 = sshll.u32 %s5, 4
      %s81 = int_to_ptr.hbm [resolvable:$true] %s80
      %s82 = sshll.u32 [#allocation13], 4
      %s83 = int_to_ptr.vmem [resolvable:$true] %s82
      %88 = dma.hbm_to_vmem [thread:$0]  %s81, 7168, %s83, [#allocation14], 64, 64, 4
    $region25: #{tpu_custom_call.1} parent=1 // pred_fallthru
      _
    // Predicated region
    $region26: #{tpu_custom_call.1} parent=1 // pred_check
      _
    $region27: #{tpu_custom_call.1} parent=1 // pred_check_branch
      %90 = sbr.rel (0) target = $region29
    $region28: #{tpu_custom_call.1} parent=1 // pred_region
      %92 = vsyncadd [#allocation14], 0
      %s94 = sshll.u32 %s6, 4
      %s95 = int_to_ptr.hbm [resolvable:$true] %s94
      %s96 = sshll.u32 [#allocation15], 4
      %s97 = int_to_ptr.vmem [resolvable:$true] %s96
      %99 = dma.hbm_to_vmem [thread:$0]  %s95, 16, %s97, [#allocation14]
    $region29: #{tpu_custom_call.1} parent=1 // pred_fallthru
      _
    // Predicated region
    $region30: #{tpu_custom_call.1} parent=1 // pred_check
      _
    $region31: #{tpu_custom_call.1} parent=1 // pred_check_branch
      %101 = sbr.rel (0) target = $region33
    $region32: #{tpu_custom_call.1} parent=1 // pred_region
      %103 = dma.done [#allocation5], 448
    $region33: #{tpu_custom_call.1} parent=1 // pred_fallthru
      _
    // Predicated region
    $region34: #{tpu_custom_call.1} parent=1 // pred_check
      _
    $region35: #{tpu_custom_call.1} parent=1 // pred_check_branch
      %105 = sbr.rel (0) target = $region37
    $region36: #{tpu_custom_call.1} parent=1 // pred_region
      %107 = dma.done [#allocation8], 50176
    $region37: #{tpu_custom_call.1} parent=1 // pred_fallthru
      _
    // Predicated region
    $region38: #{tpu_custom_call.1} parent=1 // pred_check
      _
    $region39: #{tpu_custom_call.1} parent=1 // pred_check_branch
      %109 = sbr.rel (0) target = $region41
    $region40: #{tpu_custom_call.1} parent=1 // pred_region
      %111 = dma.done [#allocation8], 112
    $region41: #{tpu_custom_call.1} parent=1 // pred_fallthru
      _
    // Predicated region
    $region42: #{tpu_custom_call.1} parent=1 // pred_check
      _
    $region43: #{tpu_custom_call.1} parent=1 // pred_check_branch
      %113 = sbr.rel (0) target = $region45
    $region44: #{tpu_custom_call.1} parent=1 // pred_region
      %115 = dma.done [#allocation11], 50176
    $region45: #{tpu_custom_call.1} parent=1 // pred_fallthru
      _
    // Predicated region
    $region46: #{tpu_custom_call.1} parent=1 // pred_check
      _
    $region47: #{tpu_custom_call.1} parent=1 // pred_check_branch
      %117 = sbr.rel (0) target = $region49
    $region48: #{tpu_custom_call.1} parent=1 // pred_region
      %119 = dma.done [#allocation11], 112
    $region49: #{tpu_custom_call.1} parent=1 // pred_fallthru
      _
    // Predicated region
    $region50: #{tpu_custom_call.1} parent=1 // pred_check
      _
    $region51: #{tpu_custom_call.1} parent=1 // pred_check_branch
      %121 = sbr.rel (0) target = $region53
    $region52: #{tpu_custom_call.1} parent=1 // pred_region
      %123 = dma.done [#allocation14], 7168
    $region53: #{tpu_custom_call.1} parent=1 // pred_fallthru
      _
    // Predicated region
    $region54: #{tpu_custom_call.1} parent=1 // pred_check
      _
    $region55: #{tpu_custom_call.1} parent=1 // pred_check_branch
      %125 = sbr.rel (0) target = $region57
    $region56: #{tpu_custom_call.1} parent=1 // pred_region
      %127 = dma.done [#allocation14], 16
    $region57: #{tpu_custom_call.1} parent=1 // pred_fallthru
      _
    %v128 = vld [vmem:[#allocation4] sm:$0xff]
    %v129 = vld [vmem:[#allocation4 + $0x8] sm:$0xff]
    %v130 = vld [vmem:[#allocation4 + $0x10] sm:$0xff]
    %v131 = vld [vmem:[#allocation4 + $0x18] sm:$0xf]
    %v132 = vld [vmem:[#allocation7] sm:$0xff]
    %v133 = vld [vmem:[#allocation7 + $0x8] sm:$0xff]
    %v134 = vld [vmem:[#allocation7 + $0x10] sm:$0xff]
    %v135 = vld [vmem:[#allocation7 + $0x18] sm:$0xf]
    %v136 = vld [vmem:[#allocation7 + $0x1c] sm:$0xff]
    %v137 = vld [vmem:[#allocation7 + $0x24] sm:$0xff]
    %v138 = vld [vmem:[#allocation7 + $0x2c] sm:$0xff]
    %v139 = vld [vmem:[#allocation7 + $0x34] sm:$0xf]
    %v140 = vld [vmem:[#allocation7 + $0x38] sm:$0xff]
    %v141 = vld [vmem:[#allocation7 + $0x40] sm:$0xff]
    %v142 = vld [vmem:[#allocation7 + $0x48] sm:$0xff]
    %v143 = vld [vmem:[#allocation7 + $0x50] sm:$0xf]
    %v144 = vld [vmem:[#allocation7 + $0x54] sm:$0xff]
    %v145 = vld [vmem:[#allocation7 + $0x5c] sm:$0xff]
    %v146 = vld [vmem:[#allocation7 + $0x64] sm:$0xff]
    %v147 = vld [vmem:[#allocation7 + $0x6c] sm:$0xf]
    %v148 = vld [vmem:[#allocation7 + $0x70] sm:$0xff]
    %v149 = vld [vmem:[#allocation7 + $0x78] sm:$0xff]
    %v150 = vld [vmem:[#allocation7 + $0x80] sm:$0xff]
    %v151 = vld [vmem:[#allocation7 + $0x88] sm:$0xf]
    %v152 = vld [vmem:[#allocation7 + $0x8c] sm:$0xff]
    %v153 = vld [vmem:[#allocation7 + $0x94] sm:$0xff]
    %v154 = vld [vmem:[#allocation7 + $0x9c] sm:$0xff]
    %v155 = vld [vmem:[#allocation7 + $0xa4] sm:$0xf]
    %v156 = vld [vmem:[#allocation7 + $0xa8] sm:$0xff]
    %v157 = vld [vmem:[#allocation7 + $0xb0] sm:$0xff]
    %v158 = vld [vmem:[#allocation7 + $0xb8] sm:$0xff]
    %v159 = vld [vmem:[#allocation7 + $0xc0] sm:$0xf]
    %v160 = vld [vmem:[#allocation7 + $0xc4] sm:$0xff]
    %v161 = vld [vmem:[#allocation7 + $0xcc] sm:$0xff]
    %v162 = vld [vmem:[#allocation7 + $0xd4] sm:$0xff]
    %v163 = vld [vmem:[#allocation7 + $0xdc] sm:$0xf]
    %v164 = vld [vmem:[#allocation7 + $0xe0] sm:$0xff]
    %v165 = vld [vmem:[#allocation7 + $0xe8] sm:$0xff]
    %v166 = vld [vmem:[#allocation7 + $0xf0] sm:$0xff]
    %v167 = vld [vmem:[#allocation7 + $0xf8] sm:$0xf]
    %v168 = vld [vmem:[#allocation7 + $0xfc] sm:$0xff]
    %v169 = vld [vmem:[#allocation7 + $0x104] sm:$0xff]
    %v170 = vld [vmem:[#allocation7 + $0x10c] sm:$0xff]
    %v171 = vld [vmem:[#allocation7 + $0x114] sm:$0xf]
    %v172 = vld [vmem:[#allocation7 + $0x118] sm:$0xff]
    %v173 = vld [vmem:[#allocation7 + $0x120] sm:$0xff]
    %v174 = vld [vmem:[#allocation7 + $0x128] sm:$0xff]
    %v175 = vld [vmem:[#allocation7 + $0x130] sm:$0xf]
    %v176 = vld [vmem:[#allocation7 + $0x134] sm:$0xff]
    %v177 = vld [vmem:[#allocation7 + $0x13c] sm:$0xff]
    %v178 = vld [vmem:[#allocation7 + $0x144] sm:$0xff]
    %v179 = vld [vmem:[#allocation7 + $0x14c] sm:$0xf]
    %v180 = vld [vmem:[#allocation7 + $0x150] sm:$0xff]
    %v181 = vld [vmem:[#allocation7 + $0x158] sm:$0xff]
    %v182 = vld [vmem:[#allocation7 + $0x160] sm:$0xff]
    %v183 = vld [vmem:[#allocation7 + $0x168] sm:$0xf]
    %v184 = vld [vmem:[#allocation7 + $0x16c] sm:$0xff]
    %v185 = vld [vmem:[#allocation7 + $0x174] sm:$0xff]
    %v186 = vld [vmem:[#allocation7 + $0x17c] sm:$0xff]
    %v187 = vld [vmem:[#allocation7 + $0x184] sm:$0xf]
    %v188 = vld [vmem:[#allocation7 + $0x188] sm:$0xff]
    %v189 = vld [vmem:[#allocation7 + $0x190] sm:$0xff]
    %v190 = vld [vmem:[#allocation7 + $0x198] sm:$0xff]
    %v191 = vld [vmem:[#allocation7 + $0x1a0] sm:$0xf]
    %v192 = vld [vmem:[#allocation7 + $0x1a4] sm:$0xff]
    %v193 = vld [vmem:[#allocation7 + $0x1ac] sm:$0xff]
    %v194 = vld [vmem:[#allocation7 + $0x1b4] sm:$0xff]
    %v195 = vld [vmem:[#allocation7 + $0x1bc] sm:$0xf]
    %v196 = vld [vmem:[#allocation7 + $0x1c0] sm:$0xff]
    %v197 = vld [vmem:[#allocation7 + $0x1c8] sm:$0xff]
    %v198 = vld [vmem:[#allocation7 + $0x1d0] sm:$0xff]
    %v199 = vld [vmem:[#allocation7 + $0x1d8] sm:$0xf]
    %v200 = vld [vmem:[#allocation7 + $0x1dc] sm:$0xff]
    %v201 = vld [vmem:[#allocation7 + $0x1e4] sm:$0xff]
    %v202 = vld [vmem:[#allocation7 + $0x1ec] sm:$0xff]
    %v203 = vld [vmem:[#allocation7 + $0x1f4] sm:$0xf]
    %v204 = vld [vmem:[#allocation7 + $0x1f8] sm:$0xff]
    %v205 = vld [vmem:[#allocation7 + $0x200] sm:$0xff]
    %v206 = vld [vmem:[#allocation7 + $0x208] sm:$0xff]
    %v207 = vld [vmem:[#allocation7 + $0x210] sm:$0xf]
    %v208 = vld [vmem:[#allocation7 + $0x214] sm:$0xff]
    %v209 = vld [vmem:[#allocation7 + $0x21c] sm:$0xff]
    %v210 = vld [vmem:[#allocation7 + $0x224] sm:$0xff]
    %v211 = vld [vmem:[#allocation7 + $0x22c] sm:$0xf]
    %v212 = vld [vmem:[#allocation7 + $0x230] sm:$0xff]
    %v213 = vld [vmem:[#allocation7 + $0x238] sm:$0xff]
    %v214 = vld [vmem:[#allocation7 + $0x240] sm:$0xff]
    %v215 = vld [vmem:[#allocation7 + $0x248] sm:$0xf]
    %v216 = vld [vmem:[#allocation7 + $0x24c] sm:$0xff]
    %v217 = vld [vmem:[#allocation7 + $0x254] sm:$0xff]
    %v218 = vld [vmem:[#allocation7 + $0x25c] sm:$0xff]
    %v219 = vld [vmem:[#allocation7 + $0x264] sm:$0xf]
    %v220 = vld [vmem:[#allocation7 + $0x268] sm:$0xff]
    %v221 = vld [vmem:[#allocation7 + $0x270] sm:$0xff]
    %v222 = vld [vmem:[#allocation7 + $0x278] sm:$0xff]
    %v223 = vld [vmem:[#allocation7 + $0x280] sm:$0xf]
    %v224 = vld [vmem:[#allocation7 + $0x284] sm:$0xff]
    %v225 = vld [vmem:[#allocation7 + $0x28c] sm:$0xff]
    %v226 = vld [vmem:[#allocation7 + $0x294] sm:$0xff]
    %v227 = vld [vmem:[#allocation7 + $0x29c] sm:$0xf]
    %v228 = vld [vmem:[#allocation7 + $0x2a0] sm:$0xff]
    %v229 = vld [vmem:[#allocation7 + $0x2a8] sm:$0xff]
    %v230 = vld [vmem:[#allocation7 + $0x2b0] sm:$0xff]
    %v231 = vld [vmem:[#allocation7 + $0x2b8] sm:$0xf]
    %v232 = vld [vmem:[#allocation7 + $0x2bc] sm:$0xff]
    %v233 = vld [vmem:[#allocation7 + $0x2c4] sm:$0xff]
    %v234 = vld [vmem:[#allocation7 + $0x2cc] sm:$0xff]
    %v235 = vld [vmem:[#allocation7 + $0x2d4] sm:$0xf]
    %v236 = vld [vmem:[#allocation7 + $0x2d8] sm:$0xff]
    %v237 = vld [vmem:[#allocation7 + $0x2e0] sm:$0xff]
    %v238 = vld [vmem:[#allocation7 + $0x2e8] sm:$0xff]
    %v239 = vld [vmem:[#allocation7 + $0x2f0] sm:$0xf]
    %v240 = vld [vmem:[#allocation7 + $0x2f4] sm:$0xff]
    %v241 = vld [vmem:[#allocation7 + $0x2fc] sm:$0xff]
    %v242 = vld [vmem:[#allocation7 + $0x304] sm:$0xff]
    %v243 = vld [vmem:[#allocation7 + $0x30c] sm:$0xf]
    %v244 = vld [vmem:[#allocation7 + $0x310] sm:$0xff]
    %v245 = vld [vmem:[#allocation7 + $0x318] sm:$0xff]
    %v246 = vld [vmem:[#allocation7 + $0x320] sm:$0xff]
    %v247 = vld [vmem:[#allocation7 + $0x328] sm:$0xf]
    %v248 = vld [vmem:[#allocation7 + $0x32c] sm:$0xff]
    %v249 = vld [vmem:[#allocation7 + $0x334] sm:$0xff]
    %v250 = vld [vmem:[#allocation7 + $0x33c] sm:$0xff]
    %v251 = vld [vmem:[#allocation7 + $0x344] sm:$0xf]
    %v252 = vld [vmem:[#allocation7 + $0x348] sm:$0xff]
    %v253 = vld [vmem:[#allocation7 + $0x350] sm:$0xff]
    %v254 = vld [vmem:[#allocation7 + $0x358] sm:$0xff]
    %v255 = vld [vmem:[#allocation7 + $0x360] sm:$0xf]
    %v256 = vld [vmem:[#allocation7 + $0x364] sm:$0xff]
    %v257 = vld [vmem:[#allocation7 + $0x36c] sm:$0xff]
    %v258 = vld [vmem:[#allocation7 + $0x374] sm:$0xff]
    %v259 = vld [vmem:[#allocation7 + $0x37c] sm:$0xf]
    %v260 = vld [vmem:[#allocation7 + $0x380] sm:$0xff]
    %v261 = vld [vmem:[#allocation7 + $0x388] sm:$0xff]
    %v262 = vld [vmem:[#allocation7 + $0x390] sm:$0xff]
    %v263 = vld [vmem:[#allocation7 + $0x398] sm:$0xf]
    %v264 = vld [vmem:[#allocation7 + $0x39c] sm:$0xff]
    %v265 = vld [vmem:[#allocation7 + $0x3a4] sm:$0xff]
    %v266 = vld [vmem:[#allocation7 + $0x3ac] sm:$0xff]
    %v267 = vld [vmem:[#allocation7 + $0x3b4] sm:$0xf]
    %v268 = vld [vmem:[#allocation7 + $0x3b8] sm:$0xff]
    %v269 = vld [vmem:[#allocation7 + $0x3c0] sm:$0xff]
    %v270 = vld [vmem:[#allocation7 + $0x3c8] sm:$0xff]
    %v271 = vld [vmem:[#allocation7 + $0x3d0] sm:$0xf]
    %v272 = vld [vmem:[#allocation7 + $0x3d4] sm:$0xff]
    %v273 = vld [vmem:[#allocation7 + $0x3dc] sm:$0xff]
    %v274 = vld [vmem:[#allocation7 + $0x3e4] sm:$0xff]
    %v275 = vld [vmem:[#allocation7 + $0x3ec] sm:$0xf]
    %v276 = vld [vmem:[#allocation7 + $0x3f0] sm:$0xff]
    %v277 = vld [vmem:[#allocation7 + $0x3f8] sm:$0xff]
    %v278 = vld [vmem:[#allocation7 + $0x400] sm:$0xff]
    %v279 = vld [vmem:[#allocation7 + $0x408] sm:$0xf]
    %v280 = vld [vmem:[#allocation7 + $0x40c] sm:$0xff]
    %v281 = vld [vmem:[#allocation7 + $0x414] sm:$0xff]
    %v282 = vld [vmem:[#allocation7 + $0x41c] sm:$0xff]
    %v283 = vld [vmem:[#allocation7 + $0x424] sm:$0xf]
    %v284 = vld [vmem:[#allocation7 + $0x428] sm:$0xff]
    %v285 = vld [vmem:[#allocation7 + $0x430] sm:$0xff]
    %v286 = vld [vmem:[#allocation7 + $0x438] sm:$0xff]
    %v287 = vld [vmem:[#allocation7 + $0x440] sm:$0xf]
    %v288 = vld [vmem:[#allocation7 + $0x444] sm:$0xff]
    %v289 = vld [vmem:[#allocation7 + $0x44c] sm:$0xff]
    %v290 = vld [vmem:[#allocation7 + $0x454] sm:$0xff]
    %v291 = vld [vmem:[#allocation7 + $0x45c] sm:$0xf]
    %v292 = vld [vmem:[#allocation7 + $0x460] sm:$0xff]
    %v293 = vld [vmem:[#allocation7 + $0x468] sm:$0xff]
    %v294 = vld [vmem:[#allocation7 + $0x470] sm:$0xff]
    %v295 = vld [vmem:[#allocation7 + $0x478] sm:$0xf]
    %v296 = vld [vmem:[#allocation7 + $0x47c] sm:$0xff]
    %v297 = vld [vmem:[#allocation7 + $0x484] sm:$0xff]
    %v298 = vld [vmem:[#allocation7 + $0x48c] sm:$0xff]
    %v299 = vld [vmem:[#allocation7 + $0x494] sm:$0xf]
    %v300 = vld [vmem:[#allocation7 + $0x498] sm:$0xff]
    %v301 = vld [vmem:[#allocation7 + $0x4a0] sm:$0xff]
    %v302 = vld [vmem:[#allocation7 + $0x4a8] sm:$0xff]
    %v303 = vld [vmem:[#allocation7 + $0x4b0] sm:$0xf]
    %v304 = vld [vmem:[#allocation7 + $0x4b4] sm:$0xff]
    %v305 = vld [vmem:[#allocation7 + $0x4bc] sm:$0xff]
    %v306 = vld [vmem:[#allocation7 + $0x4c4] sm:$0xff]
    %v307 = vld [vmem:[#allocation7 + $0x4cc] sm:$0xf]
    %v308 = vld [vmem:[#allocation7 + $0x4d0] sm:$0xff]
    %v309 = vld [vmem:[#allocation7 + $0x4d8] sm:$0xff]
    %v310 = vld [vmem:[#allocation7 + $0x4e0] sm:$0xff]
    %v311 = vld [vmem:[#allocation7 + $0x4e8] sm:$0xf]
    %v312 = vld [vmem:[#allocation7 + $0x4ec] sm:$0xff]
    %v313 = vld [vmem:[#allocation7 + $0x4f4] sm:$0xff]
    %v314 = vld [vmem:[#allocation7 + $0x4fc] sm:$0xff]
    %v315 = vld [vmem:[#allocation7 + $0x504] sm:$0xf]
    %v316 = vld [vmem:[#allocation7 + $0x508] sm:$0xff]
    %v317 = vld [vmem:[#allocation7 + $0x510] sm:$0xff]
    %v318 = vld [vmem:[#allocation7 + $0x518] sm:$0xff]
    %v319 = vld [vmem:[#allocation7 + $0x520] sm:$0xf]
    %v320 = vld [vmem:[#allocation7 + $0x524] sm:$0xff]
    %v321 = vld [vmem:[#allocation7 + $0x52c] sm:$0xff]
    %v322 = vld [vmem:[#allocation7 + $0x534] sm:$0xff]
    %v323 = vld [vmem:[#allocation7 + $0x53c] sm:$0xf]
    %v324 = vld [vmem:[#allocation7 + $0x540] sm:$0xff]
    %v325 = vld [vmem:[#allocation7 + $0x548] sm:$0xff]
    %v326 = vld [vmem:[#allocation7 + $0x550] sm:$0xff]
    %v327 = vld [vmem:[#allocation7 + $0x558] sm:$0xf]
    %v328 = vld [vmem:[#allocation7 + $0x55c] sm:$0xff]
    %v329 = vld [vmem:[#allocation7 + $0x564] sm:$0xff]
    %v330 = vld [vmem:[#allocation7 + $0x56c] sm:$0xff]
    %v331 = vld [vmem:[#allocation7 + $0x574] sm:$0xf]
    %v332 = vld [vmem:[#allocation7 + $0x578] sm:$0xff]
    %v333 = vld [vmem:[#allocation7 + $0x580] sm:$0xff]
    %v334 = vld [vmem:[#allocation7 + $0x588] sm:$0xff]
    %v335 = vld [vmem:[#allocation7 + $0x590] sm:$0xf]
    %v336 = vld [vmem:[#allocation7 + $0x594] sm:$0xff]
    %v337 = vld [vmem:[#allocation7 + $0x59c] sm:$0xff]
    %v338 = vld [vmem:[#allocation7 + $0x5a4] sm:$0xff]
    %v339 = vld [vmem:[#allocation7 + $0x5ac] sm:$0xf]
    %v340 = vld [vmem:[#allocation7 + $0x5b0] sm:$0xff]
    %v341 = vld [vmem:[#allocation7 + $0x5b8] sm:$0xff]
    %v342 = vld [vmem:[#allocation7 + $0x5c0] sm:$0xff]
    %v343 = vld [vmem:[#allocation7 + $0x5c8] sm:$0xf]
    %v344 = vld [vmem:[#allocation7 + $0x5cc] sm:$0xff]
    %v345 = vld [vmem:[#allocation7 + $0x5d4] sm:$0xff]
    %v346 = vld [vmem:[#allocation7 + $0x5dc] sm:$0xff]
    %v347 = vld [vmem:[#allocation7 + $0x5e4] sm:$0xf]
    %v348 = vld [vmem:[#allocation7 + $0x5e8] sm:$0xff]
    %v349 = vld [vmem:[#allocation7 + $0x5f0] sm:$0xff]
    %v350 = vld [vmem:[#allocation7 + $0x5f8] sm:$0xff]
    %v351 = vld [vmem:[#allocation7 + $0x600] sm:$0xf]
    %v352 = vld [vmem:[#allocation7 + $0x604] sm:$0xff]
    %v353 = vld [vmem:[#allocation7 + $0x60c] sm:$0xff]
    %v354 = vld [vmem:[#allocation7 + $0x614] sm:$0xff]
    %v355 = vld [vmem:[#allocation7 + $0x61c] sm:$0xf]
    %v356 = vld [vmem:[#allocation7 + $0x620] sm:$0xff]
    %v357 = vld [vmem:[#allocation7 + $0x628] sm:$0xff]
    %v358 = vld [vmem:[#allocation7 + $0x630] sm:$0xff]
    %v359 = vld [vmem:[#allocation7 + $0x638] sm:$0xf]
    %v360 = vld [vmem:[#allocation7 + $0x63c] sm:$0xff]
    %v361 = vld [vmem:[#allocation7 + $0x644] sm:$0xff]
    %v362 = vld [vmem:[#allocation7 + $0x64c] sm:$0xff]
    %v363 = vld [vmem:[#allocation7 + $0x654] sm:$0xf]
    %v364 = vld [vmem:[#allocation7 + $0x658] sm:$0xff]
    %v365 = vld [vmem:[#allocation7 + $0x660] sm:$0xff]
    %v366 = vld [vmem:[#allocation7 + $0x668] sm:$0xff]
    %v367 = vld [vmem:[#allocation7 + $0x670] sm:$0xf]
    %v368 = vld [vmem:[#allocation7 + $0x674] sm:$0xff]
    %v369 = vld [vmem:[#allocation7 + $0x67c] sm:$0xff]
    %v370 = vld [vmem:[#allocation7 + $0x684] sm:$0xff]
    %v371 = vld [vmem:[#allocation7 + $0x68c] sm:$0xf]
    %v372 = vld [vmem:[#allocation7 + $0x690] sm:$0xff]
    %v373 = vld [vmem:[#allocation7 + $0x698] sm:$0xff]
    %v374 = vld [vmem:[#allocation7 + $0x6a0] sm:$0xff]
    %v375 = vld [vmem:[#allocation7 + $0x6a8] sm:$0xf]
    %v376 = vld [vmem:[#allocation7 + $0x6ac] sm:$0xff]
    %v377 = vld [vmem:[#allocation7 + $0x6b4] sm:$0xff]
    %v378 = vld [vmem:[#allocation7 + $0x6bc] sm:$0xff]
    %v379 = vld [vmem:[#allocation7 + $0x6c4] sm:$0xf]
    %v380 = vld [vmem:[#allocation7 + $0x6c8] sm:$0xff]
    %v381 = vld [vmem:[#allocation7 + $0x6d0] sm:$0xff]
    %v382 = vld [vmem:[#allocation7 + $0x6d8] sm:$0xff]
    %v383 = vld [vmem:[#allocation7 + $0x6e0] sm:$0xf]
    %v384 = vld [vmem:[#allocation7 + $0x6e4] sm:$0xff]
    %v385 = vld [vmem:[#allocation7 + $0x6ec] sm:$0xff]
    %v386 = vld [vmem:[#allocation7 + $0x6f4] sm:$0xff]
    %v387 = vld [vmem:[#allocation7 + $0x6fc] sm:$0xf]
    %v388 = vld [vmem:[#allocation7 + $0x700] sm:$0xff]
    %v389 = vld [vmem:[#allocation7 + $0x708] sm:$0xff]
    %v390 = vld [vmem:[#allocation7 + $0x710] sm:$0xff]
    %v391 = vld [vmem:[#allocation7 + $0x718] sm:$0xf]
    %v392 = vld [vmem:[#allocation7 + $0x71c] sm:$0xff]
    %v393 = vld [vmem:[#allocation7 + $0x724] sm:$0xff]
    %v394 = vld [vmem:[#allocation7 + $0x72c] sm:$0xff]
    %v395 = vld [vmem:[#allocation7 + $0x734] sm:$0xf]
    %v396 = vld [vmem:[#allocation7 + $0x738] sm:$0xff]
    %v397 = vld [vmem:[#allocation7 + $0x740] sm:$0xff]
    %v398 = vld [vmem:[#allocation7 + $0x748] sm:$0xff]
    %v399 = vld [vmem:[#allocation7 + $0x750] sm:$0xf]
    %v400 = vld [vmem:[#allocation7 + $0x754] sm:$0xff]
    %v401 = vld [vmem:[#allocation7 + $0x75c] sm:$0xff]
    %v402 = vld [vmem:[#allocation7 + $0x764] sm:$0xff]
    %v403 = vld [vmem:[#allocation7 + $0x76c] sm:$0xf]
    %v404 = vld [vmem:[#allocation7 + $0x770] sm:$0xff]
    %v405 = vld [vmem:[#allocation7 + $0x778] sm:$0xff]
    %v406 = vld [vmem:[#allocation7 + $0x780] sm:$0xff]
    %v407 = vld [vmem:[#allocation7 + $0x788] sm:$0xf]
    %v408 = vld [vmem:[#allocation7 + $0x78c] sm:$0xff]
    %v409 = vld [vmem:[#allocation7 + $0x794] sm:$0xff]
    %v410 = vld [vmem:[#allocation7 + $0x79c] sm:$0xff]
    %v411 = vld [vmem:[#allocation7 + $0x7a4] sm:$0xf]
    %v412 = vld [vmem:[#allocation7 + $0x7a8] sm:$0xff]
    %v413 = vld [vmem:[#allocation7 + $0x7b0] sm:$0xff]
    %v414 = vld [vmem:[#allocation7 + $0x7b8] sm:$0xff]
    %v415 = vld [vmem:[#allocation7 + $0x7c0] sm:$0xf]
    %v416 = vld [vmem:[#allocation7 + $0x7c4] sm:$0xff]
    %v417 = vld [vmem:[#allocation7 + $0x7cc] sm:$0xff]
    %v418 = vld [vmem:[#allocation7 + $0x7d4] sm:$0xff]
    %v419 = vld [vmem:[#allocation7 + $0x7dc] sm:$0xf]
    %v420 = vld [vmem:[#allocation7 + $0x7e0] sm:$0xff]
    %v421 = vld [vmem:[#allocation7 + $0x7e8] sm:$0xff]
    %v422 = vld [vmem:[#allocation7 + $0x7f0] sm:$0xff]
    %v423 = vld [vmem:[#allocation7 + $0x7f8] sm:$0xf]
    %v424 = vld [vmem:[#allocation7 + $0x7fc] sm:$0xff]
    %v425 = vld [vmem:[#allocation7 + $0x804] sm:$0xff]
    %v426 = vld [vmem:[#allocation7 + $0x80c] sm:$0xff]
    %v427 = vld [vmem:[#allocation7 + $0x814] sm:$0xf]
    %v428 = vld [vmem:[#allocation7 + $0x818] sm:$0xff]
    %v429 = vld [vmem:[#allocation7 + $0x820] sm:$0xff]
    %v430 = vld [vmem:[#allocation7 + $0x828] sm:$0xff]
    %v431 = vld [vmem:[#allocation7 + $0x830] sm:$0xf]
    %v432 = vld [vmem:[#allocation7 + $0x834] sm:$0xff]
    %v433 = vld [vmem:[#allocation7 + $0x83c] sm:$0xff]
    %v434 = vld [vmem:[#allocation7 + $0x844] sm:$0xff]
    %v435 = vld [vmem:[#allocation7 + $0x84c] sm:$0xf]
    %v436 = vld [vmem:[#allocation7 + $0x850] sm:$0xff]
    %v437 = vld [vmem:[#allocation7 + $0x858] sm:$0xff]
    %v438 = vld [vmem:[#allocation7 + $0x860] sm:$0xff]
    %v439 = vld [vmem:[#allocation7 + $0x868] sm:$0xf]
    %v440 = vld [vmem:[#allocation7 + $0x86c] sm:$0xff]
    %v441 = vld [vmem:[#allocation7 + $0x874] sm:$0xff]
    %v442 = vld [vmem:[#allocation7 + $0x87c] sm:$0xff]
    %v443 = vld [vmem:[#allocation7 + $0x884] sm:$0xf]
    %v444 = vld [vmem:[#allocation7 + $0x888] sm:$0xff]
    %v445 = vld [vmem:[#allocation7 + $0x890] sm:$0xff]
    %v446 = vld [vmem:[#allocation7 + $0x898] sm:$0xff]
    %v447 = vld [vmem:[#allocation7 + $0x8a0] sm:$0xf]
    %v448 = vld [vmem:[#allocation7 + $0x8a4] sm:$0xff]
    %v449 = vld [vmem:[#allocation7 + $0x8ac] sm:$0xff]
    %v450 = vld [vmem:[#allocation7 + $0x8b4] sm:$0xff]
    %v451 = vld [vmem:[#allocation7 + $0x8bc] sm:$0xf]
    %v452 = vld [vmem:[#allocation7 + $0x8c0] sm:$0xff]
    %v453 = vld [vmem:[#allocation7 + $0x8c8] sm:$0xff]
    %v454 = vld [vmem:[#allocation7 + $0x8d0] sm:$0xff]
    %v455 = vld [vmem:[#allocation7 + $0x8d8] sm:$0xf]
    %v456 = vld [vmem:[#allocation7 + $0x8dc] sm:$0xff]
    %v457 = vld [vmem:[#allocation7 + $0x8e4] sm:$0xff]
    %v458 = vld [vmem:[#allocation7 + $0x8ec] sm:$0xff]
    %v459 = vld [vmem:[#allocation7 + $0x8f4] sm:$0xf]
    %v460 = vld [vmem:[#allocation7 + $0x8f8] sm:$0xff]
    %v461 = vld [vmem:[#allocation7 + $0x900] sm:$0xff]
    %v462 = vld [vmem:[#allocation7 + $0x908] sm:$0xff]
    %v463 = vld [vmem:[#allocation7 + $0x910] sm:$0xf]
    %v464 = vld [vmem:[#allocation7 + $0x914] sm:$0xff]
    %v465 = vld [vmem:[#allocation7 + $0x91c] sm:$0xff]
    %v466 = vld [vmem:[#allocation7 + $0x924] sm:$0xff]
    %v467 = vld [vmem:[#allocation7 + $0x92c] sm:$0xf]
    %v468 = vld [vmem:[#allocation7 + $0x930] sm:$0xff]
    %v469 = vld [vmem:[#allocation7 + $0x938] sm:$0xff]
    %v470 = vld [vmem:[#allocation7 + $0x940] sm:$0xff]
    %v471 = vld [vmem:[#allocation7 + $0x948] sm:$0xf]
    %v472 = vld [vmem:[#allocation7 + $0x94c] sm:$0xff]
    %v473 = vld [vmem:[#allocation7 + $0x954] sm:$0xff]
    %v474 = vld [vmem:[#allocation7 + $0x95c] sm:$0xff]
    %v475 = vld [vmem:[#allocation7 + $0x964] sm:$0xf]
    %v476 = vld [vmem:[#allocation7 + $0x968] sm:$0xff]
    %v477 = vld [vmem:[#allocation7 + $0x970] sm:$0xff]
    %v478 = vld [vmem:[#allocation7 + $0x978] sm:$0xff]
    %v479 = vld [vmem:[#allocation7 + $0x980] sm:$0xf]
    %v480 = vld [vmem:[#allocation7 + $0x984] sm:$0xff]
    %v481 = vld [vmem:[#allocation7 + $0x98c] sm:$0xff]
    %v482 = vld [vmem:[#allocation7 + $0x994] sm:$0xff]
    %v483 = vld [vmem:[#allocation7 + $0x99c] sm:$0xf]
    %v484 = vld [vmem:[#allocation7 + $0x9a0] sm:$0xff]
    %v485 = vld [vmem:[#allocation7 + $0x9a8] sm:$0xff]
    %v486 = vld [vmem:[#allocation7 + $0x9b0] sm:$0xff]
    %v487 = vld [vmem:[#allocation7 + $0x9b8] sm:$0xf]
    %v488 = vld [vmem:[#allocation7 + $0x9bc] sm:$0xff]
    %v489 = vld [vmem:[#allocation7 + $0x9c4] sm:$0xff]
    %v490 = vld [vmem:[#allocation7 + $0x9cc] sm:$0xff]
    %v491 = vld [vmem:[#allocation7 + $0x9d4] sm:$0xf]
    %v492 = vld [vmem:[#allocation7 + $0x9d8] sm:$0xff]
    %v493 = vld [vmem:[#allocation7 + $0x9e0] sm:$0xff]
    %v494 = vld [vmem:[#allocation7 + $0x9e8] sm:$0xff]
    %v495 = vld [vmem:[#allocation7 + $0x9f0] sm:$0xf]
    %v496 = vld [vmem:[#allocation7 + $0x9f4] sm:$0xff]
    %v497 = vld [vmem:[#allocation7 + $0x9fc] sm:$0xff]
    %v498 = vld [vmem:[#allocation7 + $0xa04] sm:$0xff]
    %v499 = vld [vmem:[#allocation7 + $0xa0c] sm:$0xf]
    %v500 = vld [vmem:[#allocation7 + $0xa10] sm:$0xff]
    %v501 = vld [vmem:[#allocation7 + $0xa18] sm:$0xff]
    %v502 = vld [vmem:[#allocation7 + $0xa20] sm:$0xff]
    %v503 = vld [vmem:[#allocation7 + $0xa28] sm:$0xf]
    %v504 = vld [vmem:[#allocation7 + $0xa2c] sm:$0xff]
    %v505 = vld [vmem:[#allocation7 + $0xa34] sm:$0xff]
    %v506 = vld [vmem:[#allocation7 + $0xa3c] sm:$0xff]
    %v507 = vld [vmem:[#allocation7 + $0xa44] sm:$0xf]
    %v508 = vld [vmem:[#allocation7 + $0xa48] sm:$0xff]
    %v509 = vld [vmem:[#allocation7 + $0xa50] sm:$0xff]
    %v510 = vld [vmem:[#allocation7 + $0xa58] sm:$0xff]
    %v511 = vld [vmem:[#allocation7 + $0xa60] sm:$0xf]
    %v512 = vld [vmem:[#allocation7 + $0xa64] sm:$0xff]
    %v513 = vld [vmem:[#allocation7 + $0xa6c] sm:$0xff]
    %v514 = vld [vmem:[#allocation7 + $0xa74] sm:$0xff]
    %v515 = vld [vmem:[#allocation7 + $0xa7c] sm:$0xf]
    %v516 = vld [vmem:[#allocation7 + $0xa80] sm:$0xff]
    %v517 = vld [vmem:[#allocation7 + $0xa88] sm:$0xff]
    %v518 = vld [vmem:[#allocation7 + $0xa90] sm:$0xff]
    %v519 = vld [vmem:[#allocation7 + $0xa98] sm:$0xf]
    %v520 = vld [vmem:[#allocation7 + $0xa9c] sm:$0xff]
    %v521 = vld [vmem:[#allocation7 + $0xaa4] sm:$0xff]
    %v522 = vld [vmem:[#allocation7 + $0xaac] sm:$0xff]
    %v523 = vld [vmem:[#allocation7 + $0xab4] sm:$0xf]
    %v524 = vld [vmem:[#allocation7 + $0xab8] sm:$0xff]
    %v525 = vld [vmem:[#allocation7 + $0xac0] sm:$0xff]
    %v526 = vld [vmem:[#allocation7 + $0xac8] sm:$0xff]
    %v527 = vld [vmem:[#allocation7 + $0xad0] sm:$0xf]
    %v528 = vld [vmem:[#allocation7 + $0xad4] sm:$0xff]
    %v529 = vld [vmem:[#allocation7 + $0xadc] sm:$0xff]
    %v530 = vld [vmem:[#allocation7 + $0xae4] sm:$0xff]
    %v531 = vld [vmem:[#allocation7 + $0xaec] sm:$0xf]
    %v532 = vld [vmem:[#allocation7 + $0xaf0] sm:$0xff]
    %v533 = vld [vmem:[#allocation7 + $0xaf8] sm:$0xff]
    %v534 = vld [vmem:[#allocation7 + $0xb00] sm:$0xff]
    %v535 = vld [vmem:[#allocation7 + $0xb08] sm:$0xf]
    %v536 = vld [vmem:[#allocation7 + $0xb0c] sm:$0xff]
    %v537 = vld [vmem:[#allocation7 + $0xb14] sm:$0xff]
    %v538 = vld [vmem:[#allocation7 + $0xb1c] sm:$0xff]
    %v539 = vld [vmem:[#allocation7 + $0xb24] sm:$0xf]
    %v540 = vld [vmem:[#allocation7 + $0xb28] sm:$0xff]
    %v541 = vld [vmem:[#allocation7 + $0xb30] sm:$0xff]
    %v542 = vld [vmem:[#allocation7 + $0xb38] sm:$0xff]
    %v543 = vld [vmem:[#allocation7 + $0xb40] sm:$0xf]
    %v544 = vld [vmem:[#allocation7 + $0xb44] sm:$0xff]
    %v545 = vld [vmem:[#allocation7 + $0xb4c] sm:$0xff]
    %v546 = vld [vmem:[#allocation7 + $0xb54] sm:$0xff]
    %v547 = vld [vmem:[#allocation7 + $0xb5c] sm:$0xf]
    %v548 = vld [vmem:[#allocation7 + $0xb60] sm:$0xff]
    %v549 = vld [vmem:[#allocation7 + $0xb68] sm:$0xff]
    %v550 = vld [vmem:[#allocation7 + $0xb70] sm:$0xff]
    %v551 = vld [vmem:[#allocation7 + $0xb78] sm:$0xf]
    %v552 = vld [vmem:[#allocation7 + $0xb7c] sm:$0xff]
    %v553 = vld [vmem:[#allocation7 + $0xb84] sm:$0xff]
    %v554 = vld [vmem:[#allocation7 + $0xb8c] sm:$0xff]
    %v555 = vld [vmem:[#allocation7 + $0xb94] sm:$0xf]
    %v556 = vld [vmem:[#allocation7 + $0xb98] sm:$0xff]
    %v557 = vld [vmem:[#allocation7 + $0xba0] sm:$0xff]
    %v558 = vld [vmem:[#allocation7 + $0xba8] sm:$0xff]
    %v559 = vld [vmem:[#allocation7 + $0xbb0] sm:$0xf]
    %v560 = vld [vmem:[#allocation7 + $0xbb4] sm:$0xff]
    %v561 = vld [vmem:[#allocation7 + $0xbbc] sm:$0xff]
    %v562 = vld [vmem:[#allocation7 + $0xbc4] sm:$0xff]
    %v563 = vld [vmem:[#allocation7 + $0xbcc] sm:$0xf]
    %v564 = vld [vmem:[#allocation7 + $0xbd0] sm:$0xff]
    %v565 = vld [vmem:[#allocation7 + $0xbd8] sm:$0xff]
    %v566 = vld [vmem:[#allocation7 + $0xbe0] sm:$0xff]
    %v567 = vld [vmem:[#allocation7 + $0xbe8] sm:$0xf]
    %v568 = vld [vmem:[#allocation7 + $0xbec] sm:$0xff]
    %v569 = vld [vmem:[#allocation7 + $0xbf4] sm:$0xff]
    %v570 = vld [vmem:[#allocation7 + $0xbfc] sm:$0xff]
    %v571 = vld [vmem:[#allocation7 + $0xc04] sm:$0xf]
    %v572 = vld [vmem:[#allocation7 + $0xc08] sm:$0xff]
    %v573 = vld [vmem:[#allocation7 + $0xc10] sm:$0xff]
    %v574 = vld [vmem:[#allocation7 + $0xc18] sm:$0xff]
    %v575 = vld [vmem:[#allocation7 + $0xc20] sm:$0xf]
    %v576 = vld [vmem:[#allocation7 + $0xc24] sm:$0xff]
    %v577 = vld [vmem:[#allocation7 + $0xc2c] sm:$0xff]
    %v578 = vld [vmem:[#allocation7 + $0xc34] sm:$0xff]
    %v579 = vld [vmem:[#allocation7 + $0xc3c] sm:$0xf]
    %v580 = vld [vmem:[#allocation9] sm:$0xff]
    %v582 = vperm.slane %v580, 0
    %v583 = vperm.slane %v580, 1
    %v584 = vperm.slane %v580, 2
    %v585 = vperm.slane %v580, 3
    %v586 = vperm.slane %v580, 4
    %v587 = vperm.slane %v580, 5
    %v588 = vperm.slane %v580, 6
    %v600 = vunpack.c.l.b16 %v128
    %v601 = vunpack.c.h.b16 %v128
    %v602 = vunpack.c.l.b16 %v129
    %v603 = vunpack.c.h.b16 %v129
    %v604 = vunpack.c.l.b16 %v130
    %v605 = vunpack.c.h.b16 %v130
    %v606 = vunpack.c.l.b16 %v131
    %v607 = vpack.c.b16 %v600, %v600
    %v608 = vpack.c.b16 %v601, %v601
    %v609 = vpack.c.b16 %v602, %v602
    %v610 = vpack.c.b16 %v603, %v603
    %v611 = vpack.c.b16 %v604, %v604
    %v612 = vpack.c.b16 %v605, %v605
    %v613 = vpack.c.b16 %v606, %v606
    %v1069 = vunpack.c.l.b16 %v132
    %v1070 = vunpack.c.h.b16 %v132
    %v1071 = vunpack.c.l.b16 %v133
    %v1072 = vunpack.c.h.b16 %v133
    %v1073 = vunpack.c.l.b16 %v134
    %v1074 = vunpack.c.h.b16 %v134
    %v1075 = vunpack.c.l.b16 %v135
    %v1076 = vunpack.c.l.b16 %v136
    %v1077 = vunpack.c.h.b16 %v136
    %v1078 = vunpack.c.l.b16 %v137
    %v1079 = vunpack.c.h.b16 %v137
    %v1080 = vunpack.c.l.b16 %v138
    %v1081 = vunpack.c.h.b16 %v138
    %v1082 = vunpack.c.l.b16 %v139
    %v1083 = vunpack.c.l.b16 %v140
    %v1084 = vunpack.c.h.b16 %v140
    %v1085 = vunpack.c.l.b16 %v141
    %v1086 = vunpack.c.h.b16 %v141
    %v1087 = vunpack.c.l.b16 %v142
    %v1088 = vunpack.c.h.b16 %v142
    %v1089 = vunpack.c.l.b16 %v143
    %v1090 = vunpack.c.l.b16 %v144
    %v1091 = vunpack.c.h.b16 %v144
    %v1092 = vunpack.c.l.b16 %v145
    %v1093 = vunpack.c.h.b16 %v145
    %v1094 = vunpack.c.l.b16 %v146
    %v1095 = vunpack.c.h.b16 %v146
    %v1096 = vunpack.c.l.b16 %v147
    %v1097 = vunpack.c.l.b16 %v148
    %v1098 = vunpack.c.h.b16 %v148
    %v1099 = vunpack.c.l.b16 %v149
    %v1100 = vunpack.c.h.b16 %v149
    %v1101 = vunpack.c.l.b16 %v150
    %v1102 = vunpack.c.h.b16 %v150
    %v1103 = vunpack.c.l.b16 %v151
    %v1104 = vunpack.c.l.b16 %v152
    %v1105 = vunpack.c.h.b16 %v152
    %v1106 = vunpack.c.l.b16 %v153
    %v1107 = vunpack.c.h.b16 %v153
    %v1108 = vunpack.c.l.b16 %v154
    %v1109 = vunpack.c.h.b16 %v154
    %v1110 = vunpack.c.l.b16 %v155
    %v1111 = vunpack.c.l.b16 %v156
    %v1112 = vunpack.c.h.b16 %v156
    %v1113 = vunpack.c.l.b16 %v157
    %v1114 = vunpack.c.h.b16 %v157
    %v1115 = vunpack.c.l.b16 %v158
    %v1116 = vunpack.c.h.b16 %v158
    %v1117 = vunpack.c.l.b16 %v159
    %v1118 = vunpack.c.l.b16 %v160
    %v1119 = vunpack.c.h.b16 %v160
    %v1120 = vunpack.c.l.b16 %v161
    %v1121 = vunpack.c.h.b16 %v161
    %v1122 = vunpack.c.l.b16 %v162
    %v1123 = vunpack.c.h.b16 %v162
    %v1124 = vunpack.c.l.b16 %v163
    %v1125 = vunpack.c.l.b16 %v164
    %v1126 = vunpack.c.h.b16 %v164
    %v1127 = vunpack.c.l.b16 %v165
    %v1128 = vunpack.c.h.b16 %v165
    %v1129 = vunpack.c.l.b16 %v166
    %v1130 = vunpack.c.h.b16 %v166
    %v1131 = vunpack.c.l.b16 %v167
    %v1132 = vunpack.c.l.b16 %v168
    %v1133 = vunpack.c.h.b16 %v168
    %v1134 = vunpack.c.l.b16 %v169
    %v1135 = vunpack.c.h.b16 %v169
    %v1136 = vunpack.c.l.b16 %v170
    %v1137 = vunpack.c.h.b16 %v170
    %v1138 = vunpack.c.l.b16 %v171
    %v1139 = vunpack.c.l.b16 %v172
    %v1140 = vunpack.c.h.b16 %v172
    %v1141 = vunpack.c.l.b16 %v173
    %v1142 = vunpack.c.h.b16 %v173
    %v1143 = vunpack.c.l.b16 %v174
    %v1144 = vunpack.c.h.b16 %v174
    %v1145 = vunpack.c.l.b16 %v175
    %v1146 = vunpack.c.l.b16 %v176
    %v1147 = vunpack.c.h.b16 %v176
    %v1148 = vunpack.c.l.b16 %v177
    %v1149 = vunpack.c.h.b16 %v177
    %v1150 = vunpack.c.l.b16 %v178
    %v1151 = vunpack.c.h.b16 %v178
    %v1152 = vunpack.c.l.b16 %v179
    %v1153 = vunpack.c.l.b16 %v180
    %v1154 = vunpack.c.h.b16 %v180
    %v1155 = vunpack.c.l.b16 %v181
    %v1156 = vunpack.c.h.b16 %v181
    %v1157 = vunpack.c.l.b16 %v182
    %v1158 = vunpack.c.h.b16 %v182
    %v1159 = vunpack.c.l.b16 %v183
    %v1160 = vunpack.c.l.b16 %v184
    %v1161 = vunpack.c.h.b16 %v184
    %v1162 = vunpack.c.l.b16 %v185
    %v1163 = vunpack.c.h.b16 %v185
    %v1164 = vunpack.c.l.b16 %v186
    %v1165 = vunpack.c.h.b16 %v186
    %v1166 = vunpack.c.l.b16 %v187
    %v1167 = vunpack.c.l.b16 %v188
    %v1168 = vunpack.c.h.b16 %v188
    %v1169 = vunpack.c.l.b16 %v189
    %v1170 = vunpack.c.h.b16 %v189
    %v1171 = vunpack.c.l.b16 %v190
    %v1172 = vunpack.c.h.b16 %v190
    %v1173 = vunpack.c.l.b16 %v191
    %v1174 = vunpack.c.l.b16 %v192
    %v1175 = vunpack.c.h.b16 %v192
    %v1176 = vunpack.c.l.b16 %v193
    %v1177 = vunpack.c.h.b16 %v193
    %v1178 = vunpack.c.l.b16 %v194
    %v1179 = vunpack.c.h.b16 %v194
    %v1180 = vunpack.c.l.b16 %v195
    %v1181 = vunpack.c.l.b16 %v196
    %v1182 = vunpack.c.h.b16 %v196
    %v1183 = vunpack.c.l.b16 %v197
    %v1184 = vunpack.c.h.b16 %v197
    %v1185 = vunpack.c.l.b16 %v198
    %v1186 = vunpack.c.h.b16 %v198
    %v1187 = vunpack.c.l.b16 %v199
    %v1188 = vunpack.c.l.b16 %v200
    %v1189 = vunpack.c.h.b16 %v200
    %v1190 = vunpack.c.l.b16 %v201
    %v1191 = vunpack.c.h.b16 %v201
    %v1192 = vunpack.c.l.b16 %v202
    %v1193 = vunpack.c.h.b16 %v202
    %v1194 = vunpack.c.l.b16 %v203
    %v1195 = vunpack.c.l.b16 %v204
    %v1196 = vunpack.c.h.b16 %v204
    %v1197 = vunpack.c.l.b16 %v205
    %v1198 = vunpack.c.h.b16 %v205
    %v1199 = vunpack.c.l.b16 %v206
    %v1200 = vunpack.c.h.b16 %v206
    %v1201 = vunpack.c.l.b16 %v207
    %v1202 = vunpack.c.l.b16 %v208
    %v1203 = vunpack.c.h.b16 %v208
    %v1204 = vunpack.c.l.b16 %v209
    %v1205 = vunpack.c.h.b16 %v209
    %v1206 = vunpack.c.l.b16 %v210
    %v1207 = vunpack.c.h.b16 %v210
    %v1208 = vunpack.c.l.b16 %v211
    %v1209 = vunpack.c.l.b16 %v212
    %v1210 = vunpack.c.h.b16 %v212
    %v1211 = vunpack.c.l.b16 %v213
    %v1212 = vunpack.c.h.b16 %v213
    %v1213 = vunpack.c.l.b16 %v214
    %v1214 = vunpack.c.h.b16 %v214
    %v1215 = vunpack.c.l.b16 %v215
    %v1216 = vunpack.c.l.b16 %v216
    %v1217 = vunpack.c.h.b16 %v216
    %v1218 = vunpack.c.l.b16 %v217
    %v1219 = vunpack.c.h.b16 %v217
    %v1220 = vunpack.c.l.b16 %v218
    %v1221 = vunpack.c.h.b16 %v218
    %v1222 = vunpack.c.l.b16 %v219
    %v1223 = vunpack.c.l.b16 %v220
    %v1224 = vunpack.c.h.b16 %v220
    %v1225 = vunpack.c.l.b16 %v221
    %v1226 = vunpack.c.h.b16 %v221
    %v1227 = vunpack.c.l.b16 %v222
    %v1228 = vunpack.c.h.b16 %v222
    %v1229 = vunpack.c.l.b16 %v223
    %v1230 = vunpack.c.l.b16 %v224
    %v1231 = vunpack.c.h.b16 %v224
    %v1232 = vunpack.c.l.b16 %v225
    %v1233 = vunpack.c.h.b16 %v225
    %v1234 = vunpack.c.l.b16 %v226
    %v1235 = vunpack.c.h.b16 %v226
    %v1236 = vunpack.c.l.b16 %v227
    %v1237 = vunpack.c.l.b16 %v228
    %v1238 = vunpack.c.h.b16 %v228
    %v1239 = vunpack.c.l.b16 %v229
    %v1240 = vunpack.c.h.b16 %v229
    %v1241 = vunpack.c.l.b16 %v230
    %v1242 = vunpack.c.h.b16 %v230
    %v1243 = vunpack.c.l.b16 %v231
    %v1244 = vunpack.c.l.b16 %v232
    %v1245 = vunpack.c.h.b16 %v232
    %v1246 = vunpack.c.l.b16 %v233
    %v1247 = vunpack.c.h.b16 %v233
    %v1248 = vunpack.c.l.b16 %v234
    %v1249 = vunpack.c.h.b16 %v234
    %v1250 = vunpack.c.l.b16 %v235
    %v1251 = vunpack.c.l.b16 %v236
    %v1252 = vunpack.c.h.b16 %v236
    %v1253 = vunpack.c.l.b16 %v237
    %v1254 = vunpack.c.h.b16 %v237
    %v1255 = vunpack.c.l.b16 %v238
    %v1256 = vunpack.c.h.b16 %v238
    %v1257 = vunpack.c.l.b16 %v239
    %v1258 = vunpack.c.l.b16 %v240
    %v1259 = vunpack.c.h.b16 %v240
    %v1260 = vunpack.c.l.b16 %v241
    %v1261 = vunpack.c.h.b16 %v241
    %v1262 = vunpack.c.l.b16 %v242
    %v1263 = vunpack.c.h.b16 %v242
    %v1264 = vunpack.c.l.b16 %v243
    %v1265 = vunpack.c.l.b16 %v244
    %v1266 = vunpack.c.h.b16 %v244
    %v1267 = vunpack.c.l.b16 %v245
    %v1268 = vunpack.c.h.b16 %v245
    %v1269 = vunpack.c.l.b16 %v246
    %v1270 = vunpack.c.h.b16 %v246
    %v1271 = vunpack.c.l.b16 %v247
    %v1272 = vunpack.c.l.b16 %v248
    %v1273 = vunpack.c.h.b16 %v248
    %v1274 = vunpack.c.l.b16 %v249
    %v1275 = vunpack.c.h.b16 %v249
    %v1276 = vunpack.c.l.b16 %v250
    %v1277 = vunpack.c.h.b16 %v250
    %v1278 = vunpack.c.l.b16 %v251
    %v1279 = vunpack.c.l.b16 %v252
    %v1280 = vunpack.c.h.b16 %v252
    %v1281 = vunpack.c.l.b16 %v253
    %v1282 = vunpack.c.h.b16 %v253
    %v1283 = vunpack.c.l.b16 %v254
    %v1284 = vunpack.c.h.b16 %v254
    %v1285 = vunpack.c.l.b16 %v255
    %v1286 = vunpack.c.l.b16 %v256
    %v1287 = vunpack.c.h.b16 %v256
    %v1288 = vunpack.c.l.b16 %v257
    %v1289 = vunpack.c.h.b16 %v257
    %v1290 = vunpack.c.l.b16 %v258
    %v1291 = vunpack.c.h.b16 %v258
    %v1292 = vunpack.c.l.b16 %v259
    %v1293 = vunpack.c.l.b16 %v260
    %v1294 = vunpack.c.h.b16 %v260
    %v1295 = vunpack.c.l.b16 %v261
    %v1296 = vunpack.c.h.b16 %v261
    %v1297 = vunpack.c.l.b16 %v262
    %v1298 = vunpack.c.h.b16 %v262
    %v1299 = vunpack.c.l.b16 %v263
    %v1300 = vunpack.c.l.b16 %v264
    %v1301 = vunpack.c.h.b16 %v264
    %v1302 = vunpack.c.l.b16 %v265
    %v1303 = vunpack.c.h.b16 %v265
    %v1304 = vunpack.c.l.b16 %v266
    %v1305 = vunpack.c.h.b16 %v266
    %v1306 = vunpack.c.l.b16 %v267
    %v1307 = vunpack.c.l.b16 %v268
    %v1308 = vunpack.c.h.b16 %v268
    %v1309 = vunpack.c.l.b16 %v269
    %v1310 = vunpack.c.h.b16 %v269
    %v1311 = vunpack.c.l.b16 %v270
    %v1312 = vunpack.c.h.b16 %v270
    %v1313 = vunpack.c.l.b16 %v271
    %v1314 = vunpack.c.l.b16 %v272
    %v1315 = vunpack.c.h.b16 %v272
    %v1316 = vunpack.c.l.b16 %v273
    %v1317 = vunpack.c.h.b16 %v273
    %v1318 = vunpack.c.l.b16 %v274
    %v1319 = vunpack.c.h.b16 %v274
    %v1320 = vunpack.c.l.b16 %v275
    %v1321 = vunpack.c.l.b16 %v276
    %v1322 = vunpack.c.h.b16 %v276
    %v1323 = vunpack.c.l.b16 %v277
    %v1324 = vunpack.c.h.b16 %v277
    %v1325 = vunpack.c.l.b16 %v278
    %v1326 = vunpack.c.h.b16 %v278
    %v1327 = vunpack.c.l.b16 %v279
    %v1328 = vunpack.c.l.b16 %v280
    %v1329 = vunpack.c.h.b16 %v280
    %v1330 = vunpack.c.l.b16 %v281
    %v1331 = vunpack.c.h.b16 %v281
    %v1332 = vunpack.c.l.b16 %v282
    %v1333 = vunpack.c.h.b16 %v282
    %v1334 = vunpack.c.l.b16 %v283
    %v1335 = vunpack.c.l.b16 %v284
    %v1336 = vunpack.c.h.b16 %v284
    %v1337 = vunpack.c.l.b16 %v285
    %v1338 = vunpack.c.h.b16 %v285
    %v1339 = vunpack.c.l.b16 %v286
    %v1340 = vunpack.c.h.b16 %v286
    %v1341 = vunpack.c.l.b16 %v287
    %v1342 = vunpack.c.l.b16 %v288
    %v1343 = vunpack.c.h.b16 %v288
    %v1344 = vunpack.c.l.b16 %v289
    %v1345 = vunpack.c.h.b16 %v289
    %v1346 = vunpack.c.l.b16 %v290
    %v1347 = vunpack.c.h.b16 %v290
    %v1348 = vunpack.c.l.b16 %v291
    %v1349 = vunpack.c.l.b16 %v292
    %v1350 = vunpack.c.h.b16 %v292
    %v1351 = vunpack.c.l.b16 %v293
    %v1352 = vunpack.c.h.b16 %v293
    %v1353 = vunpack.c.l.b16 %v294
    %v1354 = vunpack.c.h.b16 %v294
    %v1355 = vunpack.c.l.b16 %v295
    %v1356 = vunpack.c.l.b16 %v296
    %v1357 = vunpack.c.h.b16 %v296
    %v1358 = vunpack.c.l.b16 %v297
    %v1359 = vunpack.c.h.b16 %v297
    %v1360 = vunpack.c.l.b16 %v298
    %v1361 = vunpack.c.h.b16 %v298
    %v1362 = vunpack.c.l.b16 %v299
    %v1363 = vunpack.c.l.b16 %v300
    %v1364 = vunpack.c.h.b16 %v300
    %v1365 = vunpack.c.l.b16 %v301
    %v1366 = vunpack.c.h.b16 %v301
    %v1367 = vunpack.c.l.b16 %v302
    %v1368 = vunpack.c.h.b16 %v302
    %v1369 = vunpack.c.l.b16 %v303
    %v1370 = vunpack.c.l.b16 %v304
    %v1371 = vunpack.c.h.b16 %v304
    %v1372 = vunpack.c.l.b16 %v305
    %v1373 = vunpack.c.h.b16 %v305
    %v1374 = vunpack.c.l.b16 %v306
    %v1375 = vunpack.c.h.b16 %v306
    %v1376 = vunpack.c.l.b16 %v307
    %v1377 = vunpack.c.l.b16 %v308
    %v1378 = vunpack.c.h.b16 %v308
    %v1379 = vunpack.c.l.b16 %v309
    %v1380 = vunpack.c.h.b16 %v309
    %v1381 = vunpack.c.l.b16 %v310
    %v1382 = vunpack.c.h.b16 %v310
    %v1383 = vunpack.c.l.b16 %v311
    %v1384 = vunpack.c.l.b16 %v312
    %v1385 = vunpack.c.h.b16 %v312
    %v1386 = vunpack.c.l.b16 %v313
    %v1387 = vunpack.c.h.b16 %v313
    %v1388 = vunpack.c.l.b16 %v314
    %v1389 = vunpack.c.h.b16 %v314
    %v1390 = vunpack.c.l.b16 %v315
    %v1391 = vunpack.c.l.b16 %v316
    %v1392 = vunpack.c.h.b16 %v316
    %v1393 = vunpack.c.l.b16 %v317
    %v1394 = vunpack.c.h.b16 %v317
    %v1395 = vunpack.c.l.b16 %v318
    %v1396 = vunpack.c.h.b16 %v318
    %v1397 = vunpack.c.l.b16 %v319
    %v1398 = vunpack.c.l.b16 %v320
    %v1399 = vunpack.c.h.b16 %v320
    %v1400 = vunpack.c.l.b16 %v321
    %v1401 = vunpack.c.h.b16 %v321
    %v1402 = vunpack.c.l.b16 %v322
    %v1403 = vunpack.c.h.b16 %v322
    %v1404 = vunpack.c.l.b16 %v323
    %v1405 = vunpack.c.l.b16 %v324
    %v1406 = vunpack.c.h.b16 %v324
    %v1407 = vunpack.c.l.b16 %v325
    %v1408 = vunpack.c.h.b16 %v325
    %v1409 = vunpack.c.l.b16 %v326
    %v1410 = vunpack.c.h.b16 %v326
    %v1411 = vunpack.c.l.b16 %v327
    %v1412 = vunpack.c.l.b16 %v328
    %v1413 = vunpack.c.h.b16 %v328
    %v1414 = vunpack.c.l.b16 %v329
    %v1415 = vunpack.c.h.b16 %v329
    %v1416 = vunpack.c.l.b16 %v330
    %v1417 = vunpack.c.h.b16 %v330
    %v1418 = vunpack.c.l.b16 %v331
    %v1419 = vunpack.c.l.b16 %v332
    %v1420 = vunpack.c.h.b16 %v332
    %v1421 = vunpack.c.l.b16 %v333
    %v1422 = vunpack.c.h.b16 %v333
    %v1423 = vunpack.c.l.b16 %v334
    %v1424 = vunpack.c.h.b16 %v334
    %v1425 = vunpack.c.l.b16 %v335
    %v1426 = vunpack.c.l.b16 %v336
    %v1427 = vunpack.c.h.b16 %v336
    %v1428 = vunpack.c.l.b16 %v337
    %v1429 = vunpack.c.h.b16 %v337
    %v1430 = vunpack.c.l.b16 %v338
    %v1431 = vunpack.c.h.b16 %v338
    %v1432 = vunpack.c.l.b16 %v339
    %v1433 = vunpack.c.l.b16 %v340
    %v1434 = vunpack.c.h.b16 %v340
    %v1435 = vunpack.c.l.b16 %v341
    %v1436 = vunpack.c.h.b16 %v341
    %v1437 = vunpack.c.l.b16 %v342
    %v1438 = vunpack.c.h.b16 %v342
    %v1439 = vunpack.c.l.b16 %v343
    %v1440 = vunpack.c.l.b16 %v344
    %v1441 = vunpack.c.h.b16 %v344
    %v1442 = vunpack.c.l.b16 %v345
    %v1443 = vunpack.c.h.b16 %v345
    %v1444 = vunpack.c.l.b16 %v346
    %v1445 = vunpack.c.h.b16 %v346
    %v1446 = vunpack.c.l.b16 %v347
    %v1447 = vunpack.c.l.b16 %v348
    %v1448 = vunpack.c.h.b16 %v348
    %v1449 = vunpack.c.l.b16 %v349
    %v1450 = vunpack.c.h.b16 %v349
    %v1451 = vunpack.c.l.b16 %v350
    %v1452 = vunpack.c.h.b16 %v350
    %v1453 = vunpack.c.l.b16 %v351
    %v1454 = vunpack.c.l.b16 %v352
    %v1455 = vunpack.c.h.b16 %v352
    %v1456 = vunpack.c.l.b16 %v353
    %v1457 = vunpack.c.h.b16 %v353
    %v1458 = vunpack.c.l.b16 %v354
    %v1459 = vunpack.c.h.b16 %v354
    %v1460 = vunpack.c.l.b16 %v355
    %v1461 = vunpack.c.l.b16 %v356
    %v1462 = vunpack.c.h.b16 %v356
    %v1463 = vunpack.c.l.b16 %v357
    %v1464 = vunpack.c.h.b16 %v357
    %v1465 = vunpack.c.l.b16 %v358
    %v1466 = vunpack.c.h.b16 %v358
    %v1467 = vunpack.c.l.b16 %v359
    %v1468 = vunpack.c.l.b16 %v360
    %v1469 = vunpack.c.h.b16 %v360
    %v1470 = vunpack.c.l.b16 %v361
    %v1471 = vunpack.c.h.b16 %v361
    %v1472 = vunpack.c.l.b16 %v362
    %v1473 = vunpack.c.h.b16 %v362
    %v1474 = vunpack.c.l.b16 %v363
    %v1475 = vunpack.c.l.b16 %v364
    %v1476 = vunpack.c.h.b16 %v364
    %v1477 = vunpack.c.l.b16 %v365
    %v1478 = vunpack.c.h.b16 %v365
    %v1479 = vunpack.c.l.b16 %v366
    %v1480 = vunpack.c.h.b16 %v366
    %v1481 = vunpack.c.l.b16 %v367
    %v1482 = vunpack.c.l.b16 %v368
    %v1483 = vunpack.c.h.b16 %v368
    %v1484 = vunpack.c.l.b16 %v369
    %v1485 = vunpack.c.h.b16 %v369
    %v1486 = vunpack.c.l.b16 %v370
    %v1487 = vunpack.c.h.b16 %v370
    %v1488 = vunpack.c.l.b16 %v371
    %v1489 = vunpack.c.l.b16 %v372
    %v1490 = vunpack.c.h.b16 %v372
    %v1491 = vunpack.c.l.b16 %v373
    %v1492 = vunpack.c.h.b16 %v373
    %v1493 = vunpack.c.l.b16 %v374
    %v1494 = vunpack.c.h.b16 %v374
    %v1495 = vunpack.c.l.b16 %v375
    %v1496 = vunpack.c.l.b16 %v376
    %v1497 = vunpack.c.h.b16 %v376
    %v1498 = vunpack.c.l.b16 %v377
    %v1499 = vunpack.c.h.b16 %v377
    %v1500 = vunpack.c.l.b16 %v378
    %v1501 = vunpack.c.h.b16 %v378
    %v1502 = vunpack.c.l.b16 %v379
    %v1503 = vunpack.c.l.b16 %v380
    %v1504 = vunpack.c.h.b16 %v380
    %v1505 = vunpack.c.l.b16 %v381
    %v1506 = vunpack.c.h.b16 %v381
    %v1507 = vunpack.c.l.b16 %v382
    %v1508 = vunpack.c.h.b16 %v382
    %v1509 = vunpack.c.l.b16 %v383
    %v1510 = vunpack.c.l.b16 %v384
    %v1511 = vunpack.c.h.b16 %v384
    %v1512 = vunpack.c.l.b16 %v385
    %v1513 = vunpack.c.h.b16 %v385
    %v1514 = vunpack.c.l.b16 %v386
    %v1515 = vunpack.c.h.b16 %v386
    %v1516 = vunpack.c.l.b16 %v387
    %v1517 = vunpack.c.l.b16 %v388
    %v1518 = vunpack.c.h.b16 %v388
    %v1519 = vunpack.c.l.b16 %v389
    %v1520 = vunpack.c.h.b16 %v389
    %v1521 = vunpack.c.l.b16 %v390
    %v1522 = vunpack.c.h.b16 %v390
    %v1523 = vunpack.c.l.b16 %v391
    %v1524 = vunpack.c.l.b16 %v392
    %v1525 = vunpack.c.h.b16 %v392
    %v1526 = vunpack.c.l.b16 %v393
    %v1527 = vunpack.c.h.b16 %v393
    %v1528 = vunpack.c.l.b16 %v394
    %v1529 = vunpack.c.h.b16 %v394
    %v1530 = vunpack.c.l.b16 %v395
    %v1531 = vunpack.c.l.b16 %v396
    %v1532 = vunpack.c.h.b16 %v396
    %v1533 = vunpack.c.l.b16 %v397
    %v1534 = vunpack.c.h.b16 %v397
    %v1535 = vunpack.c.l.b16 %v398
    %v1536 = vunpack.c.h.b16 %v398
    %v1537 = vunpack.c.l.b16 %v399
    %v1538 = vunpack.c.l.b16 %v400
    %v1539 = vunpack.c.h.b16 %v400
    %v1540 = vunpack.c.l.b16 %v401
    %v1541 = vunpack.c.h.b16 %v401
    %v1542 = vunpack.c.l.b16 %v402
    %v1543 = vunpack.c.h.b16 %v402
    %v1544 = vunpack.c.l.b16 %v403
    %v1545 = vunpack.c.l.b16 %v404
    %v1546 = vunpack.c.h.b16 %v404
    %v1547 = vunpack.c.l.b16 %v405
    %v1548 = vunpack.c.h.b16 %v405
    %v1549 = vunpack.c.l.b16 %v406
    %v1550 = vunpack.c.h.b16 %v406
    %v1551 = vunpack.c.l.b16 %v407
    %v1552 = vunpack.c.l.b16 %v408
    %v1553 = vunpack.c.h.b16 %v408
    %v1554 = vunpack.c.l.b16 %v409
    %v1555 = vunpack.c.h.b16 %v409
    %v1556 = vunpack.c.l.b16 %v410
    %v1557 = vunpack.c.h.b16 %v410
    %v1558 = vunpack.c.l.b16 %v411
    %v1559 = vunpack.c.l.b16 %v412
    %v1560 = vunpack.c.h.b16 %v412
    %v1561 = vunpack.c.l.b16 %v413
    %v1562 = vunpack.c.h.b16 %v413
    %v1563 = vunpack.c.l.b16 %v414
    %v1564 = vunpack.c.h.b16 %v414
    %v1565 = vunpack.c.l.b16 %v415
    %v1566 = vunpack.c.l.b16 %v416
    %v1567 = vunpack.c.h.b16 %v416
    %v1568 = vunpack.c.l.b16 %v417
    %v1569 = vunpack.c.h.b16 %v417
    %v1570 = vunpack.c.l.b16 %v418
    %v1571 = vunpack.c.h.b16 %v418
    %v1572 = vunpack.c.l.b16 %v419
    %v1573 = vunpack.c.l.b16 %v420
    %v1574 = vunpack.c.h.b16 %v420
    %v1575 = vunpack.c.l.b16 %v421
    %v1576 = vunpack.c.h.b16 %v421
    %v1577 = vunpack.c.l.b16 %v422
    %v1578 = vunpack.c.h.b16 %v422
    %v1579 = vunpack.c.l.b16 %v423
    %v1580 = vunpack.c.l.b16 %v424
    %v1581 = vunpack.c.h.b16 %v424
    %v1582 = vunpack.c.l.b16 %v425
    %v1583 = vunpack.c.h.b16 %v425
    %v1584 = vunpack.c.l.b16 %v426
    %v1585 = vunpack.c.h.b16 %v426
    %v1586 = vunpack.c.l.b16 %v427
    %v1587 = vunpack.c.l.b16 %v428
    %v1588 = vunpack.c.h.b16 %v428
    %v1589 = vunpack.c.l.b16 %v429
    %v1590 = vunpack.c.h.b16 %v429
    %v1591 = vunpack.c.l.b16 %v430
    %v1592 = vunpack.c.h.b16 %v430
    %v1593 = vunpack.c.l.b16 %v431
    %v1594 = vunpack.c.l.b16 %v432
    %v1595 = vunpack.c.h.b16 %v432
    %v1596 = vunpack.c.l.b16 %v433
    %v1597 = vunpack.c.h.b16 %v433
    %v1598 = vunpack.c.l.b16 %v434
    %v1599 = vunpack.c.h.b16 %v434
    %v1600 = vunpack.c.l.b16 %v435
    %v1601 = vunpack.c.l.b16 %v436
    %v1602 = vunpack.c.h.b16 %v436
    %v1603 = vunpack.c.l.b16 %v437
    %v1604 = vunpack.c.h.b16 %v437
    %v1605 = vunpack.c.l.b16 %v438
    %v1606 = vunpack.c.h.b16 %v438
    %v1607 = vunpack.c.l.b16 %v439
    %v1608 = vunpack.c.l.b16 %v440
    %v1609 = vunpack.c.h.b16 %v440
    %v1610 = vunpack.c.l.b16 %v441
    %v1611 = vunpack.c.h.b16 %v441
    %v1612 = vunpack.c.l.b16 %v442
    %v1613 = vunpack.c.h.b16 %v442
    %v1614 = vunpack.c.l.b16 %v443
    %v1615 = vunpack.c.l.b16 %v444
    %v1616 = vunpack.c.h.b16 %v444
    %v1617 = vunpack.c.l.b16 %v445
    %v1618 = vunpack.c.h.b16 %v445
    %v1619 = vunpack.c.l.b16 %v446
    %v1620 = vunpack.c.h.b16 %v446
    %v1621 = vunpack.c.l.b16 %v447
    %v1622 = vunpack.c.l.b16 %v448
    %v1623 = vunpack.c.h.b16 %v448
    %v1624 = vunpack.c.l.b16 %v449
    %v1625 = vunpack.c.h.b16 %v449
    %v1626 = vunpack.c.l.b16 %v450
    %v1627 = vunpack.c.h.b16 %v450
    %v1628 = vunpack.c.l.b16 %v451
    %v1629 = vunpack.c.l.b16 %v452
    %v1630 = vunpack.c.h.b16 %v452
    %v1631 = vunpack.c.l.b16 %v453
    %v1632 = vunpack.c.h.b16 %v453
    %v1633 = vunpack.c.l.b16 %v454
    %v1634 = vunpack.c.h.b16 %v454
    %v1635 = vunpack.c.l.b16 %v455
    %v1636 = vunpack.c.l.b16 %v456
    %v1637 = vunpack.c.h.b16 %v456
    %v1638 = vunpack.c.l.b16 %v457
    %v1639 = vunpack.c.h.b16 %v457
    %v1640 = vunpack.c.l.b16 %v458
    %v1641 = vunpack.c.h.b16 %v458
    %v1642 = vunpack.c.l.b16 %v459
    %v1643 = vunpack.c.l.b16 %v460
    %v1644 = vunpack.c.h.b16 %v460
    %v1645 = vunpack.c.l.b16 %v461
    %v1646 = vunpack.c.h.b16 %v461
    %v1647 = vunpack.c.l.b16 %v462
    %v1648 = vunpack.c.h.b16 %v462
    %v1649 = vunpack.c.l.b16 %v463
    %v1650 = vunpack.c.l.b16 %v464
    %v1651 = vunpack.c.h.b16 %v464
    %v1652 = vunpack.c.l.b16 %v465
    %v1653 = vunpack.c.h.b16 %v465
    %v1654 = vunpack.c.l.b16 %v466
    %v1655 = vunpack.c.h.b16 %v466
    %v1656 = vunpack.c.l.b16 %v467
    %v1657 = vunpack.c.l.b16 %v468
    %v1658 = vunpack.c.h.b16 %v468
    %v1659 = vunpack.c.l.b16 %v469
    %v1660 = vunpack.c.h.b16 %v469
    %v1661 = vunpack.c.l.b16 %v470
    %v1662 = vunpack.c.h.b16 %v470
    %v1663 = vunpack.c.l.b16 %v471
    %v1664 = vunpack.c.l.b16 %v472
    %v1665 = vunpack.c.h.b16 %v472
    %v1666 = vunpack.c.l.b16 %v473
    %v1667 = vunpack.c.h.b16 %v473
    %v1668 = vunpack.c.l.b16 %v474
    %v1669 = vunpack.c.h.b16 %v474
    %v1670 = vunpack.c.l.b16 %v475
    %v1671 = vunpack.c.l.b16 %v476
    %v1672 = vunpack.c.h.b16 %v476
    %v1673 = vunpack.c.l.b16 %v477
    %v1674 = vunpack.c.h.b16 %v477
    %v1675 = vunpack.c.l.b16 %v478
    %v1676 = vunpack.c.h.b16 %v478
    %v1677 = vunpack.c.l.b16 %v479
    %v1678 = vunpack.c.l.b16 %v480
    %v1679 = vunpack.c.h.b16 %v480
    %v1680 = vunpack.c.l.b16 %v481
    %v1681 = vunpack.c.h.b16 %v481
    %v1682 = vunpack.c.l.b16 %v482
    %v1683 = vunpack.c.h.b16 %v482
    %v1684 = vunpack.c.l.b16 %v483
    %v1685 = vunpack.c.l.b16 %v484
    %v1686 = vunpack.c.h.b16 %v484
    %v1687 = vunpack.c.l.b16 %v485
    %v1688 = vunpack.c.h.b16 %v485
    %v1689 = vunpack.c.l.b16 %v486
    %v1690 = vunpack.c.h.b16 %v486
    %v1691 = vunpack.c.l.b16 %v487
    %v1692 = vunpack.c.l.b16 %v488
    %v1693 = vunpack.c.h.b16 %v488
    %v1694 = vunpack.c.l.b16 %v489
    %v1695 = vunpack.c.h.b16 %v489
    %v1696 = vunpack.c.l.b16 %v490
    %v1697 = vunpack.c.h.b16 %v490
    %v1698 = vunpack.c.l.b16 %v491
    %v1699 = vunpack.c.l.b16 %v492
    %v1700 = vunpack.c.h.b16 %v492
    %v1701 = vunpack.c.l.b16 %v493
    %v1702 = vunpack.c.h.b16 %v493
    %v1703 = vunpack.c.l.b16 %v494
    %v1704 = vunpack.c.h.b16 %v494
    %v1705 = vunpack.c.l.b16 %v495
    %v1706 = vunpack.c.l.b16 %v496
    %v1707 = vunpack.c.h.b16 %v496
    %v1708 = vunpack.c.l.b16 %v497
    %v1709 = vunpack.c.h.b16 %v497
    %v1710 = vunpack.c.l.b16 %v498
    %v1711 = vunpack.c.h.b16 %v498
    %v1712 = vunpack.c.l.b16 %v499
    %v1713 = vunpack.c.l.b16 %v500
    %v1714 = vunpack.c.h.b16 %v500
    %v1715 = vunpack.c.l.b16 %v501
    %v1716 = vunpack.c.h.b16 %v501
    %v1717 = vunpack.c.l.b16 %v502
    %v1718 = vunpack.c.h.b16 %v502
    %v1719 = vunpack.c.l.b16 %v503
    %v1720 = vunpack.c.l.b16 %v504
    %v1721 = vunpack.c.h.b16 %v504
    %v1722 = vunpack.c.l.b16 %v505
    %v1723 = vunpack.c.h.b16 %v505
    %v1724 = vunpack.c.l.b16 %v506
    %v1725 = vunpack.c.h.b16 %v506
    %v1726 = vunpack.c.l.b16 %v507
    %v1727 = vunpack.c.l.b16 %v508
    %v1728 = vunpack.c.h.b16 %v508
    %v1729 = vunpack.c.l.b16 %v509
    %v1730 = vunpack.c.h.b16 %v509
    %v1731 = vunpack.c.l.b16 %v510
    %v1732 = vunpack.c.h.b16 %v510
    %v1733 = vunpack.c.l.b16 %v511
    %v1734 = vunpack.c.l.b16 %v512
    %v1735 = vunpack.c.h.b16 %v512
    %v1736 = vunpack.c.l.b16 %v513
    %v1737 = vunpack.c.h.b16 %v513
    %v1738 = vunpack.c.l.b16 %v514
    %v1739 = vunpack.c.h.b16 %v514
    %v1740 = vunpack.c.l.b16 %v515
    %v1741 = vunpack.c.l.b16 %v516
    %v1742 = vunpack.c.h.b16 %v516
    %v1743 = vunpack.c.l.b16 %v517
    %v1744 = vunpack.c.h.b16 %v517
    %v1745 = vunpack.c.l.b16 %v518
    %v1746 = vunpack.c.h.b16 %v518
    %v1747 = vunpack.c.l.b16 %v519
    %v1748 = vunpack.c.l.b16 %v520
    %v1749 = vunpack.c.h.b16 %v520
    %v1750 = vunpack.c.l.b16 %v521
    %v1751 = vunpack.c.h.b16 %v521
    %v1752 = vunpack.c.l.b16 %v522
    %v1753 = vunpack.c.h.b16 %v522
    %v1754 = vunpack.c.l.b16 %v523
    %v1755 = vunpack.c.l.b16 %v524
    %v1756 = vunpack.c.h.b16 %v524
    %v1757 = vunpack.c.l.b16 %v525
    %v1758 = vunpack.c.h.b16 %v525
    %v1759 = vunpack.c.l.b16 %v526
    %v1760 = vunpack.c.h.b16 %v526
    %v1761 = vunpack.c.l.b16 %v527
    %v1762 = vunpack.c.l.b16 %v528
    %v1763 = vunpack.c.h.b16 %v528
    %v1764 = vunpack.c.l.b16 %v529
    %v1765 = vunpack.c.h.b16 %v529
    %v1766 = vunpack.c.l.b16 %v530
    %v1767 = vunpack.c.h.b16 %v530
    %v1768 = vunpack.c.l.b16 %v531
    %v1769 = vunpack.c.l.b16 %v532
    %v1770 = vunpack.c.h.b16 %v532
    %v1771 = vunpack.c.l.b16 %v533
    %v1772 = vunpack.c.h.b16 %v533
    %v1773 = vunpack.c.l.b16 %v534
    %v1774 = vunpack.c.h.b16 %v534
    %v1775 = vunpack.c.l.b16 %v535
    %v1776 = vunpack.c.l.b16 %v536
    %v1777 = vunpack.c.h.b16 %v536
    %v1778 = vunpack.c.l.b16 %v537
    %v1779 = vunpack.c.h.b16 %v537
    %v1780 = vunpack.c.l.b16 %v538
    %v1781 = vunpack.c.h.b16 %v538
    %v1782 = vunpack.c.l.b16 %v539
    %v1783 = vunpack.c.l.b16 %v540
    %v1784 = vunpack.c.h.b16 %v540
    %v1785 = vunpack.c.l.b16 %v541
    %v1786 = vunpack.c.h.b16 %v541
    %v1787 = vunpack.c.l.b16 %v542
    %v1788 = vunpack.c.h.b16 %v542
    %v1789 = vunpack.c.l.b16 %v543
    %v1790 = vunpack.c.l.b16 %v544
    %v1791 = vunpack.c.h.b16 %v544
    %v1792 = vunpack.c.l.b16 %v545
    %v1793 = vunpack.c.h.b16 %v545
    %v1794 = vunpack.c.l.b16 %v546
    %v1795 = vunpack.c.h.b16 %v546
    %v1796 = vunpack.c.l.b16 %v547
    %v1797 = vunpack.c.l.b16 %v548
    %v1798 = vunpack.c.h.b16 %v548
    %v1799 = vunpack.c.l.b16 %v549
    %v1800 = vunpack.c.h.b16 %v549
    %v1801 = vunpack.c.l.b16 %v550
    %v1802 = vunpack.c.h.b16 %v550
    %v1803 = vunpack.c.l.b16 %v551
    %v1804 = vunpack.c.l.b16 %v552
    %v1805 = vunpack.c.h.b16 %v552
    %v1806 = vunpack.c.l.b16 %v553
    %v1807 = vunpack.c.h.b16 %v553
    %v1808 = vunpack.c.l.b16 %v554
    %v1809 = vunpack.c.h.b16 %v554
    %v1810 = vunpack.c.l.b16 %v555
    %v1811 = vunpack.c.l.b16 %v556
    %v1812 = vunpack.c.h.b16 %v556
    %v1813 = vunpack.c.l.b16 %v557
    %v1814 = vunpack.c.h.b16 %v557
    %v1815 = vunpack.c.l.b16 %v558
    %v1816 = vunpack.c.h.b16 %v558
    %v1817 = vunpack.c.l.b16 %v559
    %v1818 = vunpack.c.l.b16 %v560
    %v1819 = vunpack.c.h.b16 %v560
    %v1820 = vunpack.c.l.b16 %v561
    %v1821 = vunpack.c.h.b16 %v561
    %v1822 = vunpack.c.l.b16 %v562
    %v1823 = vunpack.c.h.b16 %v562
    %v1824 = vunpack.c.l.b16 %v563
    %v1825 = vunpack.c.l.b16 %v564
    %v1826 = vunpack.c.h.b16 %v564
    %v1827 = vunpack.c.l.b16 %v565
    %v1828 = vunpack.c.h.b16 %v565
    %v1829 = vunpack.c.l.b16 %v566
    %v1830 = vunpack.c.h.b16 %v566
    %v1831 = vunpack.c.l.b16 %v567
    %v1832 = vunpack.c.l.b16 %v568
    %v1833 = vunpack.c.h.b16 %v568
    %v1834 = vunpack.c.l.b16 %v569
    %v1835 = vunpack.c.h.b16 %v569
    %v1836 = vunpack.c.l.b16 %v570
    %v1837 = vunpack.c.h.b16 %v570
    %v1838 = vunpack.c.l.b16 %v571
    %v1839 = vunpack.c.l.b16 %v572
    %v1840 = vunpack.c.h.b16 %v572
    %v1841 = vunpack.c.l.b16 %v573
    %v1842 = vunpack.c.h.b16 %v573
    %v1843 = vunpack.c.l.b16 %v574
    %v1844 = vunpack.c.h.b16 %v574
    %v1845 = vunpack.c.l.b16 %v575
    %v1846 = vunpack.c.l.b16 %v576
    %v1847 = vunpack.c.h.b16 %v576
    %v1848 = vunpack.c.l.b16 %v577
    %v1849 = vunpack.c.h.b16 %v577
    %v1850 = vunpack.c.l.b16 %v578
    %v1851 = vunpack.c.h.b16 %v578
    %v1852 = vunpack.c.l.b16 %v579
    %v1853 = vpack.c.b16 %v1076, %v1069
    %v1854 = vpack.c.b16 %v1077, %v1070
    %v1855 = vpack.c.b16 %v1078, %v1071
    %v1856 = vpack.c.b16 %v1079, %v1072
    %v1857 = vpack.c.b16 %v1080, %v1073
    %v1858 = vpack.c.b16 %v1081, %v1074
    %v1859 = vpack.c.b16 %v1082, %v1075
    %v1860 = vpack.c.b16 %v1090, %v1083
    %v1861 = vpack.c.b16 %v1091, %v1084
    %v1862 = vpack.c.b16 %v1092, %v1085
    %v1863 = vpack.c.b16 %v1093, %v1086
    %v1864 = vpack.c.b16 %v1094, %v1087
    %v1865 = vpack.c.b16 %v1095, %v1088
    %v1866 = vpack.c.b16 %v1096, %v1089
    %v1867 = vpack.c.b16 %v1104, %v1097
    %v1868 = vpack.c.b16 %v1105, %v1098
    %v1869 = vpack.c.b16 %v1106, %v1099
    %v1870 = vpack.c.b16 %v1107, %v1100
    %v1871 = vpack.c.b16 %v1108, %v1101
    %v1872 = vpack.c.b16 %v1109, %v1102
    %v1873 = vpack.c.b16 %v1110, %v1103
    %v1874 = vpack.c.b16 %v1118, %v1111
    %v1875 = vpack.c.b16 %v1119, %v1112
    %v1876 = vpack.c.b16 %v1120, %v1113
    %v1877 = vpack.c.b16 %v1121, %v1114
    %v1878 = vpack.c.b16 %v1122, %v1115
    %v1879 = vpack.c.b16 %v1123, %v1116
    %v1880 = vpack.c.b16 %v1124, %v1117
    %v1881 = vpack.c.b16 %v1132, %v1125
    %v1882 = vpack.c.b16 %v1133, %v1126
    %v1883 = vpack.c.b16 %v1134, %v1127
    %v1884 = vpack.c.b16 %v1135, %v1128
    %v1885 = vpack.c.b16 %v1136, %v1129
    %v1886 = vpack.c.b16 %v1137, %v1130
    %v1887 = vpack.c.b16 %v1138, %v1131
    %v1888 = vpack.c.b16 %v1146, %v1139
    %v1889 = vpack.c.b16 %v1147, %v1140
    %v1890 = vpack.c.b16 %v1148, %v1141
    %v1891 = vpack.c.b16 %v1149, %v1142
    %v1892 = vpack.c.b16 %v1150, %v1143
    %v1893 = vpack.c.b16 %v1151, %v1144
    %v1894 = vpack.c.b16 %v1152, %v1145
    %v1895 = vpack.c.b16 %v1160, %v1153
    %v1896 = vpack.c.b16 %v1161, %v1154
    %v1897 = vpack.c.b16 %v1162, %v1155
    %v1898 = vpack.c.b16 %v1163, %v1156
    %v1899 = vpack.c.b16 %v1164, %v1157
    %v1900 = vpack.c.b16 %v1165, %v1158
    %v1901 = vpack.c.b16 %v1166, %v1159
    %v1902 = vpack.c.b16 %v1174, %v1167
    %v1903 = vpack.c.b16 %v1175, %v1168
    %v1904 = vpack.c.b16 %v1176, %v1169
    %v1905 = vpack.c.b16 %v1177, %v1170
    %v1906 = vpack.c.b16 %v1178, %v1171
    %v1907 = vpack.c.b16 %v1179, %v1172
    %v1908 = vpack.c.b16 %v1180, %v1173
    %v1909 = vpack.c.b16 %v1188, %v1181
    %v1910 = vpack.c.b16 %v1189, %v1182
    %v1911 = vpack.c.b16 %v1190, %v1183
    %v1912 = vpack.c.b16 %v1191, %v1184
    %v1913 = vpack.c.b16 %v1192, %v1185
    %v1914 = vpack.c.b16 %v1193, %v1186
    %v1915 = vpack.c.b16 %v1194, %v1187
    %v1916 = vpack.c.b16 %v1202, %v1195
    %v1917 = vpack.c.b16 %v1203, %v1196
    %v1918 = vpack.c.b16 %v1204, %v1197
    %v1919 = vpack.c.b16 %v1205, %v1198
    %v1920 = vpack.c.b16 %v1206, %v1199
    %v1921 = vpack.c.b16 %v1207, %v1200
    %v1922 = vpack.c.b16 %v1208, %v1201
    %v1923 = vpack.c.b16 %v1216, %v1209
    %v1924 = vpack.c.b16 %v1217, %v1210
    %v1925 = vpack.c.b16 %v1218, %v1211
    %v1926 = vpack.c.b16 %v1219, %v1212
    %v1927 = vpack.c.b16 %v1220, %v1213
    %v1928 = vpack.c.b16 %v1221, %v1214
    %v1929 = vpack.c.b16 %v1222, %v1215
    %v1930 = vpack.c.b16 %v1230, %v1223
    %v1931 = vpack.c.b16 %v1231, %v1224
    %v1932 = vpack.c.b16 %v1232, %v1225
    %v1933 = vpack.c.b16 %v1233, %v1226
    %v1934 = vpack.c.b16 %v1234, %v1227
    %v1935 = vpack.c.b16 %v1235, %v1228
    %v1936 = vpack.c.b16 %v1236, %v1229
    %v1937 = vpack.c.b16 %v1244, %v1237
    %v1938 = vpack.c.b16 %v1245, %v1238
    %v1939 = vpack.c.b16 %v1246, %v1239
    %v1940 = vpack.c.b16 %v1247, %v1240
    %v1941 = vpack.c.b16 %v1248, %v1241
    %v1942 = vpack.c.b16 %v1249, %v1242
    %v1943 = vpack.c.b16 %v1250, %v1243
    %v1944 = vpack.c.b16 %v1258, %v1251
    %v1945 = vpack.c.b16 %v1259, %v1252
    %v1946 = vpack.c.b16 %v1260, %v1253
    %v1947 = vpack.c.b16 %v1261, %v1254
    %v1948 = vpack.c.b16 %v1262, %v1255
    %v1949 = vpack.c.b16 %v1263, %v1256
    %v1950 = vpack.c.b16 %v1264, %v1257
    %v1951 = vpack.c.b16 %v1272, %v1265
    %v1952 = vpack.c.b16 %v1273, %v1266
    %v1953 = vpack.c.b16 %v1274, %v1267
    %v1954 = vpack.c.b16 %v1275, %v1268
    %v1955 = vpack.c.b16 %v1276, %v1269
    %v1956 = vpack.c.b16 %v1277, %v1270
    %v1957 = vpack.c.b16 %v1278, %v1271
    %v1958 = vpack.c.b16 %v1286, %v1279
    %v1959 = vpack.c.b16 %v1287, %v1280
    %v1960 = vpack.c.b16 %v1288, %v1281
    %v1961 = vpack.c.b16 %v1289, %v1282
    %v1962 = vpack.c.b16 %v1290, %v1283
    %v1963 = vpack.c.b16 %v1291, %v1284
    %v1964 = vpack.c.b16 %v1292, %v1285
    %v1965 = vpack.c.b16 %v1300, %v1293
    %v1966 = vpack.c.b16 %v1301, %v1294
    %v1967 = vpack.c.b16 %v1302, %v1295
    %v1968 = vpack.c.b16 %v1303, %v1296
    %v1969 = vpack.c.b16 %v1304, %v1297
    %v1970 = vpack.c.b16 %v1305, %v1298
    %v1971 = vpack.c.b16 %v1306, %v1299
    %v1972 = vpack.c.b16 %v1314, %v1307
    %v1973 = vpack.c.b16 %v1315, %v1308
    %v1974 = vpack.c.b16 %v1316, %v1309
    %v1975 = vpack.c.b16 %v1317, %v1310
    %v1976 = vpack.c.b16 %v1318, %v1311
    %v1977 = vpack.c.b16 %v1319, %v1312
    %v1978 = vpack.c.b16 %v1320, %v1313
    %v1979 = vpack.c.b16 %v1328, %v1321
    %v1980 = vpack.c.b16 %v1329, %v1322
    %v1981 = vpack.c.b16 %v1330, %v1323
    %v1982 = vpack.c.b16 %v1331, %v1324
    %v1983 = vpack.c.b16 %v1332, %v1325
    %v1984 = vpack.c.b16 %v1333, %v1326
    %v1985 = vpack.c.b16 %v1334, %v1327
    %v1986 = vpack.c.b16 %v1342, %v1335
    %v1987 = vpack.c.b16 %v1343, %v1336
    %v1988 = vpack.c.b16 %v1344, %v1337
    %v1989 = vpack.c.b16 %v1345, %v1338
    %v1990 = vpack.c.b16 %v1346, %v1339
    %v1991 = vpack.c.b16 %v1347, %v1340
    %v1992 = vpack.c.b16 %v1348, %v1341
    %v1993 = vpack.c.b16 %v1356, %v1349
    %v1994 = vpack.c.b16 %v1357, %v1350
    %v1995 = vpack.c.b16 %v1358, %v1351
    %v1996 = vpack.c.b16 %v1359, %v1352
    %v1997 = vpack.c.b16 %v1360, %v1353
    %v1998 = vpack.c.b16 %v1361, %v1354
    %v1999 = vpack.c.b16 %v1362, %v1355
    %v2000 = vpack.c.b16 %v1370, %v1363
    %v2001 = vpack.c.b16 %v1371, %v1364
    %v2002 = vpack.c.b16 %v1372, %v1365
    %v2003 = vpack.c.b16 %v1373, %v1366
    %v2004 = vpack.c.b16 %v1374, %v1367
    %v2005 = vpack.c.b16 %v1375, %v1368
    %v2006 = vpack.c.b16 %v1376, %v1369
    %v2007 = vpack.c.b16 %v1384, %v1377
    %v2008 = vpack.c.b16 %v1385, %v1378
    %v2009 = vpack.c.b16 %v1386, %v1379
    %v2010 = vpack.c.b16 %v1387, %v1380
    %v2011 = vpack.c.b16 %v1388, %v1381
    %v2012 = vpack.c.b16 %v1389, %v1382
    %v2013 = vpack.c.b16 %v1390, %v1383
    %v2014 = vpack.c.b16 %v1398, %v1391
    %v2015 = vpack.c.b16 %v1399, %v1392
    %v2016 = vpack.c.b16 %v1400, %v1393
    %v2017 = vpack.c.b16 %v1401, %v1394
    %v2018 = vpack.c.b16 %v1402, %v1395
    %v2019 = vpack.c.b16 %v1403, %v1396
    %v2020 = vpack.c.b16 %v1404, %v1397
    %v2021 = vpack.c.b16 %v1412, %v1405
    %v2022 = vpack.c.b16 %v1413, %v1406
    %v2023 = vpack.c.b16 %v1414, %v1407
    %v2024 = vpack.c.b16 %v1415, %v1408
    %v2025 = vpack.c.b16 %v1416, %v1409
    %v2026 = vpack.c.b16 %v1417, %v1410
    %v2027 = vpack.c.b16 %v1418, %v1411
    %v2028 = vpack.c.b16 %v1426, %v1419
    %v2029 = vpack.c.b16 %v1427, %v1420
    %v2030 = vpack.c.b16 %v1428, %v1421
    %v2031 = vpack.c.b16 %v1429, %v1422
    %v2032 = vpack.c.b16 %v1430, %v1423
    %v2033 = vpack.c.b16 %v1431, %v1424
    %v2034 = vpack.c.b16 %v1432, %v1425
    %v2035 = vpack.c.b16 %v1440, %v1433
    %v2036 = vpack.c.b16 %v1441, %v1434
    %v2037 = vpack.c.b16 %v1442, %v1435
    %v2038 = vpack.c.b16 %v1443, %v1436
    %v2039 = vpack.c.b16 %v1444, %v1437
    %v2040 = vpack.c.b16 %v1445, %v1438
    %v2041 = vpack.c.b16 %v1446, %v1439
    %v2042 = vpack.c.b16 %v1454, %v1447
    %v2043 = vpack.c.b16 %v1455, %v1448
    %v2044 = vpack.c.b16 %v1456, %v1449
    %v2045 = vpack.c.b16 %v1457, %v1450
    %v2046 = vpack.c.b16 %v1458, %v1451
    %v2047 = vpack.c.b16 %v1459, %v1452
    %v2048 = vpack.c.b16 %v1460, %v1453
    %v2049 = vpack.c.b16 %v1468, %v1461
    %v2050 = vpack.c.b16 %v1469, %v1462
    %v2051 = vpack.c.b16 %v1470, %v1463
    %v2052 = vpack.c.b16 %v1471, %v1464
    %v2053 = vpack.c.b16 %v1472, %v1465
    %v2054 = vpack.c.b16 %v1473, %v1466
    %v2055 = vpack.c.b16 %v1474, %v1467
    %v2056 = vpack.c.b16 %v1482, %v1475
    %v2057 = vpack.c.b16 %v1483, %v1476
    %v2058 = vpack.c.b16 %v1484, %v1477
    %v2059 = vpack.c.b16 %v1485, %v1478
    %v2060 = vpack.c.b16 %v1486, %v1479
    %v2061 = vpack.c.b16 %v1487, %v1480
    %v2062 = vpack.c.b16 %v1488, %v1481
    %v2063 = vpack.c.b16 %v1496, %v1489
    %v2064 = vpack.c.b16 %v1497, %v1490
    %v2065 = vpack.c.b16 %v1498, %v1491
    %v2066 = vpack.c.b16 %v1499, %v1492
    %v2067 = vpack.c.b16 %v1500, %v1493
    %v2068 = vpack.c.b16 %v1501, %v1494
    %v2069 = vpack.c.b16 %v1502, %v1495
    %v2070 = vpack.c.b16 %v1510, %v1503
    %v2071 = vpack.c.b16 %v1511, %v1504
    %v2072 = vpack.c.b16 %v1512, %v1505
    %v2073 = vpack.c.b16 %v1513, %v1506
    %v2074 = vpack.c.b16 %v1514, %v1507
    %v2075 = vpack.c.b16 %v1515, %v1508
    %v2076 = vpack.c.b16 %v1516, %v1509
    %v2077 = vpack.c.b16 %v1524, %v1517
    %v2078 = vpack.c.b16 %v1525, %v1518
    %v2079 = vpack.c.b16 %v1526, %v1519
    %v2080 = vpack.c.b16 %v1527, %v1520
    %v2081 = vpack.c.b16 %v1528, %v1521
    %v2082 = vpack.c.b16 %v1529, %v1522
    %v2083 = vpack.c.b16 %v1530, %v1523
    %v2084 = vpack.c.b16 %v1538, %v1531
    %v2085 = vpack.c.b16 %v1539, %v1532
    %v2086 = vpack.c.b16 %v1540, %v1533
    %v2087 = vpack.c.b16 %v1541, %v1534
    %v2088 = vpack.c.b16 %v1542, %v1535
    %v2089 = vpack.c.b16 %v1543, %v1536
    %v2090 = vpack.c.b16 %v1544, %v1537
    %v2091 = vpack.c.b16 %v1552, %v1545
    %v2092 = vpack.c.b16 %v1553, %v1546
    %v2093 = vpack.c.b16 %v1554, %v1547
    %v2094 = vpack.c.b16 %v1555, %v1548
    %v2095 = vpack.c.b16 %v1556, %v1549
    %v2096 = vpack.c.b16 %v1557, %v1550
    %v2097 = vpack.c.b16 %v1558, %v1551
    %v2098 = vpack.c.b16 %v1566, %v1559
    %v2099 = vpack.c.b16 %v1567, %v1560
    %v2100 = vpack.c.b16 %v1568, %v1561
    %v2101 = vpack.c.b16 %v1569, %v1562
    %v2102 = vpack.c.b16 %v1570, %v1563
    %v2103 = vpack.c.b16 %v1571, %v1564
    %v2104 = vpack.c.b16 %v1572, %v1565
    %v2105 = vpack.c.b16 %v1580, %v1573
    %v2106 = vpack.c.b16 %v1581, %v1574
    %v2107 = vpack.c.b16 %v1582, %v1575
    %v2108 = vpack.c.b16 %v1583, %v1576
    %v2109 = vpack.c.b16 %v1584, %v1577
    %v2110 = vpack.c.b16 %v1585, %v1578
    %v2111 = vpack.c.b16 %v1586, %v1579
    %v2112 = vpack.c.b16 %v1594, %v1587
    %v2113 = vpack.c.b16 %v1595, %v1588
    %v2114 = vpack.c.b16 %v1596, %v1589
    %v2115 = vpack.c.b16 %v1597, %v1590
    %v2116 = vpack.c.b16 %v1598, %v1591
    %v2117 = vpack.c.b16 %v1599, %v1592
    %v2118 = vpack.c.b16 %v1600, %v1593
    %v2119 = vpack.c.b16 %v1608, %v1601
    %v2120 = vpack.c.b16 %v1609, %v1602
    %v2121 = vpack.c.b16 %v1610, %v1603
    %v2122 = vpack.c.b16 %v1611, %v1604
    %v2123 = vpack.c.b16 %v1612, %v1605
    %v2124 = vpack.c.b16 %v1613, %v1606
    %v2125 = vpack.c.b16 %v1614, %v1607
    %v2126 = vpack.c.b16 %v1622, %v1615
    %v2127 = vpack.c.b16 %v1623, %v1616
    %v2128 = vpack.c.b16 %v1624, %v1617
    %v2129 = vpack.c.b16 %v1625, %v1618
    %v2130 = vpack.c.b16 %v1626, %v1619
    %v2131 = vpack.c.b16 %v1627, %v1620
    %v2132 = vpack.c.b16 %v1628, %v1621
    %v2133 = vpack.c.b16 %v1636, %v1629
    %v2134 = vpack.c.b16 %v1637, %v1630
    %v2135 = vpack.c.b16 %v1638, %v1631
    %v2136 = vpack.c.b16 %v1639, %v1632
    %v2137 = vpack.c.b16 %v1640, %v1633
    %v2138 = vpack.c.b16 %v1641, %v1634
    %v2139 = vpack.c.b16 %v1642, %v1635
    %v2140 = vpack.c.b16 %v1650, %v1643
    %v2141 = vpack.c.b16 %v1651, %v1644
    %v2142 = vpack.c.b16 %v1652, %v1645
    %v2143 = vpack.c.b16 %v1653, %v1646
    %v2144 = vpack.c.b16 %v1654, %v1647
    %v2145 = vpack.c.b16 %v1655, %v1648
    %v2146 = vpack.c.b16 %v1656, %v1649
    %v2147 = vpack.c.b16 %v1664, %v1657
    %v2148 = vpack.c.b16 %v1665, %v1658
    %v2149 = vpack.c.b16 %v1666, %v1659
    %v2150 = vpack.c.b16 %v1667, %v1660
    %v2151 = vpack.c.b16 %v1668, %v1661
    %v2152 = vpack.c.b16 %v1669, %v1662
    %v2153 = vpack.c.b16 %v1670, %v1663
    %v2154 = vpack.c.b16 %v1678, %v1671
    %v2155 = vpack.c.b16 %v1679, %v1672
    %v2156 = vpack.c.b16 %v1680, %v1673
    %v2157 = vpack.c.b16 %v1681, %v1674
    %v2158 = vpack.c.b16 %v1682, %v1675
    %v2159 = vpack.c.b16 %v1683, %v1676
    %v2160 = vpack.c.b16 %v1684, %v1677
    %v2161 = vpack.c.b16 %v1692, %v1685
    %v2162 = vpack.c.b16 %v1693, %v1686
    %v2163 = vpack.c.b16 %v1694, %v1687
    %v2164 = vpack.c.b16 %v1695, %v1688
    %v2165 = vpack.c.b16 %v1696, %v1689
    %v2166 = vpack.c.b16 %v1697, %v1690
    %v2167 = vpack.c.b16 %v1698, %v1691
    %v2168 = vpack.c.b16 %v1706, %v1699
    %v2169 = vpack.c.b16 %v1707, %v1700
    %v2170 = vpack.c.b16 %v1708, %v1701
    %v2171 = vpack.c.b16 %v1709, %v1702
    %v2172 = vpack.c.b16 %v1710, %v1703
    %v2173 = vpack.c.b16 %v1711, %v1704
    %v2174 = vpack.c.b16 %v1712, %v1705
    %v2175 = vpack.c.b16 %v1720, %v1713
    %v2176 = vpack.c.b16 %v1721, %v1714
    %v2177 = vpack.c.b16 %v1722, %v1715
    %v2178 = vpack.c.b16 %v1723, %v1716
    %v2179 = vpack.c.b16 %v1724, %v1717
    %v2180 = vpack.c.b16 %v1725, %v1718
    %v2181 = vpack.c.b16 %v1726, %v1719
    %v2182 = vpack.c.b16 %v1734, %v1727
    %v2183 = vpack.c.b16 %v1735, %v1728
    %v2184 = vpack.c.b16 %v1736, %v1729
    %v2185 = vpack.c.b16 %v1737, %v1730
    %v2186 = vpack.c.b16 %v1738, %v1731
    %v2187 = vpack.c.b16 %v1739, %v1732
    %v2188 = vpack.c.b16 %v1740, %v1733
    %v2189 = vpack.c.b16 %v1748, %v1741
    %v2190 = vpack.c.b16 %v1749, %v1742
    %v2191 = vpack.c.b16 %v1750, %v1743
    %v2192 = vpack.c.b16 %v1751, %v1744
    %v2193 = vpack.c.b16 %v1752, %v1745
    %v2194 = vpack.c.b16 %v1753, %v1746
    %v2195 = vpack.c.b16 %v1754, %v1747
    %v2196 = vpack.c.b16 %v1762, %v1755
    %v2197 = vpack.c.b16 %v1763, %v1756
    %v2198 = vpack.c.b16 %v1764, %v1757
    %v2199 = vpack.c.b16 %v1765, %v1758
    %v2200 = vpack.c.b16 %v1766, %v1759
    %v2201 = vpack.c.b16 %v1767, %v1760
    %v2202 = vpack.c.b16 %v1768, %v1761
    %v2203 = vpack.c.b16 %v1776, %v1769
    %v2204 = vpack.c.b16 %v1777, %v1770
    %v2205 = vpack.c.b16 %v1778, %v1771
    %v2206 = vpack.c.b16 %v1779, %v1772
    %v2207 = vpack.c.b16 %v1780, %v1773
    %v2208 = vpack.c.b16 %v1781, %v1774
    %v2209 = vpack.c.b16 %v1782, %v1775
    %v2210 = vpack.c.b16 %v1790, %v1783
    %v2211 = vpack.c.b16 %v1791, %v1784
    %v2212 = vpack.c.b16 %v1792, %v1785
    %v2213 = vpack.c.b16 %v1793, %v1786
    %v2214 = vpack.c.b16 %v1794, %v1787
    %v2215 = vpack.c.b16 %v1795, %v1788
    %v2216 = vpack.c.b16 %v1796, %v1789
    %v2217 = vpack.c.b16 %v1804, %v1797
    %v2218 = vpack.c.b16 %v1805, %v1798
    %v2219 = vpack.c.b16 %v1806, %v1799
    %v2220 = vpack.c.b16 %v1807, %v1800
    %v2221 = vpack.c.b16 %v1808, %v1801
    %v2222 = vpack.c.b16 %v1809, %v1802
    %v2223 = vpack.c.b16 %v1810, %v1803
    %v2224 = vpack.c.b16 %v1818, %v1811
    %v2225 = vpack.c.b16 %v1819, %v1812
    %v2226 = vpack.c.b16 %v1820, %v1813
    %v2227 = vpack.c.b16 %v1821, %v1814
    %v2228 = vpack.c.b16 %v1822, %v1815
    %v2229 = vpack.c.b16 %v1823, %v1816
    %v2230 = vpack.c.b16 %v1824, %v1817
    %v2231 = vpack.c.b16 %v1832, %v1825
    %v2232 = vpack.c.b16 %v1833, %v1826
    %v2233 = vpack.c.b16 %v1834, %v1827
    %v2234 = vpack.c.b16 %v1835, %v1828
    %v2235 = vpack.c.b16 %v1836, %v1829
    %v2236 = vpack.c.b16 %v1837, %v1830
    %v2237 = vpack.c.b16 %v1838, %v1831
    %v2238 = vpack.c.b16 %v1846, %v1839
    %v2239 = vpack.c.b16 %v1847, %v1840
    %v2240 = vpack.c.b16 %v1848, %v1841
    %v2241 = vpack.c.b16 %v1849, %v1842
    %v2242 = vpack.c.b16 %v1850, %v1843
    %v2243 = vpack.c.b16 %v1851, %v1844
    %v2244 = vpack.c.b16 %v1852, %v1845
    %2637 = vmatpush.bf16.msra.mxu0 %v1902
    %2638 = vmatpush.bf16.msra.mxu0 %v1895
    %2639 = vmatpush.bf16.msra.mxu0 %v1888
    %2640 = vmatpush.bf16.msra.mxu0 %v1881
    %2641 = vmatpush.bf16.msra.mxu0 %v1874
    %2642 = vmatpush.bf16.msra.mxu0 %v1867
    %2643 = vmatpush.bf16.msra.mxu0 %v1860
    %2644 = vmatpush.bf16.msra.mxu0 %v1853
    %2645 = vmatmul.bf16.gmra.mxu0 %v607
    %v2646 = vpop.f32.mrf.mxu0
    %v2647 = vadd.f32 %v582, %v2646
    %v2648 = vpop.f32.mrf.mxu0
    %2649 = vdwg.mxu0
    %2650 = vmatpush.bf16.msra.mxu0 %v1958
    %2651 = vmatpush.bf16.msra.mxu0 %v1951
    %2652 = vmatpush.bf16.msra.mxu0 %v1944
    %2653 = vmatpush.bf16.msra.mxu0 %v1937
    %2654 = vmatpush.bf16.msra.mxu0 %v1930
    %2655 = vmatpush.bf16.msra.mxu0 %v1923
    %2656 = vmatpush.bf16.msra.mxu0 %v1916
    %2657 = vmatpush.bf16.msra.mxu0 %v1909
    %2658 = vmatmul.bf16.gmra.mxu0 %v608
    %v2659 = vpop.f32.mrf.mxu0
    %v2660 = vadd.f32 %v2647, %v2659
    %v2661 = vpop.f32.mrf.mxu0
    %2662 = vdwg.mxu0
    %2663 = vmatpush.bf16.msra.mxu0 %v2014
    %2664 = vmatpush.bf16.msra.mxu0 %v2007
    %2665 = vmatpush.bf16.msra.mxu0 %v2000
    %2666 = vmatpush.bf16.msra.mxu0 %v1993
    %2667 = vmatpush.bf16.msra.mxu0 %v1986
    %2668 = vmatpush.bf16.msra.mxu0 %v1979
    %2669 = vmatpush.bf16.msra.mxu0 %v1972
    %2670 = vmatpush.bf16.msra.mxu0 %v1965
    %2671 = vmatmul.bf16.gmra.mxu0 %v609
    %v2672 = vpop.f32.mrf.mxu0
    %v2673 = vadd.f32 %v2660, %v2672
    %v2674 = vpop.f32.mrf.mxu0
    %2675 = vdwg.mxu0
    %2676 = vmatpush.bf16.msra.mxu0 %v2070
    %2677 = vmatpush.bf16.msra.mxu0 %v2063
    %2678 = vmatpush.bf16.msra.mxu0 %v2056
    %2679 = vmatpush.bf16.msra.mxu0 %v2049
    %2680 = vmatpush.bf16.msra.mxu0 %v2042
    %2681 = vmatpush.bf16.msra.mxu0 %v2035
    %2682 = vmatpush.bf16.msra.mxu0 %v2028
    %2683 = vmatpush.bf16.msra.mxu0 %v2021
    %2684 = vmatmul.bf16.gmra.mxu0 %v610
    %v2685 = vpop.f32.mrf.mxu0
    %v2686 = vadd.f32 %v2673, %v2685
    %v2687 = vpop.f32.mrf.mxu0
    %2688 = vdwg.mxu0
    %2689 = vmatpush.bf16.msra.mxu0 %v2126
    %2690 = vmatpush.bf16.msra.mxu0 %v2119
    %2691 = vmatpush.bf16.msra.mxu0 %v2112
    %2692 = vmatpush.bf16.msra.mxu0 %v2105
    %2693 = vmatpush.bf16.msra.mxu0 %v2098
    %2694 = vmatpush.bf16.msra.mxu0 %v2091
    %2695 = vmatpush.bf16.msra.mxu0 %v2084
    %2696 = vmatpush.bf16.msra.mxu0 %v2077
    %2697 = vmatmul.bf16.gmra.mxu0 %v611
    %v2698 = vpop.f32.mrf.mxu0
    %v2699 = vadd.f32 %v2686, %v2698
    %v2700 = vpop.f32.mrf.mxu0
    %2701 = vdwg.mxu0
    %2702 = vmatpush.bf16.msra.mxu0 %v2182
    %2703 = vmatpush.bf16.msra.mxu0 %v2175
    %2704 = vmatpush.bf16.msra.mxu0 %v2168
    %2705 = vmatpush.bf16.msra.mxu0 %v2161
    %2706 = vmatpush.bf16.msra.mxu0 %v2154
    %2707 = vmatpush.bf16.msra.mxu0 %v2147
    %2708 = vmatpush.bf16.msra.mxu0 %v2140
    %2709 = vmatpush.bf16.msra.mxu0 %v2133
    %2710 = vmatmul.bf16.gmra.mxu0 %v612
    %v2711 = vpop.f32.mrf.mxu0
    %v2712 = vadd.f32 %v2699, %v2711
    %v2713 = vpop.f32.mrf.mxu0
    %2714 = vdwg.mxu0
    %2715 = vmatpush.bf16.msra.mxu0 %v2238
    %2716 = vmatpush.bf16.msra.mxu0 %v2231
    %2717 = vmatpush.bf16.msra.mxu0 %v2224
    %2718 = vmatpush.bf16.msra.mxu0 %v2217
    %2719 = vmatpush.bf16.msra.mxu0 %v2210
    %2720 = vmatpush.bf16.msra.mxu0 %v2203
    %2721 = vmatpush.bf16.msra.mxu0 %v2196
    %2722 = vmatpush.bf16.msra.mxu0 %v2189
    %2723 = vmatmul.bf16.gmra.mxu0 %v613
    %v2724 = vpop.f32.mrf.mxu0
    %v2725 = vadd.f32 %v2712, %v2724
    %v2726 = vpop.f32.mrf.mxu0
    %2727 = vdwg.mxu0
    %2728 = vmatpush.bf16.msra.mxu0 %v1903
    %2729 = vmatpush.bf16.msra.mxu0 %v1896
    %2730 = vmatpush.bf16.msra.mxu0 %v1889
    %2731 = vmatpush.bf16.msra.mxu0 %v1882
    %2732 = vmatpush.bf16.msra.mxu0 %v1875
    %2733 = vmatpush.bf16.msra.mxu0 %v1868
    %2734 = vmatpush.bf16.msra.mxu0 %v1861
    %2735 = vmatpush.bf16.msra.mxu0 %v1854
    %2736 = vmatmul.bf16.gmra.mxu0 %v607
    %v2737 = vpop.f32.mrf.mxu0
    %v2738 = vadd.f32 %v583, %v2737
    %v2739 = vpop.f32.mrf.mxu0
    %2740 = vdwg.mxu0
    %2741 = vmatpush.bf16.msra.mxu0 %v1959
    %2742 = vmatpush.bf16.msra.mxu0 %v1952
    %2743 = vmatpush.bf16.msra.mxu0 %v1945
    %2744 = vmatpush.bf16.msra.mxu0 %v1938
    %2745 = vmatpush.bf16.msra.mxu0 %v1931
    %2746 = vmatpush.bf16.msra.mxu0 %v1924
    %2747 = vmatpush.bf16.msra.mxu0 %v1917
    %2748 = vmatpush.bf16.msra.mxu0 %v1910
    %2749 = vmatmul.bf16.gmra.mxu0 %v608
    %v2750 = vpop.f32.mrf.mxu0
    %v2751 = vadd.f32 %v2738, %v2750
    %v2752 = vpop.f32.mrf.mxu0
    %2753 = vdwg.mxu0
    %2754 = vmatpush.bf16.msra.mxu0 %v2015
    %2755 = vmatpush.bf16.msra.mxu0 %v2008
    %2756 = vmatpush.bf16.msra.mxu0 %v2001
    %2757 = vmatpush.bf16.msra.mxu0 %v1994
    %2758 = vmatpush.bf16.msra.mxu0 %v1987
    %2759 = vmatpush.bf16.msra.mxu0 %v1980
    %2760 = vmatpush.bf16.msra.mxu0 %v1973
    %2761 = vmatpush.bf16.msra.mxu0 %v1966
    %2762 = vmatmul.bf16.gmra.mxu0 %v609
    %v2763 = vpop.f32.mrf.mxu0
    %v2764 = vadd.f32 %v2751, %v2763
    %v2765 = vpop.f32.mrf.mxu0
    %2766 = vdwg.mxu0
    %2767 = vmatpush.bf16.msra.mxu0 %v2071
    %2768 = vmatpush.bf16.msra.mxu0 %v2064
    %2769 = vmatpush.bf16.msra.mxu0 %v2057
    %2770 = vmatpush.bf16.msra.mxu0 %v2050
    %2771 = vmatpush.bf16.msra.mxu0 %v2043
    %2772 = vmatpush.bf16.msra.mxu0 %v2036
    %2773 = vmatpush.bf16.msra.mxu0 %v2029
    %2774 = vmatpush.bf16.msra.mxu0 %v2022
    %2775 = vmatmul.bf16.gmra.mxu0 %v610
    %v2776 = vpop.f32.mrf.mxu0
    %v2777 = vadd.f32 %v2764, %v2776
    %v2778 = vpop.f32.mrf.mxu0
    %2779 = vdwg.mxu0
    %2780 = vmatpush.bf16.msra.mxu0 %v2127
    %2781 = vmatpush.bf16.msra.mxu0 %v2120
    %2782 = vmatpush.bf16.msra.mxu0 %v2113
    %2783 = vmatpush.bf16.msra.mxu0 %v2106
    %2784 = vmatpush.bf16.msra.mxu0 %v2099
    %2785 = vmatpush.bf16.msra.mxu0 %v2092
    %2786 = vmatpush.bf16.msra.mxu0 %v2085
    %2787 = vmatpush.bf16.msra.mxu0 %v2078
    %2788 = vmatmul.bf16.gmra.mxu0 %v611
    %v2789 = vpop.f32.mrf.mxu0
    %v2790 = vadd.f32 %v2777, %v2789
    %v2791 = vpop.f32.mrf.mxu0
    %2792 = vdwg.mxu0
    %2793 = vmatpush.bf16.msra.mxu0 %v2183
    %2794 = vmatpush.bf16.msra.mxu0 %v2176
    %2795 = vmatpush.bf16.msra.mxu0 %v2169
    %2796 = vmatpush.bf16.msra.mxu0 %v2162
    %2797 = vmatpush.bf16.msra.mxu0 %v2155
    %2798 = vmatpush.bf16.msra.mxu0 %v2148
    %2799 = vmatpush.bf16.msra.mxu0 %v2141
    %2800 = vmatpush.bf16.msra.mxu0 %v2134
    %2801 = vmatmul.bf16.gmra.mxu0 %v612
    %v2802 = vpop.f32.mrf.mxu0
    %v2803 = vadd.f32 %v2790, %v2802
    %v2804 = vpop.f32.mrf.mxu0
    %2805 = vdwg.mxu0
    %2806 = vmatpush.bf16.msra.mxu0 %v2239
    %2807 = vmatpush.bf16.msra.mxu0 %v2232
    %2808 = vmatpush.bf16.msra.mxu0 %v2225
    %2809 = vmatpush.bf16.msra.mxu0 %v2218
    %2810 = vmatpush.bf16.msra.mxu0 %v2211
    %2811 = vmatpush.bf16.msra.mxu0 %v2204
    %2812 = vmatpush.bf16.msra.mxu0 %v2197
    %2813 = vmatpush.bf16.msra.mxu0 %v2190
    %2814 = vmatmul.bf16.gmra.mxu0 %v613
    %v2815 = vpop.f32.mrf.mxu0
    %v2816 = vadd.f32 %v2803, %v2815
    %v2817 = vpop.f32.mrf.mxu0
    %2818 = vdwg.mxu0
    %2819 = vmatpush.bf16.msra.mxu0 %v1904
    %2820 = vmatpush.bf16.msra.mxu0 %v1897
    %2821 = vmatpush.bf16.msra.mxu0 %v1890
    %2822 = vmatpush.bf16.msra.mxu0 %v1883
    %2823 = vmatpush.bf16.msra.mxu0 %v1876
    %2824 = vmatpush.bf16.msra.mxu0 %v1869
    %2825 = vmatpush.bf16.msra.mxu0 %v1862
    %2826 = vmatpush.bf16.msra.mxu0 %v1855
    %2827 = vmatmul.bf16.gmra.mxu0 %v607
    %v2828 = vpop.f32.mrf.mxu0
    %v2829 = vadd.f32 %v584, %v2828
    %v2830 = vpop.f32.mrf.mxu0
    %2831 = vdwg.mxu0
    %2832 = vmatpush.bf16.msra.mxu0 %v1960
    %2833 = vmatpush.bf16.msra.mxu0 %v1953
    %2834 = vmatpush.bf16.msra.mxu0 %v1946
    %2835 = vmatpush.bf16.msra.mxu0 %v1939
    %2836 = vmatpush.bf16.msra.mxu0 %v1932
    %2837 = vmatpush.bf16.msra.mxu0 %v1925
    %2838 = vmatpush.bf16.msra.mxu0 %v1918
    %2839 = vmatpush.bf16.msra.mxu0 %v1911
    %2840 = vmatmul.bf16.gmra.mxu0 %v608
    %v2841 = vpop.f32.mrf.mxu0
    %v2842 = vadd.f32 %v2829, %v2841
    %v2843 = vpop.f32.mrf.mxu0
    %2844 = vdwg.mxu0
    %2845 = vmatpush.bf16.msra.mxu0 %v2016
    %2846 = vmatpush.bf16.msra.mxu0 %v2009
    %2847 = vmatpush.bf16.msra.mxu0 %v2002
    %2848 = vmatpush.bf16.msra.mxu0 %v1995
    %2849 = vmatpush.bf16.msra.mxu0 %v1988
    %2850 = vmatpush.bf16.msra.mxu0 %v1981
    %2851 = vmatpush.bf16.msra.mxu0 %v1974
    %2852 = vmatpush.bf16.msra.mxu0 %v1967
    %2853 = vmatmul.bf16.gmra.mxu0 %v609
    %v2854 = vpop.f32.mrf.mxu0
    %v2855 = vadd.f32 %v2842, %v2854
    %v2856 = vpop.f32.mrf.mxu0
    %2857 = vdwg.mxu0
    %2858 = vmatpush.bf16.msra.mxu0 %v2072
    %2859 = vmatpush.bf16.msra.mxu0 %v2065
    %2860 = vmatpush.bf16.msra.mxu0 %v2058
    %2861 = vmatpush.bf16.msra.mxu0 %v2051
    %2862 = vmatpush.bf16.msra.mxu0 %v2044
    %2863 = vmatpush.bf16.msra.mxu0 %v2037
    %2864 = vmatpush.bf16.msra.mxu0 %v2030
    %2865 = vmatpush.bf16.msra.mxu0 %v2023
    %2866 = vmatmul.bf16.gmra.mxu0 %v610
    %v2867 = vpop.f32.mrf.mxu0
    %v2868 = vadd.f32 %v2855, %v2867
    %v2869 = vpop.f32.mrf.mxu0
    %2870 = vdwg.mxu0
    %2871 = vmatpush.bf16.msra.mxu0 %v2128
    %2872 = vmatpush.bf16.msra.mxu0 %v2121
    %2873 = vmatpush.bf16.msra.mxu0 %v2114
    %2874 = vmatpush.bf16.msra.mxu0 %v2107
    %2875 = vmatpush.bf16.msra.mxu0 %v2100
    %2876 = vmatpush.bf16.msra.mxu0 %v2093
    %2877 = vmatpush.bf16.msra.mxu0 %v2086
    %2878 = vmatpush.bf16.msra.mxu0 %v2079
    %2879 = vmatmul.bf16.gmra.mxu0 %v611
    %v2880 = vpop.f32.mrf.mxu0
    %v2881 = vadd.f32 %v2868, %v2880
    %v2882 = vpop.f32.mrf.mxu0
    %2883 = vdwg.mxu0
    %2884 = vmatpush.bf16.msra.mxu0 %v2184
    %2885 = vmatpush.bf16.msra.mxu0 %v2177
    %2886 = vmatpush.bf16.msra.mxu0 %v2170
    %2887 = vmatpush.bf16.msra.mxu0 %v2163
    %2888 = vmatpush.bf16.msra.mxu0 %v2156
    %2889 = vmatpush.bf16.msra.mxu0 %v2149
    %2890 = vmatpush.bf16.msra.mxu0 %v2142
    %2891 = vmatpush.bf16.msra.mxu0 %v2135
    %2892 = vmatmul.bf16.gmra.mxu0 %v612
    %v2893 = vpop.f32.mrf.mxu0
    %v2894 = vadd.f32 %v2881, %v2893
    %v2895 = vpop.f32.mrf.mxu0
    %2896 = vdwg.mxu0
    %2897 = vmatpush.bf16.msra.mxu0 %v2240
    %2898 = vmatpush.bf16.msra.mxu0 %v2233
    %2899 = vmatpush.bf16.msra.mxu0 %v2226
    %2900 = vmatpush.bf16.msra.mxu0 %v2219
    %2901 = vmatpush.bf16.msra.mxu0 %v2212
    %2902 = vmatpush.bf16.msra.mxu0 %v2205
    %2903 = vmatpush.bf16.msra.mxu0 %v2198
    %2904 = vmatpush.bf16.msra.mxu0 %v2191
    %2905 = vmatmul.bf16.gmra.mxu0 %v613
    %v2906 = vpop.f32.mrf.mxu0
    %v2907 = vadd.f32 %v2894, %v2906
    %v2908 = vpop.f32.mrf.mxu0
    %2909 = vdwg.mxu0
    %2910 = vmatpush.bf16.msra.mxu0 %v1905
    %2911 = vmatpush.bf16.msra.mxu0 %v1898
    %2912 = vmatpush.bf16.msra.mxu0 %v1891
    %2913 = vmatpush.bf16.msra.mxu0 %v1884
    %2914 = vmatpush.bf16.msra.mxu0 %v1877
    %2915 = vmatpush.bf16.msra.mxu0 %v1870
    %2916 = vmatpush.bf16.msra.mxu0 %v1863
    %2917 = vmatpush.bf16.msra.mxu0 %v1856
    %2918 = vmatmul.bf16.gmra.mxu0 %v607
    %v2919 = vpop.f32.mrf.mxu0
    %v2920 = vadd.f32 %v585, %v2919
    %v2921 = vpop.f32.mrf.mxu0
    %2922 = vdwg.mxu0
    %2923 = vmatpush.bf16.msra.mxu0 %v1961
    %2924 = vmatpush.bf16.msra.mxu0 %v1954
    %2925 = vmatpush.bf16.msra.mxu0 %v1947
    %2926 = vmatpush.bf16.msra.mxu0 %v1940
    %2927 = vmatpush.bf16.msra.mxu0 %v1933
    %2928 = vmatpush.bf16.msra.mxu0 %v1926
    %2929 = vmatpush.bf16.msra.mxu0 %v1919
    %2930 = vmatpush.bf16.msra.mxu0 %v1912
    %2931 = vmatmul.bf16.gmra.mxu0 %v608
    %v2932 = vpop.f32.mrf.mxu0
    %v2933 = vadd.f32 %v2920, %v2932
    %v2934 = vpop.f32.mrf.mxu0
    %2935 = vdwg.mxu0
    %2936 = vmatpush.bf16.msra.mxu0 %v2017
    %2937 = vmatpush.bf16.msra.mxu0 %v2010
    %2938 = vmatpush.bf16.msra.mxu0 %v2003
    %2939 = vmatpush.bf16.msra.mxu0 %v1996
    %2940 = vmatpush.bf16.msra.mxu0 %v1989
    %2941 = vmatpush.bf16.msra.mxu0 %v1982
    %2942 = vmatpush.bf16.msra.mxu0 %v1975
    %2943 = vmatpush.bf16.msra.mxu0 %v1968
    %2944 = vmatmul.bf16.gmra.mxu0 %v609
    %v2945 = vpop.f32.mrf.mxu0
    %v2946 = vadd.f32 %v2933, %v2945
    %v2947 = vpop.f32.mrf.mxu0
    %2948 = vdwg.mxu0
    %2949 = vmatpush.bf16.msra.mxu0 %v2073
    %2950 = vmatpush.bf16.msra.mxu0 %v2066
    %2951 = vmatpush.bf16.msra.mxu0 %v2059
    %2952 = vmatpush.bf16.msra.mxu0 %v2052
    %2953 = vmatpush.bf16.msra.mxu0 %v2045
    %2954 = vmatpush.bf16.msra.mxu0 %v2038
    %2955 = vmatpush.bf16.msra.mxu0 %v2031
    %2956 = vmatpush.bf16.msra.mxu0 %v2024
    %2957 = vmatmul.bf16.gmra.mxu0 %v610
    %v2958 = vpop.f32.mrf.mxu0
    %v2959 = vadd.f32 %v2946, %v2958
    %v2960 = vpop.f32.mrf.mxu0
    %2961 = vdwg.mxu0
    %2962 = vmatpush.bf16.msra.mxu0 %v2129
    %2963 = vmatpush.bf16.msra.mxu0 %v2122
    %2964 = vmatpush.bf16.msra.mxu0 %v2115
    %2965 = vmatpush.bf16.msra.mxu0 %v2108
    %2966 = vmatpush.bf16.msra.mxu0 %v2101
    %2967 = vmatpush.bf16.msra.mxu0 %v2094
    %2968 = vmatpush.bf16.msra.mxu0 %v2087
    %2969 = vmatpush.bf16.msra.mxu0 %v2080
    %2970 = vmatmul.bf16.gmra.mxu0 %v611
    %v2971 = vpop.f32.mrf.mxu0
    %v2972 = vadd.f32 %v2959, %v2971
    %v2973 = vpop.f32.mrf.mxu0
    %2974 = vdwg.mxu0
    %2975 = vmatpush.bf16.msra.mxu0 %v2185
    %2976 = vmatpush.bf16.msra.mxu0 %v2178
    %2977 = vmatpush.bf16.msra.mxu0 %v2171
    %2978 = vmatpush.bf16.msra.mxu0 %v2164
    %2979 = vmatpush.bf16.msra.mxu0 %v2157
    %2980 = vmatpush.bf16.msra.mxu0 %v2150
    %2981 = vmatpush.bf16.msra.mxu0 %v2143
    %2982 = vmatpush.bf16.msra.mxu0 %v2136
    %2983 = vmatmul.bf16.gmra.mxu0 %v612
    %v2984 = vpop.f32.mrf.mxu0
    %v2985 = vadd.f32 %v2972, %v2984
    %v2986 = vpop.f32.mrf.mxu0
    %2987 = vdwg.mxu0
    %2988 = vmatpush.bf16.msra.mxu0 %v2241
    %2989 = vmatpush.bf16.msra.mxu0 %v2234
    %2990 = vmatpush.bf16.msra.mxu0 %v2227
    %2991 = vmatpush.bf16.msra.mxu0 %v2220
    %2992 = vmatpush.bf16.msra.mxu0 %v2213
    %2993 = vmatpush.bf16.msra.mxu0 %v2206
    %2994 = vmatpush.bf16.msra.mxu0 %v2199
    %2995 = vmatpush.bf16.msra.mxu0 %v2192
    %2996 = vmatmul.bf16.gmra.mxu0 %v613
    %v2997 = vpop.f32.mrf.mxu0
    %v2998 = vadd.f32 %v2985, %v2997
    %v2999 = vpop.f32.mrf.mxu0
    %3000 = vdwg.mxu0
    %3001 = vmatpush.bf16.msra.mxu0 %v1906
    %3002 = vmatpush.bf16.msra.mxu0 %v1899
    %3003 = vmatpush.bf16.msra.mxu0 %v1892
    %3004 = vmatpush.bf16.msra.mxu0 %v1885
    %3005 = vmatpush.bf16.msra.mxu0 %v1878
    %3006 = vmatpush.bf16.msra.mxu0 %v1871
    %3007 = vmatpush.bf16.msra.mxu0 %v1864
    %3008 = vmatpush.bf16.msra.mxu0 %v1857
    %3009 = vmatmul.bf16.gmra.mxu0 %v607
    %v3010 = vpop.f32.mrf.mxu0
    %v3011 = vadd.f32 %v586, %v3010
    %v3012 = vpop.f32.mrf.mxu0
    %3013 = vdwg.mxu0
    %3014 = vmatpush.bf16.msra.mxu0 %v1962
    %3015 = vmatpush.bf16.msra.mxu0 %v1955
    %3016 = vmatpush.bf16.msra.mxu0 %v1948
    %3017 = vmatpush.bf16.msra.mxu0 %v1941
    %3018 = vmatpush.bf16.msra.mxu0 %v1934
    %3019 = vmatpush.bf16.msra.mxu0 %v1927
    %3020 = vmatpush.bf16.msra.mxu0 %v1920
    %3021 = vmatpush.bf16.msra.mxu0 %v1913
    %3022 = vmatmul.bf16.gmra.mxu0 %v608
    %v3023 = vpop.f32.mrf.mxu0
    %v3024 = vadd.f32 %v3011, %v3023
    %v3025 = vpop.f32.mrf.mxu0
    %3026 = vdwg.mxu0
    %3027 = vmatpush.bf16.msra.mxu0 %v2018
    %3028 = vmatpush.bf16.msra.mxu0 %v2011
    %3029 = vmatpush.bf16.msra.mxu0 %v2004
    %3030 = vmatpush.bf16.msra.mxu0 %v1997
    %3031 = vmatpush.bf16.msra.mxu0 %v1990
    %3032 = vmatpush.bf16.msra.mxu0 %v1983
    %3033 = vmatpush.bf16.msra.mxu0 %v1976
    %3034 = vmatpush.bf16.msra.mxu0 %v1969
    %3035 = vmatmul.bf16.gmra.mxu0 %v609
    %v3036 = vpop.f32.mrf.mxu0
    %v3037 = vadd.f32 %v3024, %v3036
    %v3038 = vpop.f32.mrf.mxu0
    %3039 = vdwg.mxu0
    %3040 = vmatpush.bf16.msra.mxu0 %v2074
    %3041 = vmatpush.bf16.msra.mxu0 %v2067
    %3042 = vmatpush.bf16.msra.mxu0 %v2060
    %3043 = vmatpush.bf16.msra.mxu0 %v2053
    %3044 = vmatpush.bf16.msra.mxu0 %v2046
    %3045 = vmatpush.bf16.msra.mxu0 %v2039
    %3046 = vmatpush.bf16.msra.mxu0 %v2032
    %3047 = vmatpush.bf16.msra.mxu0 %v2025
    %3048 = vmatmul.bf16.gmra.mxu0 %v610
    %v3049 = vpop.f32.mrf.mxu0
    %v3050 = vadd.f32 %v3037, %v3049
    %v3051 = vpop.f32.mrf.mxu0
    %3052 = vdwg.mxu0
    %3053 = vmatpush.bf16.msra.mxu0 %v2130
    %3054 = vmatpush.bf16.msra.mxu0 %v2123
    %3055 = vmatpush.bf16.msra.mxu0 %v2116
    %3056 = vmatpush.bf16.msra.mxu0 %v2109
    %3057 = vmatpush.bf16.msra.mxu0 %v2102
    %3058 = vmatpush.bf16.msra.mxu0 %v2095
    %3059 = vmatpush.bf16.msra.mxu0 %v2088
    %3060 = vmatpush.bf16.msra.mxu0 %v2081
    %3061 = vmatmul.bf16.gmra.mxu0 %v611
    %v3062 = vpop.f32.mrf.mxu0
    %v3063 = vadd.f32 %v3050, %v3062
    %v3064 = vpop.f32.mrf.mxu0
    %3065 = vdwg.mxu0
    %3066 = vmatpush.bf16.msra.mxu0 %v2186
    %3067 = vmatpush.bf16.msra.mxu0 %v2179
    %3068 = vmatpush.bf16.msra.mxu0 %v2172
    %3069 = vmatpush.bf16.msra.mxu0 %v2165
    %3070 = vmatpush.bf16.msra.mxu0 %v2158
    %3071 = vmatpush.bf16.msra.mxu0 %v2151
    %3072 = vmatpush.bf16.msra.mxu0 %v2144
    %3073 = vmatpush.bf16.msra.mxu0 %v2137
    %3074 = vmatmul.bf16.gmra.mxu0 %v612
    %v3075 = vpop.f32.mrf.mxu0
    %v3076 = vadd.f32 %v3063, %v3075
    %v3077 = vpop.f32.mrf.mxu0
    %3078 = vdwg.mxu0
    %3079 = vmatpush.bf16.msra.mxu0 %v2242
    %3080 = vmatpush.bf16.msra.mxu0 %v2235
    %3081 = vmatpush.bf16.msra.mxu0 %v2228
    %3082 = vmatpush.bf16.msra.mxu0 %v2221
    %3083 = vmatpush.bf16.msra.mxu0 %v2214
    %3084 = vmatpush.bf16.msra.mxu0 %v2207
    %3085 = vmatpush.bf16.msra.mxu0 %v2200
    %3086 = vmatpush.bf16.msra.mxu0 %v2193
    %3087 = vmatmul.bf16.gmra.mxu0 %v613
    %v3088 = vpop.f32.mrf.mxu0
    %v3089 = vadd.f32 %v3076, %v3088
    %v3090 = vpop.f32.mrf.mxu0
    %3091 = vdwg.mxu0
    %3092 = vmatpush.bf16.msra.mxu0 %v1907
    %3093 = vmatpush.bf16.msra.mxu0 %v1900
    %3094 = vmatpush.bf16.msra.mxu0 %v1893
    %3095 = vmatpush.bf16.msra.mxu0 %v1886
    %3096 = vmatpush.bf16.msra.mxu0 %v1879
    %3097 = vmatpush.bf16.msra.mxu0 %v1872
    %3098 = vmatpush.bf16.msra.mxu0 %v1865
    %3099 = vmatpush.bf16.msra.mxu0 %v1858
    %3100 = vmatmul.bf16.gmra.mxu0 %v607
    %v3101 = vpop.f32.mrf.mxu0
    %v3102 = vadd.f32 %v587, %v3101
    %v3103 = vpop.f32.mrf.mxu0
    %3104 = vdwg.mxu0
    %3105 = vmatpush.bf16.msra.mxu0 %v1963
    %3106 = vmatpush.bf16.msra.mxu0 %v1956
    %3107 = vmatpush.bf16.msra.mxu0 %v1949
    %3108 = vmatpush.bf16.msra.mxu0 %v1942
    %3109 = vmatpush.bf16.msra.mxu0 %v1935
    %3110 = vmatpush.bf16.msra.mxu0 %v1928
    %3111 = vmatpush.bf16.msra.mxu0 %v1921
    %3112 = vmatpush.bf16.msra.mxu0 %v1914
    %3113 = vmatmul.bf16.gmra.mxu0 %v608
    %v3114 = vpop.f32.mrf.mxu0
    %v3115 = vadd.f32 %v3102, %v3114
    %v3116 = vpop.f32.mrf.mxu0
    %3117 = vdwg.mxu0
    %3118 = vmatpush.bf16.msra.mxu0 %v2019
    %3119 = vmatpush.bf16.msra.mxu0 %v2012
    %3120 = vmatpush.bf16.msra.mxu0 %v2005
    %3121 = vmatpush.bf16.msra.mxu0 %v1998
    %3122 = vmatpush.bf16.msra.mxu0 %v1991
    %3123 = vmatpush.bf16.msra.mxu0 %v1984
    %3124 = vmatpush.bf16.msra.mxu0 %v1977
    %3125 = vmatpush.bf16.msra.mxu0 %v1970
    %3126 = vmatmul.bf16.gmra.mxu0 %v609
    %v3127 = vpop.f32.mrf.mxu0
    %v3128 = vadd.f32 %v3115, %v3127
    %v3129 = vpop.f32.mrf.mxu0
    %3130 = vdwg.mxu0
    %3131 = vmatpush.bf16.msra.mxu0 %v2075
    %3132 = vmatpush.bf16.msra.mxu0 %v2068
    %3133 = vmatpush.bf16.msra.mxu0 %v2061
    %3134 = vmatpush.bf16.msra.mxu0 %v2054
    %3135 = vmatpush.bf16.msra.mxu0 %v2047
    %3136 = vmatpush.bf16.msra.mxu0 %v2040
    %3137 = vmatpush.bf16.msra.mxu0 %v2033
    %3138 = vmatpush.bf16.msra.mxu0 %v2026
    %3139 = vmatmul.bf16.gmra.mxu0 %v610
    %v3140 = vpop.f32.mrf.mxu0
    %v3141 = vadd.f32 %v3128, %v3140
    %v3142 = vpop.f32.mrf.mxu0
    %3143 = vdwg.mxu0
    %3144 = vmatpush.bf16.msra.mxu0 %v2131
    %3145 = vmatpush.bf16.msra.mxu0 %v2124
    %3146 = vmatpush.bf16.msra.mxu0 %v2117
    %3147 = vmatpush.bf16.msra.mxu0 %v2110
    %3148 = vmatpush.bf16.msra.mxu0 %v2103
    %3149 = vmatpush.bf16.msra.mxu0 %v2096
    %3150 = vmatpush.bf16.msra.mxu0 %v2089
    %3151 = vmatpush.bf16.msra.mxu0 %v2082
    %3152 = vmatmul.bf16.gmra.mxu0 %v611
    %v3153 = vpop.f32.mrf.mxu0
    %v3154 = vadd.f32 %v3141, %v3153
    %v3155 = vpop.f32.mrf.mxu0
    %3156 = vdwg.mxu0
    %3157 = vmatpush.bf16.msra.mxu0 %v2187
    %3158 = vmatpush.bf16.msra.mxu0 %v2180
    %3159 = vmatpush.bf16.msra.mxu0 %v2173
    %3160 = vmatpush.bf16.msra.mxu0 %v2166
    %3161 = vmatpush.bf16.msra.mxu0 %v2159
    %3162 = vmatpush.bf16.msra.mxu0 %v2152
    %3163 = vmatpush.bf16.msra.mxu0 %v2145
    %3164 = vmatpush.bf16.msra.mxu0 %v2138
    %3165 = vmatmul.bf16.gmra.mxu0 %v612
    %v3166 = vpop.f32.mrf.mxu0
    %v3167 = vadd.f32 %v3154, %v3166
    %v3168 = vpop.f32.mrf.mxu0
    %3169 = vdwg.mxu0
    %3170 = vmatpush.bf16.msra.mxu0 %v2243
    %3171 = vmatpush.bf16.msra.mxu0 %v2236
    %3172 = vmatpush.bf16.msra.mxu0 %v2229
    %3173 = vmatpush.bf16.msra.mxu0 %v2222
    %3174 = vmatpush.bf16.msra.mxu0 %v2215
    %3175 = vmatpush.bf16.msra.mxu0 %v2208
    %3176 = vmatpush.bf16.msra.mxu0 %v2201
    %3177 = vmatpush.bf16.msra.mxu0 %v2194
    %3178 = vmatmul.bf16.gmra.mxu0 %v613
    %v3179 = vpop.f32.mrf.mxu0
    %v3180 = vadd.f32 %v3167, %v3179
    %v3181 = vpop.f32.mrf.mxu0
    %3182 = vdwg.mxu0
    %3183 = vmatpush.bf16.msra.mxu0 %v1908
    %3184 = vmatpush.bf16.msra.mxu0 %v1901
    %3185 = vmatpush.bf16.msra.mxu0 %v1894
    %3186 = vmatpush.bf16.msra.mxu0 %v1887
    %3187 = vmatpush.bf16.msra.mxu0 %v1880
    %3188 = vmatpush.bf16.msra.mxu0 %v1873
    %3189 = vmatpush.bf16.msra.mxu0 %v1866
    %3190 = vmatpush.bf16.msra.mxu0 %v1859
    %3191 = vmatmul.bf16.gmra.mxu0 %v607
    %v3192 = vpop.f32.mrf.mxu0
    %v3193 = vadd.f32 %v588, %v3192
    %v3194 = vpop.f32.mrf.mxu0
    %3195 = vdwg.mxu0
    %3196 = vmatpush.bf16.msra.mxu0 %v1964
    %3197 = vmatpush.bf16.msra.mxu0 %v1957
    %3198 = vmatpush.bf16.msra.mxu0 %v1950
    %3199 = vmatpush.bf16.msra.mxu0 %v1943
    %3200 = vmatpush.bf16.msra.mxu0 %v1936
    %3201 = vmatpush.bf16.msra.mxu0 %v1929
    %3202 = vmatpush.bf16.msra.mxu0 %v1922
    %3203 = vmatpush.bf16.msra.mxu0 %v1915
    %3204 = vmatmul.bf16.gmra.mxu0 %v608
    %v3205 = vpop.f32.mrf.mxu0
    %v3206 = vadd.f32 %v3193, %v3205
    %v3207 = vpop.f32.mrf.mxu0
    %3208 = vdwg.mxu0
    %3209 = vmatpush.bf16.msra.mxu0 %v2020
    %3210 = vmatpush.bf16.msra.mxu0 %v2013
    %3211 = vmatpush.bf16.msra.mxu0 %v2006
    %3212 = vmatpush.bf16.msra.mxu0 %v1999
    %3213 = vmatpush.bf16.msra.mxu0 %v1992
    %3214 = vmatpush.bf16.msra.mxu0 %v1985
    %3215 = vmatpush.bf16.msra.mxu0 %v1978
    %3216 = vmatpush.bf16.msra.mxu0 %v1971
    %3217 = vmatmul.bf16.gmra.mxu0 %v609
    %v3218 = vpop.f32.mrf.mxu0
    %v3219 = vadd.f32 %v3206, %v3218
    %v3220 = vpop.f32.mrf.mxu0
    %3221 = vdwg.mxu0
    %3222 = vmatpush.bf16.msra.mxu0 %v2076
    %3223 = vmatpush.bf16.msra.mxu0 %v2069
    %3224 = vmatpush.bf16.msra.mxu0 %v2062
    %3225 = vmatpush.bf16.msra.mxu0 %v2055
    %3226 = vmatpush.bf16.msra.mxu0 %v2048
    %3227 = vmatpush.bf16.msra.mxu0 %v2041
    %3228 = vmatpush.bf16.msra.mxu0 %v2034
    %3229 = vmatpush.bf16.msra.mxu0 %v2027
    %3230 = vmatmul.bf16.gmra.mxu0 %v610
    %v3231 = vpop.f32.mrf.mxu0
    %v3232 = vadd.f32 %v3219, %v3231
    %v3233 = vpop.f32.mrf.mxu0
    %3234 = vdwg.mxu0
    %3235 = vmatpush.bf16.msra.mxu0 %v2132
    %3236 = vmatpush.bf16.msra.mxu0 %v2125
    %3237 = vmatpush.bf16.msra.mxu0 %v2118
    %3238 = vmatpush.bf16.msra.mxu0 %v2111
    %3239 = vmatpush.bf16.msra.mxu0 %v2104
    %3240 = vmatpush.bf16.msra.mxu0 %v2097
    %3241 = vmatpush.bf16.msra.mxu0 %v2090
    %3242 = vmatpush.bf16.msra.mxu0 %v2083
    %3243 = vmatmul.bf16.gmra.mxu0 %v611
    %v3244 = vpop.f32.mrf.mxu0
    %v3245 = vadd.f32 %v3232, %v3244
    %v3246 = vpop.f32.mrf.mxu0
    %3247 = vdwg.mxu0
    %3248 = vmatpush.bf16.msra.mxu0 %v2188
    %3249 = vmatpush.bf16.msra.mxu0 %v2181
    %3250 = vmatpush.bf16.msra.mxu0 %v2174
    %3251 = vmatpush.bf16.msra.mxu0 %v2167
    %3252 = vmatpush.bf16.msra.mxu0 %v2160
    %3253 = vmatpush.bf16.msra.mxu0 %v2153
    %3254 = vmatpush.bf16.msra.mxu0 %v2146
    %3255 = vmatpush.bf16.msra.mxu0 %v2139
    %3256 = vmatmul.bf16.gmra.mxu0 %v612
    %v3257 = vpop.f32.mrf.mxu0
    %v3258 = vadd.f32 %v3245, %v3257
    %v3259 = vpop.f32.mrf.mxu0
    %3260 = vdwg.mxu0
    %3261 = vmatpush.bf16.msra.mxu0 %v2244
    %3262 = vmatpush.bf16.msra.mxu0 %v2237
    %3263 = vmatpush.bf16.msra.mxu0 %v2230
    %3264 = vmatpush.bf16.msra.mxu0 %v2223
    %3265 = vmatpush.bf16.msra.mxu0 %v2216
    %3266 = vmatpush.bf16.msra.mxu0 %v2209
    %3267 = vmatpush.bf16.msra.mxu0 %v2202
    %3268 = vmatpush.bf16.msra.mxu0 %v2195
    %3269 = vmatmul.bf16.gmra.mxu0 %v613
    %v3270 = vpop.f32.mrf.mxu0
    %v3271 = vadd.f32 %v3258, %v3270
    %v3272 = vpop.f32.mrf.mxu0
    %3273 = vdwg.mxu0
    %v3274 = vmax.f32 %v2725, 0.0
    %v3275 = vmax.f32 %v2816, 0.0
    %v3276 = vmax.f32 %v2907, 0.0
    %v3277 = vmax.f32 %v2998, 0.0
    %v3278 = vmax.f32 %v3089, 0.0
    %v3279 = vmax.f32 %v3180, 0.0
    %v3280 = vmax.f32 %v3271, 0.0
    %v3281 = vpack.c.bf16 %v3275, %v3274
    %v3282 = vpack.c.bf16 %v3277, %v3276
    %v3283 = vpack.c.bf16 %v3279, %v3278
    %v3284 = vpack.c.bf16 %v3280, %v3280
    %3285 = vst [vmem:[#allocation2] sm:$0xff] %v3281
    %3286 = vst [vmem:[#allocation2 + $0x8] sm:$0xff] %v3282
    %3287 = vst [vmem:[#allocation2 + $0x10] sm:$0xff] %v3283
    %3288 = vst [vmem:[#allocation2 + $0x18] sm:$0xf] %v3284
    %v3289 = vld [vmem:[#allocation2] sm:$0xff]
    %v3290 = vld [vmem:[#allocation2 + $0x8] sm:$0xff]
    %v3291 = vld [vmem:[#allocation2 + $0x10] sm:$0xff]
    %v3292 = vld [vmem:[#allocation2 + $0x18] sm:$0xf]
    %v3293 = vld [vmem:[#allocation10] sm:$0xff]
    %v3294 = vld [vmem:[#allocation10 + $0x8] sm:$0xff]
    %v3295 = vld [vmem:[#allocation10 + $0x10] sm:$0xff]
    %v3296 = vld [vmem:[#allocation10 + $0x18] sm:$0xf]
    %v3297 = vld [vmem:[#allocation10 + $0x1c] sm:$0xff]
    %v3298 = vld [vmem:[#allocation10 + $0x24] sm:$0xff]
    %v3299 = vld [vmem:[#allocation10 + $0x2c] sm:$0xff]
    %v3300 = vld [vmem:[#allocation10 + $0x34] sm:$0xf]
    %v3301 = vld [vmem:[#allocation10 + $0x38] sm:$0xff]
    %v3302 = vld [vmem:[#allocation10 + $0x40] sm:$0xff]
    %v3303 = vld [vmem:[#allocation10 + $0x48] sm:$0xff]
    %v3304 = vld [vmem:[#allocation10 + $0x50] sm:$0xf]
    %v3305 = vld [vmem:[#allocation10 + $0x54] sm:$0xff]
    %v3306 = vld [vmem:[#allocation10 + $0x5c] sm:$0xff]
    %v3307 = vld [vmem:[#allocation10 + $0x64] sm:$0xff]
    %v3308 = vld [vmem:[#allocation10 + $0x6c] sm:$0xf]
    %v3309 = vld [vmem:[#allocation10 + $0x70] sm:$0xff]
    %v3310 = vld [vmem:[#allocation10 + $0x78] sm:$0xff]
    %v3311 = vld [vmem:[#allocation10 + $0x80] sm:$0xff]
    %v3312 = vld [vmem:[#allocation10 + $0x88] sm:$0xf]
    %v3313 = vld [vmem:[#allocation10 + $0x8c] sm:$0xff]
    %v3314 = vld [vmem:[#allocation10 + $0x94] sm:$0xff]
    %v3315 = vld [vmem:[#allocation10 + $0x9c] sm:$0xff]
    %v3316 = vld [vmem:[#allocation10 + $0xa4] sm:$0xf]
    %v3317 = vld [vmem:[#allocation10 + $0xa8] sm:$0xff]
    %v3318 = vld [vmem:[#allocation10 + $0xb0] sm:$0xff]
    %v3319 = vld [vmem:[#allocation10 + $0xb8] sm:$0xff]
    %v3320 = vld [vmem:[#allocation10 + $0xc0] sm:$0xf]
    %v3321 = vld [vmem:[#allocation10 + $0xc4] sm:$0xff]
    %v3322 = vld [vmem:[#allocation10 + $0xcc] sm:$0xff]
    %v3323 = vld [vmem:[#allocation10 + $0xd4] sm:$0xff]
    %v3324 = vld [vmem:[#allocation10 + $0xdc] sm:$0xf]
    %v3325 = vld [vmem:[#allocation10 + $0xe0] sm:$0xff]
    %v3326 = vld [vmem:[#allocation10 + $0xe8] sm:$0xff]
    %v3327 = vld [vmem:[#allocation10 + $0xf0] sm:$0xff]
    %v3328 = vld [vmem:[#allocation10 + $0xf8] sm:$0xf]
    %v3329 = vld [vmem:[#allocation10 + $0xfc] sm:$0xff]
    %v3330 = vld [vmem:[#allocation10 + $0x104] sm:$0xff]
    %v3331 = vld [vmem:[#allocation10 + $0x10c] sm:$0xff]
    %v3332 = vld [vmem:[#allocation10 + $0x114] sm:$0xf]
    %v3333 = vld [vmem:[#allocation10 + $0x118] sm:$0xff]
    %v3334 = vld [vmem:[#allocation10 + $0x120] sm:$0xff]
    %v3335 = vld [vmem:[#allocation10 + $0x128] sm:$0xff]
    %v3336 = vld [vmem:[#allocation10 + $0x130] sm:$0xf]
    %v3337 = vld [vmem:[#allocation10 + $0x134] sm:$0xff]
    %v3338 = vld [vmem:[#allocation10 + $0x13c] sm:$0xff]
    %v3339 = vld [vmem:[#allocation10 + $0x144] sm:$0xff]
    %v3340 = vld [vmem:[#allocation10 + $0x14c] sm:$0xf]
    %v3341 = vld [vmem:[#allocation10 + $0x150] sm:$0xff]
    %v3342 = vld [vmem:[#allocation10 + $0x158] sm:$0xff]
    %v3343 = vld [vmem:[#allocation10 + $0x160] sm:$0xff]
    %v3344 = vld [vmem:[#allocation10 + $0x168] sm:$0xf]
    %v3345 = vld [vmem:[#allocation10 + $0x16c] sm:$0xff]
    %v3346 = vld [vmem:[#allocation10 + $0x174] sm:$0xff]
    %v3347 = vld [vmem:[#allocation10 + $0x17c] sm:$0xff]
    %v3348 = vld [vmem:[#allocation10 + $0x184] sm:$0xf]
    %v3349 = vld [vmem:[#allocation10 + $0x188] sm:$0xff]
    %v3350 = vld [vmem:[#allocation10 + $0x190] sm:$0xff]
    %v3351 = vld [vmem:[#allocation10 + $0x198] sm:$0xff]
    %v3352 = vld [vmem:[#allocation10 + $0x1a0] sm:$0xf]
    %v3353 = vld [vmem:[#allocation10 + $0x1a4] sm:$0xff]
    %v3354 = vld [vmem:[#allocation10 + $0x1ac] sm:$0xff]
    %v3355 = vld [vmem:[#allocation10 + $0x1b4] sm:$0xff]
    %v3356 = vld [vmem:[#allocation10 + $0x1bc] sm:$0xf]
    %v3357 = vld [vmem:[#allocation10 + $0x1c0] sm:$0xff]
    %v3358 = vld [vmem:[#allocation10 + $0x1c8] sm:$0xff]
    %v3359 = vld [vmem:[#allocation10 + $0x1d0] sm:$0xff]
    %v3360 = vld [vmem:[#allocation10 + $0x1d8] sm:$0xf]
    %v3361 = vld [vmem:[#allocation10 + $0x1dc] sm:$0xff]
    %v3362 = vld [vmem:[#allocation10 + $0x1e4] sm:$0xff]
    %v3363 = vld [vmem:[#allocation10 + $0x1ec] sm:$0xff]
    %v3364 = vld [vmem:[#allocation10 + $0x1f4] sm:$0xf]
    %v3365 = vld [vmem:[#allocation10 + $0x1f8] sm:$0xff]
    %v3366 = vld [vmem:[#allocation10 + $0x200] sm:$0xff]
    %v3367 = vld [vmem:[#allocation10 + $0x208] sm:$0xff]
    %v3368 = vld [vmem:[#allocation10 + $0x210] sm:$0xf]
    %v3369 = vld [vmem:[#allocation10 + $0x214] sm:$0xff]
    %v3370 = vld [vmem:[#allocation10 + $0x21c] sm:$0xff]
    %v3371 = vld [vmem:[#allocation10 + $0x224] sm:$0xff]
    %v3372 = vld [vmem:[#allocation10 + $0x22c] sm:$0xf]
    %v3373 = vld [vmem:[#allocation10 + $0x230] sm:$0xff]
    %v3374 = vld [vmem:[#allocation10 + $0x238] sm:$0xff]
    %v3375 = vld [vmem:[#allocation10 + $0x240] sm:$0xff]
    %v3376 = vld [vmem:[#allocation10 + $0x248] sm:$0xf]
    %v3377 = vld [vmem:[#allocation10 + $0x24c] sm:$0xff]
    %v3378 = vld [vmem:[#allocation10 + $0x254] sm:$0xff]
    %v3379 = vld [vmem:[#allocation10 + $0x25c] sm:$0xff]
    %v3380 = vld [vmem:[#allocation10 + $0x264] sm:$0xf]
    %v3381 = vld [vmem:[#allocation10 + $0x268] sm:$0xff]
    %v3382 = vld [vmem:[#allocation10 + $0x270] sm:$0xff]
    %v3383 = vld [vmem:[#allocation10 + $0x278] sm:$0xff]
    %v3384 = vld [vmem:[#allocation10 + $0x280] sm:$0xf]
    %v3385 = vld [vmem:[#allocation10 + $0x284] sm:$0xff]
    %v3386 = vld [vmem:[#allocation10 + $0x28c] sm:$0xff]
    %v3387 = vld [vmem:[#allocation10 + $0x294] sm:$0xff]
    %v3388 = vld [vmem:[#allocation10 + $0x29c] sm:$0xf]
    %v3389 = vld [vmem:[#allocation10 + $0x2a0] sm:$0xff]
    %v3390 = vld [vmem:[#allocation10 + $0x2a8] sm:$0xff]
    %v3391 = vld [vmem:[#allocation10 + $0x2b0] sm:$0xff]
    %v3392 = vld [vmem:[#allocation10 + $0x2b8] sm:$0xf]
    %v3393 = vld [vmem:[#allocation10 + $0x2bc] sm:$0xff]
    %v3394 = vld [vmem:[#allocation10 + $0x2c4] sm:$0xff]
    %v3395 = vld [vmem:[#allocation10 + $0x2cc] sm:$0xff]
    %v3396 = vld [vmem:[#allocation10 + $0x2d4] sm:$0xf]
    %v3397 = vld [vmem:[#allocation10 + $0x2d8] sm:$0xff]
    %v3398 = vld [vmem:[#allocation10 + $0x2e0] sm:$0xff]
    %v3399 = vld [vmem:[#allocation10 + $0x2e8] sm:$0xff]
    %v3400 = vld [vmem:[#allocation10 + $0x2f0] sm:$0xf]
    %v3401 = vld [vmem:[#allocation10 + $0x2f4] sm:$0xff]
    %v3402 = vld [vmem:[#allocation10 + $0x2fc] sm:$0xff]
    %v3403 = vld [vmem:[#allocation10 + $0x304] sm:$0xff]
    %v3404 = vld [vmem:[#allocation10 + $0x30c] sm:$0xf]
    %v3405 = vld [vmem:[#allocation10 + $0x310] sm:$0xff]
    %v3406 = vld [vmem:[#allocation10 + $0x318] sm:$0xff]
    %v3407 = vld [vmem:[#allocation10 + $0x320] sm:$0xff]
    %v3408 = vld [vmem:[#allocation10 + $0x328] sm:$0xf]
    %v3409 = vld [vmem:[#allocation10 + $0x32c] sm:$0xff]
    %v3410 = vld [vmem:[#allocation10 + $0x334] sm:$0xff]
    %v3411 = vld [vmem:[#allocation10 + $0x33c] sm:$0xff]
    %v3412 = vld [vmem:[#allocation10 + $0x344] sm:$0xf]
    %v3413 = vld [vmem:[#allocation10 + $0x348] sm:$0xff]
    %v3414 = vld [vmem:[#allocation10 + $0x350] sm:$0xff]
    %v3415 = vld [vmem:[#allocation10 + $0x358] sm:$0xff]
    %v3416 = vld [vmem:[#allocation10 + $0x360] sm:$0xf]
    %v3417 = vld [vmem:[#allocation10 + $0x364] sm:$0xff]
    %v3418 = vld [vmem:[#allocation10 + $0x36c] sm:$0xff]
    %v3419 = vld [vmem:[#allocation10 + $0x374] sm:$0xff]
    %v3420 = vld [vmem:[#allocation10 + $0x37c] sm:$0xf]
    %v3421 = vld [vmem:[#allocation10 + $0x380] sm:$0xff]
    %v3422 = vld [vmem:[#allocation10 + $0x388] sm:$0xff]
    %v3423 = vld [vmem:[#allocation10 + $0x390] sm:$0xff]
    %v3424 = vld [vmem:[#allocation10 + $0x398] sm:$0xf]
    %v3425 = vld [vmem:[#allocation10 + $0x39c] sm:$0xff]
    %v3426 = vld [vmem:[#allocation10 + $0x3a4] sm:$0xff]
    %v3427 = vld [vmem:[#allocation10 + $0x3ac] sm:$0xff]
    %v3428 = vld [vmem:[#allocation10 + $0x3b4] sm:$0xf]
    %v3429 = vld [vmem:[#allocation10 + $0x3b8] sm:$0xff]
    %v3430 = vld [vmem:[#allocation10 + $0x3c0] sm:$0xff]
    %v3431 = vld [vmem:[#allocation10 + $0x3c8] sm:$0xff]
    %v3432 = vld [vmem:[#allocation10 + $0x3d0] sm:$0xf]
    %v3433 = vld [vmem:[#allocation10 + $0x3d4] sm:$0xff]
    %v3434 = vld [vmem:[#allocation10 + $0x3dc] sm:$0xff]
    %v3435 = vld [vmem:[#allocation10 + $0x3e4] sm:$0xff]
    %v3436 = vld [vmem:[#allocation10 + $0x3ec] sm:$0xf]
    %v3437 = vld [vmem:[#allocation10 + $0x3f0] sm:$0xff]
    %v3438 = vld [vmem:[#allocation10 + $0x3f8] sm:$0xff]
    %v3439 = vld [vmem:[#allocation10 + $0x400] sm:$0xff]
    %v3440 = vld [vmem:[#allocation10 + $0x408] sm:$0xf]
    %v3441 = vld [vmem:[#allocation10 + $0x40c] sm:$0xff]
    %v3442 = vld [vmem:[#allocation10 + $0x414] sm:$0xff]
    %v3443 = vld [vmem:[#allocation10 + $0x41c] sm:$0xff]
    %v3444 = vld [vmem:[#allocation10 + $0x424] sm:$0xf]
    %v3445 = vld [vmem:[#allocation10 + $0x428] sm:$0xff]
    %v3446 = vld [vmem:[#allocation10 + $0x430] sm:$0xff]
    %v3447 = vld [vmem:[#allocation10 + $0x438] sm:$0xff]
    %v3448 = vld [vmem:[#allocation10 + $0x440] sm:$0xf]
    %v3449 = vld [vmem:[#allocation10 + $0x444] sm:$0xff]
    %v3450 = vld [vmem:[#allocation10 + $0x44c] sm:$0xff]
    %v3451 = vld [vmem:[#allocation10 + $0x454] sm:$0xff]
    %v3452 = vld [vmem:[#allocation10 + $0x45c] sm:$0xf]
    %v3453 = vld [vmem:[#allocation10 + $0x460] sm:$0xff]
    %v3454 = vld [vmem:[#allocation10 + $0x468] sm:$0xff]
    %v3455 = vld [vmem:[#allocation10 + $0x470] sm:$0xff]
    %v3456 = vld [vmem:[#allocation10 + $0x478] sm:$0xf]
    %v3457 = vld [vmem:[#allocation10 + $0x47c] sm:$0xff]
    %v3458 = vld [vmem:[#allocation10 + $0x484] sm:$0xff]
    %v3459 = vld [vmem:[#allocation10 + $0x48c] sm:$0xff]
    %v3460 = vld [vmem:[#allocation10 + $0x494] sm:$0xf]
    %v3461 = vld [vmem:[#allocation10 + $0x498] sm:$0xff]
    %v3462 = vld [vmem:[#allocation10 + $0x4a0] sm:$0xff]
    %v3463 = vld [vmem:[#allocation10 + $0x4a8] sm:$0xff]
    %v3464 = vld [vmem:[#allocation10 + $0x4b0] sm:$0xf]
    %v3465 = vld [vmem:[#allocation10 + $0x4b4] sm:$0xff]
    %v3466 = vld [vmem:[#allocation10 + $0x4bc] sm:$0xff]
    %v3467 = vld [vmem:[#allocation10 + $0x4c4] sm:$0xff]
    %v3468 = vld [vmem:[#allocation10 + $0x4cc] sm:$0xf]
    %v3469 = vld [vmem:[#allocation10 + $0x4d0] sm:$0xff]
    %v3470 = vld [vmem:[#allocation10 + $0x4d8] sm:$0xff]
    %v3471 = vld [vmem:[#allocation10 + $0x4e0] sm:$0xff]
    %v3472 = vld [vmem:[#allocation10 + $0x4e8] sm:$0xf]
    %v3473 = vld [vmem:[#allocation10 + $0x4ec] sm:$0xff]
    %v3474 = vld [vmem:[#allocation10 + $0x4f4] sm:$0xff]
    %v3475 = vld [vmem:[#allocation10 + $0x4fc] sm:$0xff]
    %v3476 = vld [vmem:[#allocation10 + $0x504] sm:$0xf]
    %v3477 = vld [vmem:[#allocation10 + $0x508] sm:$0xff]
    %v3478 = vld [vmem:[#allocation10 + $0x510] sm:$0xff]
    %v3479 = vld [vmem:[#allocation10 + $0x518] sm:$0xff]
    %v3480 = vld [vmem:[#allocation10 + $0x520] sm:$0xf]
    %v3481 = vld [vmem:[#allocation10 + $0x524] sm:$0xff]
    %v3482 = vld [vmem:[#allocation10 + $0x52c] sm:$0xff]
    %v3483 = vld [vmem:[#allocation10 + $0x534] sm:$0xff]
    %v3484 = vld [vmem:[#allocation10 + $0x53c] sm:$0xf]
    %v3485 = vld [vmem:[#allocation10 + $0x540] sm:$0xff]
    %v3486 = vld [vmem:[#allocation10 + $0x548] sm:$0xff]
    %v3487 = vld [vmem:[#allocation10 + $0x550] sm:$0xff]
    %v3488 = vld [vmem:[#allocation10 + $0x558] sm:$0xf]
    %v3489 = vld [vmem:[#allocation10 + $0x55c] sm:$0xff]
    %v3490 = vld [vmem:[#allocation10 + $0x564] sm:$0xff]
    %v3491 = vld [vmem:[#allocation10 + $0x56c] sm:$0xff]
    %v3492 = vld [vmem:[#allocation10 + $0x574] sm:$0xf]
    %v3493 = vld [vmem:[#allocation10 + $0x578] sm:$0xff]
    %v3494 = vld [vmem:[#allocation10 + $0x580] sm:$0xff]
    %v3495 = vld [vmem:[#allocation10 + $0x588] sm:$0xff]
    %v3496 = vld [vmem:[#allocation10 + $0x590] sm:$0xf]
    %v3497 = vld [vmem:[#allocation10 + $0x594] sm:$0xff]
    %v3498 = vld [vmem:[#allocation10 + $0x59c] sm:$0xff]
    %v3499 = vld [vmem:[#allocation10 + $0x5a4] sm:$0xff]
    %v3500 = vld [vmem:[#allocation10 + $0x5ac] sm:$0xf]
    %v3501 = vld [vmem:[#allocation10 + $0x5b0] sm:$0xff]
    %v3502 = vld [vmem:[#allocation10 + $0x5b8] sm:$0xff]
    %v3503 = vld [vmem:[#allocation10 + $0x5c0] sm:$0xff]
    %v3504 = vld [vmem:[#allocation10 + $0x5c8] sm:$0xf]
    %v3505 = vld [vmem:[#allocation10 + $0x5cc] sm:$0xff]
    %v3506 = vld [vmem:[#allocation10 + $0x5d4] sm:$0xff]
    %v3507 = vld [vmem:[#allocation10 + $0x5dc] sm:$0xff]
    %v3508 = vld [vmem:[#allocation10 + $0x5e4] sm:$0xf]
    %v3509 = vld [vmem:[#allocation10 + $0x5e8] sm:$0xff]
    %v3510 = vld [vmem:[#allocation10 + $0x5f0] sm:$0xff]
    %v3511 = vld [vmem:[#allocation10 + $0x5f8] sm:$0xff]
    %v3512 = vld [vmem:[#allocation10 + $0x600] sm:$0xf]
    %v3513 = vld [vmem:[#allocation10 + $0x604] sm:$0xff]
    %v3514 = vld [vmem:[#allocation10 + $0x60c] sm:$0xff]
    %v3515 = vld [vmem:[#allocation10 + $0x614] sm:$0xff]
    %v3516 = vld [vmem:[#allocation10 + $0x61c] sm:$0xf]
    %v3517 = vld [vmem:[#allocation10 + $0x620] sm:$0xff]
    %v3518 = vld [vmem:[#allocation10 + $0x628] sm:$0xff]
    %v3519 = vld [vmem:[#allocation10 + $0x630] sm:$0xff]
    %v3520 = vld [vmem:[#allocation10 + $0x638] sm:$0xf]
    %v3521 = vld [vmem:[#allocation10 + $0x63c] sm:$0xff]
    %v3522 = vld [vmem:[#allocation10 + $0x644] sm:$0xff]
    %v3523 = vld [vmem:[#allocation10 + $0x64c] sm:$0xff]
    %v3524 = vld [vmem:[#allocation10 + $0x654] sm:$0xf]
    %v3525 = vld [vmem:[#allocation10 + $0x658] sm:$0xff]
    %v3526 = vld [vmem:[#allocation10 + $0x660] sm:$0xff]
    %v3527 = vld [vmem:[#allocation10 + $0x668] sm:$0xff]
    %v3528 = vld [vmem:[#allocation10 + $0x670] sm:$0xf]
    %v3529 = vld [vmem:[#allocation10 + $0x674] sm:$0xff]
    %v3530 = vld [vmem:[#allocation10 + $0x67c] sm:$0xff]
    %v3531 = vld [vmem:[#allocation10 + $0x684] sm:$0xff]
    %v3532 = vld [vmem:[#allocation10 + $0x68c] sm:$0xf]
    %v3533 = vld [vmem:[#allocation10 + $0x690] sm:$0xff]
    %v3534 = vld [vmem:[#allocation10 + $0x698] sm:$0xff]
    %v3535 = vld [vmem:[#allocation10 + $0x6a0] sm:$0xff]
    %v3536 = vld [vmem:[#allocation10 + $0x6a8] sm:$0xf]
    %v3537 = vld [vmem:[#allocation10 + $0x6ac] sm:$0xff]
    %v3538 = vld [vmem:[#allocation10 + $0x6b4] sm:$0xff]
    %v3539 = vld [vmem:[#allocation10 + $0x6bc] sm:$0xff]
    %v3540 = vld [vmem:[#allocation10 + $0x6c4] sm:$0xf]
    %v3541 = vld [vmem:[#allocation10 + $0x6c8] sm:$0xff]
    %v3542 = vld [vmem:[#allocation10 + $0x6d0] sm:$0xff]
    %v3543 = vld [vmem:[#allocation10 + $0x6d8] sm:$0xff]
    %v3544 = vld [vmem:[#allocation10 + $0x6e0] sm:$0xf]
    %v3545 = vld [vmem:[#allocation10 + $0x6e4] sm:$0xff]
    %v3546 = vld [vmem:[#allocation10 + $0x6ec] sm:$0xff]
    %v3547 = vld [vmem:[#allocation10 + $0x6f4] sm:$0xff]
    %v3548 = vld [vmem:[#allocation10 + $0x6fc] sm:$0xf]
    %v3549 = vld [vmem:[#allocation10 + $0x700] sm:$0xff]
    %v3550 = vld [vmem:[#allocation10 + $0x708] sm:$0xff]
    %v3551 = vld [vmem:[#allocation10 + $0x710] sm:$0xff]
    %v3552 = vld [vmem:[#allocation10 + $0x718] sm:$0xf]
    %v3553 = vld [vmem:[#allocation10 + $0x71c] sm:$0xff]
    %v3554 = vld [vmem:[#allocation10 + $0x724] sm:$0xff]
    %v3555 = vld [vmem:[#allocation10 + $0x72c] sm:$0xff]
    %v3556 = vld [vmem:[#allocation10 + $0x734] sm:$0xf]
    %v3557 = vld [vmem:[#allocation10 + $0x738] sm:$0xff]
    %v3558 = vld [vmem:[#allocation10 + $0x740] sm:$0xff]
    %v3559 = vld [vmem:[#allocation10 + $0x748] sm:$0xff]
    %v3560 = vld [vmem:[#allocation10 + $0x750] sm:$0xf]
    %v3561 = vld [vmem:[#allocation10 + $0x754] sm:$0xff]
    %v3562 = vld [vmem:[#allocation10 + $0x75c] sm:$0xff]
    %v3563 = vld [vmem:[#allocation10 + $0x764] sm:$0xff]
    %v3564 = vld [vmem:[#allocation10 + $0x76c] sm:$0xf]
    %v3565 = vld [vmem:[#allocation10 + $0x770] sm:$0xff]
    %v3566 = vld [vmem:[#allocation10 + $0x778] sm:$0xff]
    %v3567 = vld [vmem:[#allocation10 + $0x780] sm:$0xff]
    %v3568 = vld [vmem:[#allocation10 + $0x788] sm:$0xf]
    %v3569 = vld [vmem:[#allocation10 + $0x78c] sm:$0xff]
    %v3570 = vld [vmem:[#allocation10 + $0x794] sm:$0xff]
    %v3571 = vld [vmem:[#allocation10 + $0x79c] sm:$0xff]
    %v3572 = vld [vmem:[#allocation10 + $0x7a4] sm:$0xf]
    %v3573 = vld [vmem:[#allocation10 + $0x7a8] sm:$0xff]
    %v3574 = vld [vmem:[#allocation10 + $0x7b0] sm:$0xff]
    %v3575 = vld [vmem:[#allocation10 + $0x7b8] sm:$0xff]
    %v3576 = vld [vmem:[#allocation10 + $0x7c0] sm:$0xf]
    %v3577 = vld [vmem:[#allocation10 + $0x7c4] sm:$0xff]
    %v3578 = vld [vmem:[#allocation10 + $0x7cc] sm:$0xff]
    %v3579 = vld [vmem:[#allocation10 + $0x7d4] sm:$0xff]
    %v3580 = vld [vmem:[#allocation10 + $0x7dc] sm:$0xf]
    %v3581 = vld [vmem:[#allocation10 + $0x7e0] sm:$0xff]
    %v3582 = vld [vmem:[#allocation10 + $0x7e8] sm:$0xff]
    %v3583 = vld [vmem:[#allocation10 + $0x7f0] sm:$0xff]
    %v3584 = vld [vmem:[#allocation10 + $0x7f8] sm:$0xf]
    %v3585 = vld [vmem:[#allocation10 + $0x7fc] sm:$0xff]
    %v3586 = vld [vmem:[#allocation10 + $0x804] sm:$0xff]
    %v3587 = vld [vmem:[#allocation10 + $0x80c] sm:$0xff]
    %v3588 = vld [vmem:[#allocation10 + $0x814] sm:$0xf]
    %v3589 = vld [vmem:[#allocation10 + $0x818] sm:$0xff]
    %v3590 = vld [vmem:[#allocation10 + $0x820] sm:$0xff]
    %v3591 = vld [vmem:[#allocation10 + $0x828] sm:$0xff]
    %v3592 = vld [vmem:[#allocation10 + $0x830] sm:$0xf]
    %v3593 = vld [vmem:[#allocation10 + $0x834] sm:$0xff]
    %v3594 = vld [vmem:[#allocation10 + $0x83c] sm:$0xff]
    %v3595 = vld [vmem:[#allocation10 + $0x844] sm:$0xff]
    %v3596 = vld [vmem:[#allocation10 + $0x84c] sm:$0xf]
    %v3597 = vld [vmem:[#allocation10 + $0x850] sm:$0xff]
    %v3598 = vld [vmem:[#allocation10 + $0x858] sm:$0xff]
    %v3599 = vld [vmem:[#allocation10 + $0x860] sm:$0xff]
    %v3600 = vld [vmem:[#allocation10 + $0x868] sm:$0xf]
    %v3601 = vld [vmem:[#allocation10 + $0x86c] sm:$0xff]
    %v3602 = vld [vmem:[#allocation10 + $0x874] sm:$0xff]
    %v3603 = vld [vmem:[#allocation10 + $0x87c] sm:$0xff]
    %v3604 = vld [vmem:[#allocation10 + $0x884] sm:$0xf]
    %v3605 = vld [vmem:[#allocation10 + $0x888] sm:$0xff]
    %v3606 = vld [vmem:[#allocation10 + $0x890] sm:$0xff]
    %v3607 = vld [vmem:[#allocation10 + $0x898] sm:$0xff]
    %v3608 = vld [vmem:[#allocation10 + $0x8a0] sm:$0xf]
    %v3609 = vld [vmem:[#allocation10 + $0x8a4] sm:$0xff]
    %v3610 = vld [vmem:[#allocation10 + $0x8ac] sm:$0xff]
    %v3611 = vld [vmem:[#allocation10 + $0x8b4] sm:$0xff]
    %v3612 = vld [vmem:[#allocation10 + $0x8bc] sm:$0xf]
    %v3613 = vld [vmem:[#allocation10 + $0x8c0] sm:$0xff]
    %v3614 = vld [vmem:[#allocation10 + $0x8c8] sm:$0xff]
    %v3615 = vld [vmem:[#allocation10 + $0x8d0] sm:$0xff]
    %v3616 = vld [vmem:[#allocation10 + $0x8d8] sm:$0xf]
    %v3617 = vld [vmem:[#allocation10 + $0x8dc] sm:$0xff]
    %v3618 = vld [vmem:[#allocation10 + $0x8e4] sm:$0xff]
    %v3619 = vld [vmem:[#allocation10 + $0x8ec] sm:$0xff]
    %v3620 = vld [vmem:[#allocation10 + $0x8f4] sm:$0xf]
    %v3621 = vld [vmem:[#allocation10 + $0x8f8] sm:$0xff]
    %v3622 = vld [vmem:[#allocation10 + $0x900] sm:$0xff]
    %v3623 = vld [vmem:[#allocation10 + $0x908] sm:$0xff]
    %v3624 = vld [vmem:[#allocation10 + $0x910] sm:$0xf]
    %v3625 = vld [vmem:[#allocation10 + $0x914] sm:$0xff]
    %v3626 = vld [vmem:[#allocation10 + $0x91c] sm:$0xff]
    %v3627 = vld [vmem:[#allocation10 + $0x924] sm:$0xff]
    %v3628 = vld [vmem:[#allocation10 + $0x92c] sm:$0xf]
    %v3629 = vld [vmem:[#allocation10 + $0x930] sm:$0xff]
    %v3630 = vld [vmem:[#allocation10 + $0x938] sm:$0xff]
    %v3631 = vld [vmem:[#allocation10 + $0x940] sm:$0xff]
    %v3632 = vld [vmem:[#allocation10 + $0x948] sm:$0xf]
    %v3633 = vld [vmem:[#allocation10 + $0x94c] sm:$0xff]
    %v3634 = vld [vmem:[#allocation10 + $0x954] sm:$0xff]
    %v3635 = vld [vmem:[#allocation10 + $0x95c] sm:$0xff]
    %v3636 = vld [vmem:[#allocation10 + $0x964] sm:$0xf]
    %v3637 = vld [vmem:[#allocation10 + $0x968] sm:$0xff]
    %v3638 = vld [vmem:[#allocation10 + $0x970] sm:$0xff]
    %v3639 = vld [vmem:[#allocation10 + $0x978] sm:$0xff]
    %v3640 = vld [vmem:[#allocation10 + $0x980] sm:$0xf]
    %v3641 = vld [vmem:[#allocation10 + $0x984] sm:$0xff]
    %v3642 = vld [vmem:[#allocation10 + $0x98c] sm:$0xff]
    %v3643 = vld [vmem:[#allocation10 + $0x994] sm:$0xff]
    %v3644 = vld [vmem:[#allocation10 + $0x99c] sm:$0xf]
    %v3645 = vld [vmem:[#allocation10 + $0x9a0] sm:$0xff]
    %v3646 = vld [vmem:[#allocation10 + $0x9a8] sm:$0xff]
    %v3647 = vld [vmem:[#allocation10 + $0x9b0] sm:$0xff]
    %v3648 = vld [vmem:[#allocation10 + $0x9b8] sm:$0xf]
    %v3649 = vld [vmem:[#allocation10 + $0x9bc] sm:$0xff]
    %v3650 = vld [vmem:[#allocation10 + $0x9c4] sm:$0xff]
    %v3651 = vld [vmem:[#allocation10 + $0x9cc] sm:$0xff]
    %v3652 = vld [vmem:[#allocation10 + $0x9d4] sm:$0xf]
    %v3653 = vld [vmem:[#allocation10 + $0x9d8] sm:$0xff]
    %v3654 = vld [vmem:[#allocation10 + $0x9e0] sm:$0xff]
    %v3655 = vld [vmem:[#allocation10 + $0x9e8] sm:$0xff]
    %v3656 = vld [vmem:[#allocation10 + $0x9f0] sm:$0xf]
    %v3657 = vld [vmem:[#allocation10 + $0x9f4] sm:$0xff]
    %v3658 = vld [vmem:[#allocation10 + $0x9fc] sm:$0xff]
    %v3659 = vld [vmem:[#allocation10 + $0xa04] sm:$0xff]
    %v3660 = vld [vmem:[#allocation10 + $0xa0c] sm:$0xf]
    %v3661 = vld [vmem:[#allocation10 + $0xa10] sm:$0xff]
    %v3662 = vld [vmem:[#allocation10 + $0xa18] sm:$0xff]
    %v3663 = vld [vmem:[#allocation10 + $0xa20] sm:$0xff]
    %v3664 = vld [vmem:[#allocation10 + $0xa28] sm:$0xf]
    %v3665 = vld [vmem:[#allocation10 + $0xa2c] sm:$0xff]
    %v3666 = vld [vmem:[#allocation10 + $0xa34] sm:$0xff]
    %v3667 = vld [vmem:[#allocation10 + $0xa3c] sm:$0xff]
    %v3668 = vld [vmem:[#allocation10 + $0xa44] sm:$0xf]
    %v3669 = vld [vmem:[#allocation10 + $0xa48] sm:$0xff]
    %v3670 = vld [vmem:[#allocation10 + $0xa50] sm:$0xff]
    %v3671 = vld [vmem:[#allocation10 + $0xa58] sm:$0xff]
    %v3672 = vld [vmem:[#allocation10 + $0xa60] sm:$0xf]
    %v3673 = vld [vmem:[#allocation10 + $0xa64] sm:$0xff]
    %v3674 = vld [vmem:[#allocation10 + $0xa6c] sm:$0xff]
    %v3675 = vld [vmem:[#allocation10 + $0xa74] sm:$0xff]
    %v3676 = vld [vmem:[#allocation10 + $0xa7c] sm:$0xf]
    %v3677 = vld [vmem:[#allocation10 + $0xa80] sm:$0xff]
    %v3678 = vld [vmem:[#allocation10 + $0xa88] sm:$0xff]
    %v3679 = vld [vmem:[#allocation10 + $0xa90] sm:$0xff]
    %v3680 = vld [vmem:[#allocation10 + $0xa98] sm:$0xf]
    %v3681 = vld [vmem:[#allocation10 + $0xa9c] sm:$0xff]
    %v3682 = vld [vmem:[#allocation10 + $0xaa4] sm:$0xff]
    %v3683 = vld [vmem:[#allocation10 + $0xaac] sm:$0xff]
    %v3684 = vld [vmem:[#allocation10 + $0xab4] sm:$0xf]
    %v3685 = vld [vmem:[#allocation10 + $0xab8] sm:$0xff]
    %v3686 = vld [vmem:[#allocation10 + $0xac0] sm:$0xff]
    %v3687 = vld [vmem:[#allocation10 + $0xac8] sm:$0xff]
    %v3688 = vld [vmem:[#allocation10 + $0xad0] sm:$0xf]
    %v3689 = vld [vmem:[#allocation10 + $0xad4] sm:$0xff]
    %v3690 = vld [vmem:[#allocation10 + $0xadc] sm:$0xff]
    %v3691 = vld [vmem:[#allocation10 + $0xae4] sm:$0xff]
    %v3692 = vld [vmem:[#allocation10 + $0xaec] sm:$0xf]
    %v3693 = vld [vmem:[#allocation10 + $0xaf0] sm:$0xff]
    %v3694 = vld [vmem:[#allocation10 + $0xaf8] sm:$0xff]
    %v3695 = vld [vmem:[#allocation10 + $0xb00] sm:$0xff]
    %v3696 = vld [vmem:[#allocation10 + $0xb08] sm:$0xf]
    %v3697 = vld [vmem:[#allocation10 + $0xb0c] sm:$0xff]
    %v3698 = vld [vmem:[#allocation10 + $0xb14] sm:$0xff]
    %v3699 = vld [vmem:[#allocation10 + $0xb1c] sm:$0xff]
    %v3700 = vld [vmem:[#allocation10 + $0xb24] sm:$0xf]
    %v3701 = vld [vmem:[#allocation10 + $0xb28] sm:$0xff]
    %v3702 = vld [vmem:[#allocation10 + $0xb30] sm:$0xff]
    %v3703 = vld [vmem:[#allocation10 + $0xb38] sm:$0xff]
    %v3704 = vld [vmem:[#allocation10 + $0xb40] sm:$0xf]
    %v3705 = vld [vmem:[#allocation10 + $0xb44] sm:$0xff]
    %v3706 = vld [vmem:[#allocation10 + $0xb4c] sm:$0xff]
    %v3707 = vld [vmem:[#allocation10 + $0xb54] sm:$0xff]
    %v3708 = vld [vmem:[#allocation10 + $0xb5c] sm:$0xf]
    %v3709 = vld [vmem:[#allocation10 + $0xb60] sm:$0xff]
    %v3710 = vld [vmem:[#allocation10 + $0xb68] sm:$0xff]
    %v3711 = vld [vmem:[#allocation10 + $0xb70] sm:$0xff]
    %v3712 = vld [vmem:[#allocation10 + $0xb78] sm:$0xf]
    %v3713 = vld [vmem:[#allocation10 + $0xb7c] sm:$0xff]
    %v3714 = vld [vmem:[#allocation10 + $0xb84] sm:$0xff]
    %v3715 = vld [vmem:[#allocation10 + $0xb8c] sm:$0xff]
    %v3716 = vld [vmem:[#allocation10 + $0xb94] sm:$0xf]
    %v3717 = vld [vmem:[#allocation10 + $0xb98] sm:$0xff]
    %v3718 = vld [vmem:[#allocation10 + $0xba0] sm:$0xff]
    %v3719 = vld [vmem:[#allocation10 + $0xba8] sm:$0xff]
    %v3720 = vld [vmem:[#allocation10 + $0xbb0] sm:$0xf]
    %v3721 = vld [vmem:[#allocation10 + $0xbb4] sm:$0xff]
    %v3722 = vld [vmem:[#allocation10 + $0xbbc] sm:$0xff]
    %v3723 = vld [vmem:[#allocation10 + $0xbc4] sm:$0xff]
    %v3724 = vld [vmem:[#allocation10 + $0xbcc] sm:$0xf]
    %v3725 = vld [vmem:[#allocation10 + $0xbd0] sm:$0xff]
    %v3726 = vld [vmem:[#allocation10 + $0xbd8] sm:$0xff]
    %v3727 = vld [vmem:[#allocation10 + $0xbe0] sm:$0xff]
    %v3728 = vld [vmem:[#allocation10 + $0xbe8] sm:$0xf]
    %v3729 = vld [vmem:[#allocation10 + $0xbec] sm:$0xff]
    %v3730 = vld [vmem:[#allocation10 + $0xbf4] sm:$0xff]
    %v3731 = vld [vmem:[#allocation10 + $0xbfc] sm:$0xff]
    %v3732 = vld [vmem:[#allocation10 + $0xc04] sm:$0xf]
    %v3733 = vld [vmem:[#allocation10 + $0xc08] sm:$0xff]
    %v3734 = vld [vmem:[#allocation10 + $0xc10] sm:$0xff]
    %v3735 = vld [vmem:[#allocation10 + $0xc18] sm:$0xff]
    %v3736 = vld [vmem:[#allocation10 + $0xc20] sm:$0xf]
    %v3737 = vld [vmem:[#allocation10 + $0xc24] sm:$0xff]
    %v3738 = vld [vmem:[#allocation10 + $0xc2c] sm:$0xff]
    %v3739 = vld [vmem:[#allocation10 + $0xc34] sm:$0xff]
    %v3740 = vld [vmem:[#allocation10 + $0xc3c] sm:$0xf]
    %v3741 = vld [vmem:[#allocation12] sm:$0xff]
    %v3743 = vperm.slane %v3741, 0
    %v3744 = vperm.slane %v3741, 1
    %v3745 = vperm.slane %v3741, 2
    %v3746 = vperm.slane %v3741, 3
    %v3747 = vperm.slane %v3741, 4
    %v3748 = vperm.slane %v3741, 5
    %v3749 = vperm.slane %v3741, 6
    %v3761 = vunpack.c.l.b16 %v3289
    %v3762 = vunpack.c.h.b16 %v3289
    %v3763 = vunpack.c.l.b16 %v3290
    %v3764 = vunpack.c.h.b16 %v3290
    %v3765 = vunpack.c.l.b16 %v3291
    %v3766 = vunpack.c.h.b16 %v3291
    %v3767 = vunpack.c.l.b16 %v3292
    %v3768 = vpack.c.b16 %v3761, %v3761
    %v3769 = vpack.c.b16 %v3762, %v3762
    %v3770 = vpack.c.b16 %v3763, %v3763
    %v3771 = vpack.c.b16 %v3764, %v3764
    %v3772 = vpack.c.b16 %v3765, %v3765
    %v3773 = vpack.c.b16 %v3766, %v3766
    %v3774 = vpack.c.b16 %v3767, %v3767
    %v4230 = vunpack.c.l.b16 %v3293
    %v4231 = vunpack.c.h.b16 %v3293
    %v4232 = vunpack.c.l.b16 %v3294
    %v4233 = vunpack.c.h.b16 %v3294
    %v4234 = vunpack.c.l.b16 %v3295
    %v4235 = vunpack.c.h.b16 %v3295
    %v4236 = vunpack.c.l.b16 %v3296
    %v4237 = vunpack.c.l.b16 %v3297
    %v4238 = vunpack.c.h.b16 %v3297
    %v4239 = vunpack.c.l.b16 %v3298
    %v4240 = vunpack.c.h.b16 %v3298
    %v4241 = vunpack.c.l.b16 %v3299
    %v4242 = vunpack.c.h.b16 %v3299
    %v4243 = vunpack.c.l.b16 %v3300
    %v4244 = vunpack.c.l.b16 %v3301
    %v4245 = vunpack.c.h.b16 %v3301
    %v4246 = vunpack.c.l.b16 %v3302
    %v4247 = vunpack.c.h.b16 %v3302
    %v4248 = vunpack.c.l.b16 %v3303
    %v4249 = vunpack.c.h.b16 %v3303
    %v4250 = vunpack.c.l.b16 %v3304
    %v4251 = vunpack.c.l.b16 %v3305
    %v4252 = vunpack.c.h.b16 %v3305
    %v4253 = vunpack.c.l.b16 %v3306
    %v4254 = vunpack.c.h.b16 %v3306
    %v4255 = vunpack.c.l.b16 %v3307
    %v4256 = vunpack.c.h.b16 %v3307
    %v4257 = vunpack.c.l.b16 %v3308
    %v4258 = vunpack.c.l.b16 %v3309
    %v4259 = vunpack.c.h.b16 %v3309
    %v4260 = vunpack.c.l.b16 %v3310
    %v4261 = vunpack.c.h.b16 %v3310
    %v4262 = vunpack.c.l.b16 %v3311
    %v4263 = vunpack.c.h.b16 %v3311
    %v4264 = vunpack.c.l.b16 %v3312
    %v4265 = vunpack.c.l.b16 %v3313
    %v4266 = vunpack.c.h.b16 %v3313
    %v4267 = vunpack.c.l.b16 %v3314
    %v4268 = vunpack.c.h.b16 %v3314
    %v4269 = vunpack.c.l.b16 %v3315
    %v4270 = vunpack.c.h.b16 %v3315
    %v4271 = vunpack.c.l.b16 %v3316
    %v4272 = vunpack.c.l.b16 %v3317
    %v4273 = vunpack.c.h.b16 %v3317
    %v4274 = vunpack.c.l.b16 %v3318
    %v4275 = vunpack.c.h.b16 %v3318
    %v4276 = vunpack.c.l.b16 %v3319
    %v4277 = vunpack.c.h.b16 %v3319
    %v4278 = vunpack.c.l.b16 %v3320
    %v4279 = vunpack.c.l.b16 %v3321
    %v4280 = vunpack.c.h.b16 %v3321
    %v4281 = vunpack.c.l.b16 %v3322
    %v4282 = vunpack.c.h.b16 %v3322
    %v4283 = vunpack.c.l.b16 %v3323
    %v4284 = vunpack.c.h.b16 %v3323
    %v4285 = vunpack.c.l.b16 %v3324
    %v4286 = vunpack.c.l.b16 %v3325
    %v4287 = vunpack.c.h.b16 %v3325
    %v4288 = vunpack.c.l.b16 %v3326
    %v4289 = vunpack.c.h.b16 %v3326
    %v4290 = vunpack.c.l.b16 %v3327
    %v4291 = vunpack.c.h.b16 %v3327
    %v4292 = vunpack.c.l.b16 %v3328
    %v4293 = vunpack.c.l.b16 %v3329
    %v4294 = vunpack.c.h.b16 %v3329
    %v4295 = vunpack.c.l.b16 %v3330
    %v4296 = vunpack.c.h.b16 %v3330
    %v4297 = vunpack.c.l.b16 %v3331
    %v4298 = vunpack.c.h.b16 %v3331
    %v4299 = vunpack.c.l.b16 %v3332
    %v4300 = vunpack.c.l.b16 %v3333
    %v4301 = vunpack.c.h.b16 %v3333
    %v4302 = vunpack.c.l.b16 %v3334
    %v4303 = vunpack.c.h.b16 %v3334
    %v4304 = vunpack.c.l.b16 %v3335
    %v4305 = vunpack.c.h.b16 %v3335
    %v4306 = vunpack.c.l.b16 %v3336
    %v4307 = vunpack.c.l.b16 %v3337
    %v4308 = vunpack.c.h.b16 %v3337
    %v4309 = vunpack.c.l.b16 %v3338
    %v4310 = vunpack.c.h.b16 %v3338
    %v4311 = vunpack.c.l.b16 %v3339
    %v4312 = vunpack.c.h.b16 %v3339
    %v4313 = vunpack.c.l.b16 %v3340
    %v4314 = vunpack.c.l.b16 %v3341
    %v4315 = vunpack.c.h.b16 %v3341
    %v4316 = vunpack.c.l.b16 %v3342
    %v4317 = vunpack.c.h.b16 %v3342
    %v4318 = vunpack.c.l.b16 %v3343
    %v4319 = vunpack.c.h.b16 %v3343
    %v4320 = vunpack.c.l.b16 %v3344
    %v4321 = vunpack.c.l.b16 %v3345
    %v4322 = vunpack.c.h.b16 %v3345
    %v4323 = vunpack.c.l.b16 %v3346
    %v4324 = vunpack.c.h.b16 %v3346
    %v4325 = vunpack.c.l.b16 %v3347
    %v4326 = vunpack.c.h.b16 %v3347
    %v4327 = vunpack.c.l.b16 %v3348
    %v4328 = vunpack.c.l.b16 %v3349
    %v4329 = vunpack.c.h.b16 %v3349
    %v4330 = vunpack.c.l.b16 %v3350
    %v4331 = vunpack.c.h.b16 %v3350
    %v4332 = vunpack.c.l.b16 %v3351
    %v4333 = vunpack.c.h.b16 %v3351
    %v4334 = vunpack.c.l.b16 %v3352
    %v4335 = vunpack.c.l.b16 %v3353
    %v4336 = vunpack.c.h.b16 %v3353
    %v4337 = vunpack.c.l.b16 %v3354
    %v4338 = vunpack.c.h.b16 %v3354
    %v4339 = vunpack.c.l.b16 %v3355
    %v4340 = vunpack.c.h.b16 %v3355
    %v4341 = vunpack.c.l.b16 %v3356
    %v4342 = vunpack.c.l.b16 %v3357
    %v4343 = vunpack.c.h.b16 %v3357
    %v4344 = vunpack.c.l.b16 %v3358
    %v4345 = vunpack.c.h.b16 %v3358
    %v4346 = vunpack.c.l.b16 %v3359
    %v4347 = vunpack.c.h.b16 %v3359
    %v4348 = vunpack.c.l.b16 %v3360
    %v4349 = vunpack.c.l.b16 %v3361
    %v4350 = vunpack.c.h.b16 %v3361
    %v4351 = vunpack.c.l.b16 %v3362
    %v4352 = vunpack.c.h.b16 %v3362
    %v4353 = vunpack.c.l.b16 %v3363
    %v4354 = vunpack.c.h.b16 %v3363
    %v4355 = vunpack.c.l.b16 %v3364
    %v4356 = vunpack.c.l.b16 %v3365
    %v4357 = vunpack.c.h.b16 %v3365
    %v4358 = vunpack.c.l.b16 %v3366
    %v4359 = vunpack.c.h.b16 %v3366
    %v4360 = vunpack.c.l.b16 %v3367
    %v4361 = vunpack.c.h.b16 %v3367
    %v4362 = vunpack.c.l.b16 %v3368
    %v4363 = vunpack.c.l.b16 %v3369
    %v4364 = vunpack.c.h.b16 %v3369
    %v4365 = vunpack.c.l.b16 %v3370
    %v4366 = vunpack.c.h.b16 %v3370
    %v4367 = vunpack.c.l.b16 %v3371
    %v4368 = vunpack.c.h.b16 %v3371
    %v4369 = vunpack.c.l.b16 %v3372
    %v4370 = vunpack.c.l.b16 %v3373
    %v4371 = vunpack.c.h.b16 %v3373
    %v4372 = vunpack.c.l.b16 %v3374
    %v4373 = vunpack.c.h.b16 %v3374
    %v4374 = vunpack.c.l.b16 %v3375
    %v4375 = vunpack.c.h.b16 %v3375
    %v4376 = vunpack.c.l.b16 %v3376
    %v4377 = vunpack.c.l.b16 %v3377
    %v4378 = vunpack.c.h.b16 %v3377
    %v4379 = vunpack.c.l.b16 %v3378
    %v4380 = vunpack.c.h.b16 %v3378
    %v4381 = vunpack.c.l.b16 %v3379
    %v4382 = vunpack.c.h.b16 %v3379
    %v4383 = vunpack.c.l.b16 %v3380
    %v4384 = vunpack.c.l.b16 %v3381
    %v4385 = vunpack.c.h.b16 %v3381
    %v4386 = vunpack.c.l.b16 %v3382
    %v4387 = vunpack.c.h.b16 %v3382
    %v4388 = vunpack.c.l.b16 %v3383
    %v4389 = vunpack.c.h.b16 %v3383
    %v4390 = vunpack.c.l.b16 %v3384
    %v4391 = vunpack.c.l.b16 %v3385
    %v4392 = vunpack.c.h.b16 %v3385
    %v4393 = vunpack.c.l.b16 %v3386
    %v4394 = vunpack.c.h.b16 %v3386
    %v4395 = vunpack.c.l.b16 %v3387
    %v4396 = vunpack.c.h.b16 %v3387
    %v4397 = vunpack.c.l.b16 %v3388
    %v4398 = vunpack.c.l.b16 %v3389
    %v4399 = vunpack.c.h.b16 %v3389
    %v4400 = vunpack.c.l.b16 %v3390
    %v4401 = vunpack.c.h.b16 %v3390
    %v4402 = vunpack.c.l.b16 %v3391
    %v4403 = vunpack.c.h.b16 %v3391
    %v4404 = vunpack.c.l.b16 %v3392
    %v4405 = vunpack.c.l.b16 %v3393
    %v4406 = vunpack.c.h.b16 %v3393
    %v4407 = vunpack.c.l.b16 %v3394
    %v4408 = vunpack.c.h.b16 %v3394
    %v4409 = vunpack.c.l.b16 %v3395
    %v4410 = vunpack.c.h.b16 %v3395
    %v4411 = vunpack.c.l.b16 %v3396
    %v4412 = vunpack.c.l.b16 %v3397
    %v4413 = vunpack.c.h.b16 %v3397
    %v4414 = vunpack.c.l.b16 %v3398
    %v4415 = vunpack.c.h.b16 %v3398
    %v4416 = vunpack.c.l.b16 %v3399
    %v4417 = vunpack.c.h.b16 %v3399
    %v4418 = vunpack.c.l.b16 %v3400
    %v4419 = vunpack.c.l.b16 %v3401
    %v4420 = vunpack.c.h.b16 %v3401
    %v4421 = vunpack.c.l.b16 %v3402
    %v4422 = vunpack.c.h.b16 %v3402
    %v4423 = vunpack.c.l.b16 %v3403
    %v4424 = vunpack.c.h.b16 %v3403
    %v4425 = vunpack.c.l.b16 %v3404
    %v4426 = vunpack.c.l.b16 %v3405
    %v4427 = vunpack.c.h.b16 %v3405
    %v4428 = vunpack.c.l.b16 %v3406
    %v4429 = vunpack.c.h.b16 %v3406
    %v4430 = vunpack.c.l.b16 %v3407
    %v4431 = vunpack.c.h.b16 %v3407
    %v4432 = vunpack.c.l.b16 %v3408
    %v4433 = vunpack.c.l.b16 %v3409
    %v4434 = vunpack.c.h.b16 %v3409
    %v4435 = vunpack.c.l.b16 %v3410
    %v4436 = vunpack.c.h.b16 %v3410
    %v4437 = vunpack.c.l.b16 %v3411
    %v4438 = vunpack.c.h.b16 %v3411
    %v4439 = vunpack.c.l.b16 %v3412
    %v4440 = vunpack.c.l.b16 %v3413
    %v4441 = vunpack.c.h.b16 %v3413
    %v4442 = vunpack.c.l.b16 %v3414
    %v4443 = vunpack.c.h.b16 %v3414
    %v4444 = vunpack.c.l.b16 %v3415
    %v4445 = vunpack.c.h.b16 %v3415
    %v4446 = vunpack.c.l.b16 %v3416
    %v4447 = vunpack.c.l.b16 %v3417
    %v4448 = vunpack.c.h.b16 %v3417
    %v4449 = vunpack.c.l.b16 %v3418
    %v4450 = vunpack.c.h.b16 %v3418
    %v4451 = vunpack.c.l.b16 %v3419
    %v4452 = vunpack.c.h.b16 %v3419
    %v4453 = vunpack.c.l.b16 %v3420
    %v4454 = vunpack.c.l.b16 %v3421
    %v4455 = vunpack.c.h.b16 %v3421
    %v4456 = vunpack.c.l.b16 %v3422
    %v4457 = vunpack.c.h.b16 %v3422
    %v4458 = vunpack.c.l.b16 %v3423
    %v4459 = vunpack.c.h.b16 %v3423
    %v4460 = vunpack.c.l.b16 %v3424
    %v4461 = vunpack.c.l.b16 %v3425
    %v4462 = vunpack.c.h.b16 %v3425
    %v4463 = vunpack.c.l.b16 %v3426
    %v4464 = vunpack.c.h.b16 %v3426
    %v4465 = vunpack.c.l.b16 %v3427
    %v4466 = vunpack.c.h.b16 %v3427
    %v4467 = vunpack.c.l.b16 %v3428
    %v4468 = vunpack.c.l.b16 %v3429
    %v4469 = vunpack.c.h.b16 %v3429
    %v4470 = vunpack.c.l.b16 %v3430
    %v4471 = vunpack.c.h.b16 %v3430
    %v4472 = vunpack.c.l.b16 %v3431
    %v4473 = vunpack.c.h.b16 %v3431
    %v4474 = vunpack.c.l.b16 %v3432
    %v4475 = vunpack.c.l.b16 %v3433
    %v4476 = vunpack.c.h.b16 %v3433
    %v4477 = vunpack.c.l.b16 %v3434
    %v4478 = vunpack.c.h.b16 %v3434
    %v4479 = vunpack.c.l.b16 %v3435
    %v4480 = vunpack.c.h.b16 %v3435
    %v4481 = vunpack.c.l.b16 %v3436
    %v4482 = vunpack.c.l.b16 %v3437
    %v4483 = vunpack.c.h.b16 %v3437
    %v4484 = vunpack.c.l.b16 %v3438
    %v4485 = vunpack.c.h.b16 %v3438
    %v4486 = vunpack.c.l.b16 %v3439
    %v4487 = vunpack.c.h.b16 %v3439
    %v4488 = vunpack.c.l.b16 %v3440
    %v4489 = vunpack.c.l.b16 %v3441
    %v4490 = vunpack.c.h.b16 %v3441
    %v4491 = vunpack.c.l.b16 %v3442
    %v4492 = vunpack.c.h.b16 %v3442
    %v4493 = vunpack.c.l.b16 %v3443
    %v4494 = vunpack.c.h.b16 %v3443
    %v4495 = vunpack.c.l.b16 %v3444
    %v4496 = vunpack.c.l.b16 %v3445
    %v4497 = vunpack.c.h.b16 %v3445
    %v4498 = vunpack.c.l.b16 %v3446
    %v4499 = vunpack.c.h.b16 %v3446
    %v4500 = vunpack.c.l.b16 %v3447
    %v4501 = vunpack.c.h.b16 %v3447
    %v4502 = vunpack.c.l.b16 %v3448
    %v4503 = vunpack.c.l.b16 %v3449
    %v4504 = vunpack.c.h.b16 %v3449
    %v4505 = vunpack.c.l.b16 %v3450
    %v4506 = vunpack.c.h.b16 %v3450
    %v4507 = vunpack.c.l.b16 %v3451
    %v4508 = vunpack.c.h.b16 %v3451
    %v4509 = vunpack.c.l.b16 %v3452
    %v4510 = vunpack.c.l.b16 %v3453
    %v4511 = vunpack.c.h.b16 %v3453
    %v4512 = vunpack.c.l.b16 %v3454
    %v4513 = vunpack.c.h.b16 %v3454
    %v4514 = vunpack.c.l.b16 %v3455
    %v4515 = vunpack.c.h.b16 %v3455
    %v4516 = vunpack.c.l.b16 %v3456
    %v4517 = vunpack.c.l.b16 %v3457
    %v4518 = vunpack.c.h.b16 %v3457
    %v4519 = vunpack.c.l.b16 %v3458
    %v4520 = vunpack.c.h.b16 %v3458
    %v4521 = vunpack.c.l.b16 %v3459
    %v4522 = vunpack.c.h.b16 %v3459
    %v4523 = vunpack.c.l.b16 %v3460
    %v4524 = vunpack.c.l.b16 %v3461
    %v4525 = vunpack.c.h.b16 %v3461
    %v4526 = vunpack.c.l.b16 %v3462
    %v4527 = vunpack.c.h.b16 %v3462
    %v4528 = vunpack.c.l.b16 %v3463
    %v4529 = vunpack.c.h.b16 %v3463
    %v4530 = vunpack.c.l.b16 %v3464
    %v4531 = vunpack.c.l.b16 %v3465
    %v4532 = vunpack.c.h.b16 %v3465
    %v4533 = vunpack.c.l.b16 %v3466
    %v4534 = vunpack.c.h.b16 %v3466
    %v4535 = vunpack.c.l.b16 %v3467
    %v4536 = vunpack.c.h.b16 %v3467
    %v4537 = vunpack.c.l.b16 %v3468
    %v4538 = vunpack.c.l.b16 %v3469
    %v4539 = vunpack.c.h.b16 %v3469
    %v4540 = vunpack.c.l.b16 %v3470
    %v4541 = vunpack.c.h.b16 %v3470
    %v4542 = vunpack.c.l.b16 %v3471
    %v4543 = vunpack.c.h.b16 %v3471
    %v4544 = vunpack.c.l.b16 %v3472
    %v4545 = vunpack.c.l.b16 %v3473
    %v4546 = vunpack.c.h.b16 %v3473
    %v4547 = vunpack.c.l.b16 %v3474
    %v4548 = vunpack.c.h.b16 %v3474
    %v4549 = vunpack.c.l.b16 %v3475
    %v4550 = vunpack.c.h.b16 %v3475
    %v4551 = vunpack.c.l.b16 %v3476
    %v4552 = vunpack.c.l.b16 %v3477
    %v4553 = vunpack.c.h.b16 %v3477
    %v4554 = vunpack.c.l.b16 %v3478
    %v4555 = vunpack.c.h.b16 %v3478
    %v4556 = vunpack.c.l.b16 %v3479
    %v4557 = vunpack.c.h.b16 %v3479
    %v4558 = vunpack.c.l.b16 %v3480
    %v4559 = vunpack.c.l.b16 %v3481
    %v4560 = vunpack.c.h.b16 %v3481
    %v4561 = vunpack.c.l.b16 %v3482
    %v4562 = vunpack.c.h.b16 %v3482
    %v4563 = vunpack.c.l.b16 %v3483
    %v4564 = vunpack.c.h.b16 %v3483
    %v4565 = vunpack.c.l.b16 %v3484
    %v4566 = vunpack.c.l.b16 %v3485
    %v4567 = vunpack.c.h.b16 %v3485
    %v4568 = vunpack.c.l.b16 %v3486
    %v4569 = vunpack.c.h.b16 %v3486
    %v4570 = vunpack.c.l.b16 %v3487
    %v4571 = vunpack.c.h.b16 %v3487
    %v4572 = vunpack.c.l.b16 %v3488
    %v4573 = vunpack.c.l.b16 %v3489
    %v4574 = vunpack.c.h.b16 %v3489
    %v4575 = vunpack.c.l.b16 %v3490
    %v4576 = vunpack.c.h.b16 %v3490
    %v4577 = vunpack.c.l.b16 %v3491
    %v4578 = vunpack.c.h.b16 %v3491
    %v4579 = vunpack.c.l.b16 %v3492
    %v4580 = vunpack.c.l.b16 %v3493
    %v4581 = vunpack.c.h.b16 %v3493
    %v4582 = vunpack.c.l.b16 %v3494
    %v4583 = vunpack.c.h.b16 %v3494
    %v4584 = vunpack.c.l.b16 %v3495
    %v4585 = vunpack.c.h.b16 %v3495
    %v4586 = vunpack.c.l.b16 %v3496
    %v4587 = vunpack.c.l.b16 %v3497
    %v4588 = vunpack.c.h.b16 %v3497
    %v4589 = vunpack.c.l.b16 %v3498
    %v4590 = vunpack.c.h.b16 %v3498
    %v4591 = vunpack.c.l.b16 %v3499
    %v4592 = vunpack.c.h.b16 %v3499
    %v4593 = vunpack.c.l.b16 %v3500
    %v4594 = vunpack.c.l.b16 %v3501
    %v4595 = vunpack.c.h.b16 %v3501
    %v4596 = vunpack.c.l.b16 %v3502
    %v4597 = vunpack.c.h.b16 %v3502
    %v4598 = vunpack.c.l.b16 %v3503
    %v4599 = vunpack.c.h.b16 %v3503
    %v4600 = vunpack.c.l.b16 %v3504
    %v4601 = vunpack.c.l.b16 %v3505
    %v4602 = vunpack.c.h.b16 %v3505
    %v4603 = vunpack.c.l.b16 %v3506
    %v4604 = vunpack.c.h.b16 %v3506
    %v4605 = vunpack.c.l.b16 %v3507
    %v4606 = vunpack.c.h.b16 %v3507
    %v4607 = vunpack.c.l.b16 %v3508
    %v4608 = vunpack.c.l.b16 %v3509
    %v4609 = vunpack.c.h.b16 %v3509
    %v4610 = vunpack.c.l.b16 %v3510
    %v4611 = vunpack.c.h.b16 %v3510
    %v4612 = vunpack.c.l.b16 %v3511
    %v4613 = vunpack.c.h.b16 %v3511
    %v4614 = vunpack.c.l.b16 %v3512
    %v4615 = vunpack.c.l.b16 %v3513
    %v4616 = vunpack.c.h.b16 %v3513
    %v4617 = vunpack.c.l.b16 %v3514
    %v4618 = vunpack.c.h.b16 %v3514
    %v4619 = vunpack.c.l.b16 %v3515
    %v4620 = vunpack.c.h.b16 %v3515
    %v4621 = vunpack.c.l.b16 %v3516
    %v4622 = vunpack.c.l.b16 %v3517
    %v4623 = vunpack.c.h.b16 %v3517
    %v4624 = vunpack.c.l.b16 %v3518
    %v4625 = vunpack.c.h.b16 %v3518
    %v4626 = vunpack.c.l.b16 %v3519
    %v4627 = vunpack.c.h.b16 %v3519
    %v4628 = vunpack.c.l.b16 %v3520
    %v4629 = vunpack.c.l.b16 %v3521
    %v4630 = vunpack.c.h.b16 %v3521
    %v4631 = vunpack.c.l.b16 %v3522
    %v4632 = vunpack.c.h.b16 %v3522
    %v4633 = vunpack.c.l.b16 %v3523
    %v4634 = vunpack.c.h.b16 %v3523
    %v4635 = vunpack.c.l.b16 %v3524
    %v4636 = vunpack.c.l.b16 %v3525
    %v4637 = vunpack.c.h.b16 %v3525
    %v4638 = vunpack.c.l.b16 %v3526
    %v4639 = vunpack.c.h.b16 %v3526
    %v4640 = vunpack.c.l.b16 %v3527
    %v4641 = vunpack.c.h.b16 %v3527
    %v4642 = vunpack.c.l.b16 %v3528
    %v4643 = vunpack.c.l.b16 %v3529
    %v4644 = vunpack.c.h.b16 %v3529
    %v4645 = vunpack.c.l.b16 %v3530
    %v4646 = vunpack.c.h.b16 %v3530
    %v4647 = vunpack.c.l.b16 %v3531
    %v4648 = vunpack.c.h.b16 %v3531
    %v4649 = vunpack.c.l.b16 %v3532
    %v4650 = vunpack.c.l.b16 %v3533
    %v4651 = vunpack.c.h.b16 %v3533
    %v4652 = vunpack.c.l.b16 %v3534
    %v4653 = vunpack.c.h.b16 %v3534
    %v4654 = vunpack.c.l.b16 %v3535
    %v4655 = vunpack.c.h.b16 %v3535
    %v4656 = vunpack.c.l.b16 %v3536
    %v4657 = vunpack.c.l.b16 %v3537
    %v4658 = vunpack.c.h.b16 %v3537
    %v4659 = vunpack.c.l.b16 %v3538
    %v4660 = vunpack.c.h.b16 %v3538
    %v4661 = vunpack.c.l.b16 %v3539
    %v4662 = vunpack.c.h.b16 %v3539
    %v4663 = vunpack.c.l.b16 %v3540
    %v4664 = vunpack.c.l.b16 %v3541
    %v4665 = vunpack.c.h.b16 %v3541
    %v4666 = vunpack.c.l.b16 %v3542
    %v4667 = vunpack.c.h.b16 %v3542
    %v4668 = vunpack.c.l.b16 %v3543
    %v4669 = vunpack.c.h.b16 %v3543
    %v4670 = vunpack.c.l.b16 %v3544
    %v4671 = vunpack.c.l.b16 %v3545
    %v4672 = vunpack.c.h.b16 %v3545
    %v4673 = vunpack.c.l.b16 %v3546
    %v4674 = vunpack.c.h.b16 %v3546
    %v4675 = vunpack.c.l.b16 %v3547
    %v4676 = vunpack.c.h.b16 %v3547
    %v4677 = vunpack.c.l.b16 %v3548
    %v4678 = vunpack.c.l.b16 %v3549
    %v4679 = vunpack.c.h.b16 %v3549
    %v4680 = vunpack.c.l.b16 %v3550
    %v4681 = vunpack.c.h.b16 %v3550
    %v4682 = vunpack.c.l.b16 %v3551
    %v4683 = vunpack.c.h.b16 %v3551
    %v4684 = vunpack.c.l.b16 %v3552
    %v4685 = vunpack.c.l.b16 %v3553
    %v4686 = vunpack.c.h.b16 %v3553
    %v4687 = vunpack.c.l.b16 %v3554
    %v4688 = vunpack.c.h.b16 %v3554
    %v4689 = vunpack.c.l.b16 %v3555
    %v4690 = vunpack.c.h.b16 %v3555
    %v4691 = vunpack.c.l.b16 %v3556
    %v4692 = vunpack.c.l.b16 %v3557
    %v4693 = vunpack.c.h.b16 %v3557
    %v4694 = vunpack.c.l.b16 %v3558
    %v4695 = vunpack.c.h.b16 %v3558
    %v4696 = vunpack.c.l.b16 %v3559
    %v4697 = vunpack.c.h.b16 %v3559
    %v4698 = vunpack.c.l.b16 %v3560
    %v4699 = vunpack.c.l.b16 %v3561
    %v4700 = vunpack.c.h.b16 %v3561
    %v4701 = vunpack.c.l.b16 %v3562
    %v4702 = vunpack.c.h.b16 %v3562
    %v4703 = vunpack.c.l.b16 %v3563
    %v4704 = vunpack.c.h.b16 %v3563
    %v4705 = vunpack.c.l.b16 %v3564
    %v4706 = vunpack.c.l.b16 %v3565
    %v4707 = vunpack.c.h.b16 %v3565
    %v4708 = vunpack.c.l.b16 %v3566
    %v4709 = vunpack.c.h.b16 %v3566
    %v4710 = vunpack.c.l.b16 %v3567
    %v4711 = vunpack.c.h.b16 %v3567
    %v4712 = vunpack.c.l.b16 %v3568
    %v4713 = vunpack.c.l.b16 %v3569
    %v4714 = vunpack.c.h.b16 %v3569
    %v4715 = vunpack.c.l.b16 %v3570
    %v4716 = vunpack.c.h.b16 %v3570
    %v4717 = vunpack.c.l.b16 %v3571
    %v4718 = vunpack.c.h.b16 %v3571
    %v4719 = vunpack.c.l.b16 %v3572
    %v4720 = vunpack.c.l.b16 %v3573
    %v4721 = vunpack.c.h.b16 %v3573
    %v4722 = vunpack.c.l.b16 %v3574
    %v4723 = vunpack.c.h.b16 %v3574
    %v4724 = vunpack.c.l.b16 %v3575
    %v4725 = vunpack.c.h.b16 %v3575
    %v4726 = vunpack.c.l.b16 %v3576
    %v4727 = vunpack.c.l.b16 %v3577
    %v4728 = vunpack.c.h.b16 %v3577
    %v4729 = vunpack.c.l.b16 %v3578
    %v4730 = vunpack.c.h.b16 %v3578
    %v4731 = vunpack.c.l.b16 %v3579
    %v4732 = vunpack.c.h.b16 %v3579
    %v4733 = vunpack.c.l.b16 %v3580
    %v4734 = vunpack.c.l.b16 %v3581
    %v4735 = vunpack.c.h.b16 %v3581
    %v4736 = vunpack.c.l.b16 %v3582
    %v4737 = vunpack.c.h.b16 %v3582
    %v4738 = vunpack.c.l.b16 %v3583
    %v4739 = vunpack.c.h.b16 %v3583
    %v4740 = vunpack.c.l.b16 %v3584
    %v4741 = vunpack.c.l.b16 %v3585
    %v4742 = vunpack.c.h.b16 %v3585
    %v4743 = vunpack.c.l.b16 %v3586
    %v4744 = vunpack.c.h.b16 %v3586
    %v4745 = vunpack.c.l.b16 %v3587
    %v4746 = vunpack.c.h.b16 %v3587
    %v4747 = vunpack.c.l.b16 %v3588
    %v4748 = vunpack.c.l.b16 %v3589
    %v4749 = vunpack.c.h.b16 %v3589
    %v4750 = vunpack.c.l.b16 %v3590
    %v4751 = vunpack.c.h.b16 %v3590
    %v4752 = vunpack.c.l.b16 %v3591
    %v4753 = vunpack.c.h.b16 %v3591
    %v4754 = vunpack.c.l.b16 %v3592
    %v4755 = vunpack.c.l.b16 %v3593
    %v4756 = vunpack.c.h.b16 %v3593
    %v4757 = vunpack.c.l.b16 %v3594
    %v4758 = vunpack.c.h.b16 %v3594
    %v4759 = vunpack.c.l.b16 %v3595
    %v4760 = vunpack.c.h.b16 %v3595
    %v4761 = vunpack.c.l.b16 %v3596
    %v4762 = vunpack.c.l.b16 %v3597
    %v4763 = vunpack.c.h.b16 %v3597
    %v4764 = vunpack.c.l.b16 %v3598
    %v4765 = vunpack.c.h.b16 %v3598
    %v4766 = vunpack.c.l.b16 %v3599
    %v4767 = vunpack.c.h.b16 %v3599
    %v4768 = vunpack.c.l.b16 %v3600
    %v4769 = vunpack.c.l.b16 %v3601
    %v4770 = vunpack.c.h.b16 %v3601
    %v4771 = vunpack.c.l.b16 %v3602
    %v4772 = vunpack.c.h.b16 %v3602
    %v4773 = vunpack.c.l.b16 %v3603
    %v4774 = vunpack.c.h.b16 %v3603
    %v4775 = vunpack.c.l.b16 %v3604
    %v4776 = vunpack.c.l.b16 %v3605
    %v4777 = vunpack.c.h.b16 %v3605
    %v4778 = vunpack.c.l.b16 %v3606
    %v4779 = vunpack.c.h.b16 %v3606
    %v4780 = vunpack.c.l.b16 %v3607
    %v4781 = vunpack.c.h.b16 %v3607
    %v4782 = vunpack.c.l.b16 %v3608
    %v4783 = vunpack.c.l.b16 %v3609
    %v4784 = vunpack.c.h.b16 %v3609
    %v4785 = vunpack.c.l.b16 %v3610
    %v4786 = vunpack.c.h.b16 %v3610
    %v4787 = vunpack.c.l.b16 %v3611
    %v4788 = vunpack.c.h.b16 %v3611
    %v4789 = vunpack.c.l.b16 %v3612
    %v4790 = vunpack.c.l.b16 %v3613
    %v4791 = vunpack.c.h.b16 %v3613
    %v4792 = vunpack.c.l.b16 %v3614
    %v4793 = vunpack.c.h.b16 %v3614
    %v4794 = vunpack.c.l.b16 %v3615
    %v4795 = vunpack.c.h.b16 %v3615
    %v4796 = vunpack.c.l.b16 %v3616
    %v4797 = vunpack.c.l.b16 %v3617
    %v4798 = vunpack.c.h.b16 %v3617
    %v4799 = vunpack.c.l.b16 %v3618
    %v4800 = vunpack.c.h.b16 %v3618
    %v4801 = vunpack.c.l.b16 %v3619
    %v4802 = vunpack.c.h.b16 %v3619
    %v4803 = vunpack.c.l.b16 %v3620
    %v4804 = vunpack.c.l.b16 %v3621
    %v4805 = vunpack.c.h.b16 %v3621
    %v4806 = vunpack.c.l.b16 %v3622
    %v4807 = vunpack.c.h.b16 %v3622
    %v4808 = vunpack.c.l.b16 %v3623
    %v4809 = vunpack.c.h.b16 %v3623
    %v4810 = vunpack.c.l.b16 %v3624
    %v4811 = vunpack.c.l.b16 %v3625
    %v4812 = vunpack.c.h.b16 %v3625
    %v4813 = vunpack.c.l.b16 %v3626
    %v4814 = vunpack.c.h.b16 %v3626
    %v4815 = vunpack.c.l.b16 %v3627
    %v4816 = vunpack.c.h.b16 %v3627
    %v4817 = vunpack.c.l.b16 %v3628
    %v4818 = vunpack.c.l.b16 %v3629
    %v4819 = vunpack.c.h.b16 %v3629
    %v4820 = vunpack.c.l.b16 %v3630
    %v4821 = vunpack.c.h.b16 %v3630
    %v4822 = vunpack.c.l.b16 %v3631
    %v4823 = vunpack.c.h.b16 %v3631
    %v4824 = vunpack.c.l.b16 %v3632
    %v4825 = vunpack.c.l.b16 %v3633
    %v4826 = vunpack.c.h.b16 %v3633
    %v4827 = vunpack.c.l.b16 %v3634
    %v4828 = vunpack.c.h.b16 %v3634
    %v4829 = vunpack.c.l.b16 %v3635
    %v4830 = vunpack.c.h.b16 %v3635
    %v4831 = vunpack.c.l.b16 %v3636
    %v4832 = vunpack.c.l.b16 %v3637
    %v4833 = vunpack.c.h.b16 %v3637
    %v4834 = vunpack.c.l.b16 %v3638
    %v4835 = vunpack.c.h.b16 %v3638
    %v4836 = vunpack.c.l.b16 %v3639
    %v4837 = vunpack.c.h.b16 %v3639
    %v4838 = vunpack.c.l.b16 %v3640
    %v4839 = vunpack.c.l.b16 %v3641
    %v4840 = vunpack.c.h.b16 %v3641
    %v4841 = vunpack.c.l.b16 %v3642
    %v4842 = vunpack.c.h.b16 %v3642
    %v4843 = vunpack.c.l.b16 %v3643
    %v4844 = vunpack.c.h.b16 %v3643
    %v4845 = vunpack.c.l.b16 %v3644
    %v4846 = vunpack.c.l.b16 %v3645
    %v4847 = vunpack.c.h.b16 %v3645
    %v4848 = vunpack.c.l.b16 %v3646
    %v4849 = vunpack.c.h.b16 %v3646
    %v4850 = vunpack.c.l.b16 %v3647
    %v4851 = vunpack.c.h.b16 %v3647
    %v4852 = vunpack.c.l.b16 %v3648
    %v4853 = vunpack.c.l.b16 %v3649
    %v4854 = vunpack.c.h.b16 %v3649
    %v4855 = vunpack.c.l.b16 %v3650
    %v4856 = vunpack.c.h.b16 %v3650
    %v4857 = vunpack.c.l.b16 %v3651
    %v4858 = vunpack.c.h.b16 %v3651
    %v4859 = vunpack.c.l.b16 %v3652
    %v4860 = vunpack.c.l.b16 %v3653
    %v4861 = vunpack.c.h.b16 %v3653
    %v4862 = vunpack.c.l.b16 %v3654
    %v4863 = vunpack.c.h.b16 %v3654
    %v4864 = vunpack.c.l.b16 %v3655
    %v4865 = vunpack.c.h.b16 %v3655
    %v4866 = vunpack.c.l.b16 %v3656
    %v4867 = vunpack.c.l.b16 %v3657
    %v4868 = vunpack.c.h.b16 %v3657
    %v4869 = vunpack.c.l.b16 %v3658
    %v4870 = vunpack.c.h.b16 %v3658
    %v4871 = vunpack.c.l.b16 %v3659
    %v4872 = vunpack.c.h.b16 %v3659
    %v4873 = vunpack.c.l.b16 %v3660
    %v4874 = vunpack.c.l.b16 %v3661
    %v4875 = vunpack.c.h.b16 %v3661
    %v4876 = vunpack.c.l.b16 %v3662
    %v4877 = vunpack.c.h.b16 %v3662
    %v4878 = vunpack.c.l.b16 %v3663
    %v4879 = vunpack.c.h.b16 %v3663
    %v4880 = vunpack.c.l.b16 %v3664
    %v4881 = vunpack.c.l.b16 %v3665
    %v4882 = vunpack.c.h.b16 %v3665
    %v4883 = vunpack.c.l.b16 %v3666
    %v4884 = vunpack.c.h.b16 %v3666
    %v4885 = vunpack.c.l.b16 %v3667
    %v4886 = vunpack.c.h.b16 %v3667
    %v4887 = vunpack.c.l.b16 %v3668
    %v4888 = vunpack.c.l.b16 %v3669
    %v4889 = vunpack.c.h.b16 %v3669
    %v4890 = vunpack.c.l.b16 %v3670
    %v4891 = vunpack.c.h.b16 %v3670
    %v4892 = vunpack.c.l.b16 %v3671
    %v4893 = vunpack.c.h.b16 %v3671
    %v4894 = vunpack.c.l.b16 %v3672
    %v4895 = vunpack.c.l.b16 %v3673
    %v4896 = vunpack.c.h.b16 %v3673
    %v4897 = vunpack.c.l.b16 %v3674
    %v4898 = vunpack.c.h.b16 %v3674
    %v4899 = vunpack.c.l.b16 %v3675
    %v4900 = vunpack.c.h.b16 %v3675
    %v4901 = vunpack.c.l.b16 %v3676
    %v4902 = vunpack.c.l.b16 %v3677
    %v4903 = vunpack.c.h.b16 %v3677
    %v4904 = vunpack.c.l.b16 %v3678
    %v4905 = vunpack.c.h.b16 %v3678
    %v4906 = vunpack.c.l.b16 %v3679
    %v4907 = vunpack.c.h.b16 %v3679
    %v4908 = vunpack.c.l.b16 %v3680
    %v4909 = vunpack.c.l.b16 %v3681
    %v4910 = vunpack.c.h.b16 %v3681
    %v4911 = vunpack.c.l.b16 %v3682
    %v4912 = vunpack.c.h.b16 %v3682
    %v4913 = vunpack.c.l.b16 %v3683
    %v4914 = vunpack.c.h.b16 %v3683
    %v4915 = vunpack.c.l.b16 %v3684
    %v4916 = vunpack.c.l.b16 %v3685
    %v4917 = vunpack.c.h.b16 %v3685
    %v4918 = vunpack.c.l.b16 %v3686
    %v4919 = vunpack.c.h.b16 %v3686
    %v4920 = vunpack.c.l.b16 %v3687
    %v4921 = vunpack.c.h.b16 %v3687
    %v4922 = vunpack.c.l.b16 %v3688
    %v4923 = vunpack.c.l.b16 %v3689
    %v4924 = vunpack.c.h.b16 %v3689
    %v4925 = vunpack.c.l.b16 %v3690
    %v4926 = vunpack.c.h.b16 %v3690
    %v4927 = vunpack.c.l.b16 %v3691
    %v4928 = vunpack.c.h.b16 %v3691
    %v4929 = vunpack.c.l.b16 %v3692
    %v4930 = vunpack.c.l.b16 %v3693
    %v4931 = vunpack.c.h.b16 %v3693
    %v4932 = vunpack.c.l.b16 %v3694
    %v4933 = vunpack.c.h.b16 %v3694
    %v4934 = vunpack.c.l.b16 %v3695
    %v4935 = vunpack.c.h.b16 %v3695
    %v4936 = vunpack.c.l.b16 %v3696
    %v4937 = vunpack.c.l.b16 %v3697
    %v4938 = vunpack.c.h.b16 %v3697
    %v4939 = vunpack.c.l.b16 %v3698
    %v4940 = vunpack.c.h.b16 %v3698
    %v4941 = vunpack.c.l.b16 %v3699
    %v4942 = vunpack.c.h.b16 %v3699
    %v4943 = vunpack.c.l.b16 %v3700
    %v4944 = vunpack.c.l.b16 %v3701
    %v4945 = vunpack.c.h.b16 %v3701
    %v4946 = vunpack.c.l.b16 %v3702
    %v4947 = vunpack.c.h.b16 %v3702
    %v4948 = vunpack.c.l.b16 %v3703
    %v4949 = vunpack.c.h.b16 %v3703
    %v4950 = vunpack.c.l.b16 %v3704
    %v4951 = vunpack.c.l.b16 %v3705
    %v4952 = vunpack.c.h.b16 %v3705
    %v4953 = vunpack.c.l.b16 %v3706
    %v4954 = vunpack.c.h.b16 %v3706
    %v4955 = vunpack.c.l.b16 %v3707
    %v4956 = vunpack.c.h.b16 %v3707
    %v4957 = vunpack.c.l.b16 %v3708
    %v4958 = vunpack.c.l.b16 %v3709
    %v4959 = vunpack.c.h.b16 %v3709
    %v4960 = vunpack.c.l.b16 %v3710
    %v4961 = vunpack.c.h.b16 %v3710
    %v4962 = vunpack.c.l.b16 %v3711
    %v4963 = vunpack.c.h.b16 %v3711
    %v4964 = vunpack.c.l.b16 %v3712
    %v4965 = vunpack.c.l.b16 %v3713
    %v4966 = vunpack.c.h.b16 %v3713
    %v4967 = vunpack.c.l.b16 %v3714
    %v4968 = vunpack.c.h.b16 %v3714
    %v4969 = vunpack.c.l.b16 %v3715
    %v4970 = vunpack.c.h.b16 %v3715
    %v4971 = vunpack.c.l.b16 %v3716
    %v4972 = vunpack.c.l.b16 %v3717
    %v4973 = vunpack.c.h.b16 %v3717
    %v4974 = vunpack.c.l.b16 %v3718
    %v4975 = vunpack.c.h.b16 %v3718
    %v4976 = vunpack.c.l.b16 %v3719
    %v4977 = vunpack.c.h.b16 %v3719
    %v4978 = vunpack.c.l.b16 %v3720
    %v4979 = vunpack.c.l.b16 %v3721
    %v4980 = vunpack.c.h.b16 %v3721
    %v4981 = vunpack.c.l.b16 %v3722
    %v4982 = vunpack.c.h.b16 %v3722
    %v4983 = vunpack.c.l.b16 %v3723
    %v4984 = vunpack.c.h.b16 %v3723
    %v4985 = vunpack.c.l.b16 %v3724
    %v4986 = vunpack.c.l.b16 %v3725
    %v4987 = vunpack.c.h.b16 %v3725
    %v4988 = vunpack.c.l.b16 %v3726
    %v4989 = vunpack.c.h.b16 %v3726
    %v4990 = vunpack.c.l.b16 %v3727
    %v4991 = vunpack.c.h.b16 %v3727
    %v4992 = vunpack.c.l.b16 %v3728
    %v4993 = vunpack.c.l.b16 %v3729
    %v4994 = vunpack.c.h.b16 %v3729
    %v4995 = vunpack.c.l.b16 %v3730
    %v4996 = vunpack.c.h.b16 %v3730
    %v4997 = vunpack.c.l.b16 %v3731
    %v4998 = vunpack.c.h.b16 %v3731
    %v4999 = vunpack.c.l.b16 %v3732
    %v5000 = vunpack.c.l.b16 %v3733
    %v5001 = vunpack.c.h.b16 %v3733
    %v5002 = vunpack.c.l.b16 %v3734
    %v5003 = vunpack.c.h.b16 %v3734
    %v5004 = vunpack.c.l.b16 %v3735
    %v5005 = vunpack.c.h.b16 %v3735
    %v5006 = vunpack.c.l.b16 %v3736
    %v5007 = vunpack.c.l.b16 %v3737
    %v5008 = vunpack.c.h.b16 %v3737
    %v5009 = vunpack.c.l.b16 %v3738
    %v5010 = vunpack.c.h.b16 %v3738
    %v5011 = vunpack.c.l.b16 %v3739
    %v5012 = vunpack.c.h.b16 %v3739
    %v5013 = vunpack.c.l.b16 %v3740
    %v5014 = vpack.c.b16 %v4237, %v4230
    %v5015 = vpack.c.b16 %v4238, %v4231
    %v5016 = vpack.c.b16 %v4239, %v4232
    %v5017 = vpack.c.b16 %v4240, %v4233
    %v5018 = vpack.c.b16 %v4241, %v4234
    %v5019 = vpack.c.b16 %v4242, %v4235
    %v5020 = vpack.c.b16 %v4243, %v4236
    %v5021 = vpack.c.b16 %v4251, %v4244
    %v5022 = vpack.c.b16 %v4252, %v4245
    %v5023 = vpack.c.b16 %v4253, %v4246
    %v5024 = vpack.c.b16 %v4254, %v4247
    %v5025 = vpack.c.b16 %v4255, %v4248
    %v5026 = vpack.c.b16 %v4256, %v4249
    %v5027 = vpack.c.b16 %v4257, %v4250
    %v5028 = vpack.c.b16 %v4265, %v4258
    %v5029 = vpack.c.b16 %v4266, %v4259
    %v5030 = vpack.c.b16 %v4267, %v4260
    %v5031 = vpack.c.b16 %v4268, %v4261
    %v5032 = vpack.c.b16 %v4269, %v4262
    %v5033 = vpack.c.b16 %v4270, %v4263
    %v5034 = vpack.c.b16 %v4271, %v4264
    %v5035 = vpack.c.b16 %v4279, %v4272
    %v5036 = vpack.c.b16 %v4280, %v4273
    %v5037 = vpack.c.b16 %v4281, %v4274
    %v5038 = vpack.c.b16 %v4282, %v4275
    %v5039 = vpack.c.b16 %v4283, %v4276
    %v5040 = vpack.c.b16 %v4284, %v4277
    %v5041 = vpack.c.b16 %v4285, %v4278
    %v5042 = vpack.c.b16 %v4293, %v4286
    %v5043 = vpack.c.b16 %v4294, %v4287
    %v5044 = vpack.c.b16 %v4295, %v4288
    %v5045 = vpack.c.b16 %v4296, %v4289
    %v5046 = vpack.c.b16 %v4297, %v4290
    %v5047 = vpack.c.b16 %v4298, %v4291
    %v5048 = vpack.c.b16 %v4299, %v4292
    %v5049 = vpack.c.b16 %v4307, %v4300
    %v5050 = vpack.c.b16 %v4308, %v4301
    %v5051 = vpack.c.b16 %v4309, %v4302
    %v5052 = vpack.c.b16 %v4310, %v4303
    %v5053 = vpack.c.b16 %v4311, %v4304
    %v5054 = vpack.c.b16 %v4312, %v4305
    %v5055 = vpack.c.b16 %v4313, %v4306
    %v5056 = vpack.c.b16 %v4321, %v4314
    %v5057 = vpack.c.b16 %v4322, %v4315
    %v5058 = vpack.c.b16 %v4323, %v4316
    %v5059 = vpack.c.b16 %v4324, %v4317
    %v5060 = vpack.c.b16 %v4325, %v4318
    %v5061 = vpack.c.b16 %v4326, %v4319
    %v5062 = vpack.c.b16 %v4327, %v4320
    %v5063 = vpack.c.b16 %v4335, %v4328
    %v5064 = vpack.c.b16 %v4336, %v4329
    %v5065 = vpack.c.b16 %v4337, %v4330
    %v5066 = vpack.c.b16 %v4338, %v4331
    %v5067 = vpack.c.b16 %v4339, %v4332
    %v5068 = vpack.c.b16 %v4340, %v4333
    %v5069 = vpack.c.b16 %v4341, %v4334
    %v5070 = vpack.c.b16 %v4349, %v4342
    %v5071 = vpack.c.b16 %v4350, %v4343
    %v5072 = vpack.c.b16 %v4351, %v4344
    %v5073 = vpack.c.b16 %v4352, %v4345
    %v5074 = vpack.c.b16 %v4353, %v4346
    %v5075 = vpack.c.b16 %v4354, %v4347
    %v5076 = vpack.c.b16 %v4355, %v4348
    %v5077 = vpack.c.b16 %v4363, %v4356
    %v5078 = vpack.c.b16 %v4364, %v4357
    %v5079 = vpack.c.b16 %v4365, %v4358
    %v5080 = vpack.c.b16 %v4366, %v4359
    %v5081 = vpack.c.b16 %v4367, %v4360
    %v5082 = vpack.c.b16 %v4368, %v4361
    %v5083 = vpack.c.b16 %v4369, %v4362
    %v5084 = vpack.c.b16 %v4377, %v4370
    %v5085 = vpack.c.b16 %v4378, %v4371
    %v5086 = vpack.c.b16 %v4379, %v4372
    %v5087 = vpack.c.b16 %v4380, %v4373
    %v5088 = vpack.c.b16 %v4381, %v4374
    %v5089 = vpack.c.b16 %v4382, %v4375
    %v5090 = vpack.c.b16 %v4383, %v4376
    %v5091 = vpack.c.b16 %v4391, %v4384
    %v5092 = vpack.c.b16 %v4392, %v4385
    %v5093 = vpack.c.b16 %v4393, %v4386
    %v5094 = vpack.c.b16 %v4394, %v4387
    %v5095 = vpack.c.b16 %v4395, %v4388
    %v5096 = vpack.c.b16 %v4396, %v4389
    %v5097 = vpack.c.b16 %v4397, %v4390
    %v5098 = vpack.c.b16 %v4405, %v4398
    %v5099 = vpack.c.b16 %v4406, %v4399
    %v5100 = vpack.c.b16 %v4407, %v4400
    %v5101 = vpack.c.b16 %v4408, %v4401
    %v5102 = vpack.c.b16 %v4409, %v4402
    %v5103 = vpack.c.b16 %v4410, %v4403
    %v5104 = vpack.c.b16 %v4411, %v4404
    %v5105 = vpack.c.b16 %v4419, %v4412
    %v5106 = vpack.c.b16 %v4420, %v4413
    %v5107 = vpack.c.b16 %v4421, %v4414
    %v5108 = vpack.c.b16 %v4422, %v4415
    %v5109 = vpack.c.b16 %v4423, %v4416
    %v5110 = vpack.c.b16 %v4424, %v4417
    %v5111 = vpack.c.b16 %v4425, %v4418
    %v5112 = vpack.c.b16 %v4433, %v4426
    %v5113 = vpack.c.b16 %v4434, %v4427
    %v5114 = vpack.c.b16 %v4435, %v4428
    %v5115 = vpack.c.b16 %v4436, %v4429
    %v5116 = vpack.c.b16 %v4437, %v4430
    %v5117 = vpack.c.b16 %v4438, %v4431
    %v5118 = vpack.c.b16 %v4439, %v4432
    %v5119 = vpack.c.b16 %v4447, %v4440
    %v5120 = vpack.c.b16 %v4448, %v4441
    %v5121 = vpack.c.b16 %v4449, %v4442
    %v5122 = vpack.c.b16 %v4450, %v4443
    %v5123 = vpack.c.b16 %v4451, %v4444
    %v5124 = vpack.c.b16 %v4452, %v4445
    %v5125 = vpack.c.b16 %v4453, %v4446
    %v5126 = vpack.c.b16 %v4461, %v4454
    %v5127 = vpack.c.b16 %v4462, %v4455
    %v5128 = vpack.c.b16 %v4463, %v4456
    %v5129 = vpack.c.b16 %v4464, %v4457
    %v5130 = vpack.c.b16 %v4465, %v4458
    %v5131 = vpack.c.b16 %v4466, %v4459
    %v5132 = vpack.c.b16 %v4467, %v4460
    %v5133 = vpack.c.b16 %v4475, %v4468
    %v5134 = vpack.c.b16 %v4476, %v4469
    %v5135 = vpack.c.b16 %v4477, %v4470
    %v5136 = vpack.c.b16 %v4478, %v4471
    %v5137 = vpack.c.b16 %v4479, %v4472
    %v5138 = vpack.c.b16 %v4480, %v4473
    %v5139 = vpack.c.b16 %v4481, %v4474
    %v5140 = vpack.c.b16 %v4489, %v4482
    %v5141 = vpack.c.b16 %v4490, %v4483
    %v5142 = vpack.c.b16 %v4491, %v4484
    %v5143 = vpack.c.b16 %v4492, %v4485
    %v5144 = vpack.c.b16 %v4493, %v4486
    %v5145 = vpack.c.b16 %v4494, %v4487
    %v5146 = vpack.c.b16 %v4495, %v4488
    %v5147 = vpack.c.b16 %v4503, %v4496
    %v5148 = vpack.c.b16 %v4504, %v4497
    %v5149 = vpack.c.b16 %v4505, %v4498
    %v5150 = vpack.c.b16 %v4506, %v4499
    %v5151 = vpack.c.b16 %v4507, %v4500
    %v5152 = vpack.c.b16 %v4508, %v4501
    %v5153 = vpack.c.b16 %v4509, %v4502
    %v5154 = vpack.c.b16 %v4517, %v4510
    %v5155 = vpack.c.b16 %v4518, %v4511
    %v5156 = vpack.c.b16 %v4519, %v4512
    %v5157 = vpack.c.b16 %v4520, %v4513
    %v5158 = vpack.c.b16 %v4521, %v4514
    %v5159 = vpack.c.b16 %v4522, %v4515
    %v5160 = vpack.c.b16 %v4523, %v4516
    %v5161 = vpack.c.b16 %v4531, %v4524
    %v5162 = vpack.c.b16 %v4532, %v4525
    %v5163 = vpack.c.b16 %v4533, %v4526
    %v5164 = vpack.c.b16 %v4534, %v4527
    %v5165 = vpack.c.b16 %v4535, %v4528
    %v5166 = vpack.c.b16 %v4536, %v4529
    %v5167 = vpack.c.b16 %v4537, %v4530
    %v5168 = vpack.c.b16 %v4545, %v4538
    %v5169 = vpack.c.b16 %v4546, %v4539
    %v5170 = vpack.c.b16 %v4547, %v4540
    %v5171 = vpack.c.b16 %v4548, %v4541
    %v5172 = vpack.c.b16 %v4549, %v4542
    %v5173 = vpack.c.b16 %v4550, %v4543
    %v5174 = vpack.c.b16 %v4551, %v4544
    %v5175 = vpack.c.b16 %v4559, %v4552
    %v5176 = vpack.c.b16 %v4560, %v4553
    %v5177 = vpack.c.b16 %v4561, %v4554
    %v5178 = vpack.c.b16 %v4562, %v4555
    %v5179 = vpack.c.b16 %v4563, %v4556
    %v5180 = vpack.c.b16 %v4564, %v4557
    %v5181 = vpack.c.b16 %v4565, %v4558
    %v5182 = vpack.c.b16 %v4573, %v4566
    %v5183 = vpack.c.b16 %v4574, %v4567
    %v5184 = vpack.c.b16 %v4575, %v4568
    %v5185 = vpack.c.b16 %v4576, %v4569
    %v5186 = vpack.c.b16 %v4577, %v4570
    %v5187 = vpack.c.b16 %v4578, %v4571
    %v5188 = vpack.c.b16 %v4579, %v4572
    %v5189 = vpack.c.b16 %v4587, %v4580
    %v5190 = vpack.c.b16 %v4588, %v4581
    %v5191 = vpack.c.b16 %v4589, %v4582
    %v5192 = vpack.c.b16 %v4590, %v4583
    %v5193 = vpack.c.b16 %v4591, %v4584
    %v5194 = vpack.c.b16 %v4592, %v4585
    %v5195 = vpack.c.b16 %v4593, %v4586
    %v5196 = vpack.c.b16 %v4601, %v4594
    %v5197 = vpack.c.b16 %v4602, %v4595
    %v5198 = vpack.c.b16 %v4603, %v4596
    %v5199 = vpack.c.b16 %v4604, %v4597
    %v5200 = vpack.c.b16 %v4605, %v4598
    %v5201 = vpack.c.b16 %v4606, %v4599
    %v5202 = vpack.c.b16 %v4607, %v4600
    %v5203 = vpack.c.b16 %v4615, %v4608
    %v5204 = vpack.c.b16 %v4616, %v4609
    %v5205 = vpack.c.b16 %v4617, %v4610
    %v5206 = vpack.c.b16 %v4618, %v4611
    %v5207 = vpack.c.b16 %v4619, %v4612
    %v5208 = vpack.c.b16 %v4620, %v4613
    %v5209 = vpack.c.b16 %v4621, %v4614
    %v5210 = vpack.c.b16 %v4629, %v4622
    %v5211 = vpack.c.b16 %v4630, %v4623
    %v5212 = vpack.c.b16 %v4631, %v4624
    %v5213 = vpack.c.b16 %v4632, %v4625
    %v5214 = vpack.c.b16 %v4633, %v4626
    %v5215 = vpack.c.b16 %v4634, %v4627
    %v5216 = vpack.c.b16 %v4635, %v4628
    %v5217 = vpack.c.b16 %v4643, %v4636
    %v5218 = vpack.c.b16 %v4644, %v4637
    %v5219 = vpack.c.b16 %v4645, %v4638
    %v5220 = vpack.c.b16 %v4646, %v4639
    %v5221 = vpack.c.b16 %v4647, %v4640
    %v5222 = vpack.c.b16 %v4648, %v4641
    %v5223 = vpack.c.b16 %v4649, %v4642
    %v5224 = vpack.c.b16 %v4657, %v4650
    %v5225 = vpack.c.b16 %v4658, %v4651
    %v5226 = vpack.c.b16 %v4659, %v4652
    %v5227 = vpack.c.b16 %v4660, %v4653
    %v5228 = vpack.c.b16 %v4661, %v4654
    %v5229 = vpack.c.b16 %v4662, %v4655
    %v5230 = vpack.c.b16 %v4663, %v4656
    %v5231 = vpack.c.b16 %v4671, %v4664
    %v5232 = vpack.c.b16 %v4672, %v4665
    %v5233 = vpack.c.b16 %v4673, %v4666
    %v5234 = vpack.c.b16 %v4674, %v4667
    %v5235 = vpack.c.b16 %v4675, %v4668
    %v5236 = vpack.c.b16 %v4676, %v4669
    %v5237 = vpack.c.b16 %v4677, %v4670
    %v5238 = vpack.c.b16 %v4685, %v4678
    %v5239 = vpack.c.b16 %v4686, %v4679
    %v5240 = vpack.c.b16 %v4687, %v4680
    %v5241 = vpack.c.b16 %v4688, %v4681
    %v5242 = vpack.c.b16 %v4689, %v4682
    %v5243 = vpack.c.b16 %v4690, %v4683
    %v5244 = vpack.c.b16 %v4691, %v4684
    %v5245 = vpack.c.b16 %v4699, %v4692
    %v5246 = vpack.c.b16 %v4700, %v4693
    %v5247 = vpack.c.b16 %v4701, %v4694
    %v5248 = vpack.c.b16 %v4702, %v4695
    %v5249 = vpack.c.b16 %v4703, %v4696
    %v5250 = vpack.c.b16 %v4704, %v4697
    %v5251 = vpack.c.b16 %v4705, %v4698
    %v5252 = vpack.c.b16 %v4713, %v4706
    %v5253 = vpack.c.b16 %v4714, %v4707
    %v5254 = vpack.c.b16 %v4715, %v4708
    %v5255 = vpack.c.b16 %v4716, %v4709
    %v5256 = vpack.c.b16 %v4717, %v4710
    %v5257 = vpack.c.b16 %v4718, %v4711
    %v5258 = vpack.c.b16 %v4719, %v4712
    %v5259 = vpack.c.b16 %v4727, %v4720
    %v5260 = vpack.c.b16 %v4728, %v4721
    %v5261 = vpack.c.b16 %v4729, %v4722
    %v5262 = vpack.c.b16 %v4730, %v4723
    %v5263 = vpack.c.b16 %v4731, %v4724
    %v5264 = vpack.c.b16 %v4732, %v4725
    %v5265 = vpack.c.b16 %v4733, %v4726
    %v5266 = vpack.c.b16 %v4741, %v4734
    %v5267 = vpack.c.b16 %v4742, %v4735
    %v5268 = vpack.c.b16 %v4743, %v4736
    %v5269 = vpack.c.b16 %v4744, %v4737
    %v5270 = vpack.c.b16 %v4745, %v4738
    %v5271 = vpack.c.b16 %v4746, %v4739
    %v5272 = vpack.c.b16 %v4747, %v4740
    %v5273 = vpack.c.b16 %v4755, %v4748
    %v5274 = vpack.c.b16 %v4756, %v4749
    %v5275 = vpack.c.b16 %v4757, %v4750
    %v5276 = vpack.c.b16 %v4758, %v4751
    %v5277 = vpack.c.b16 %v4759, %v4752
    %v5278 = vpack.c.b16 %v4760, %v4753
    %v5279 = vpack.c.b16 %v4761, %v4754
    %v5280 = vpack.c.b16 %v4769, %v4762
    %v5281 = vpack.c.b16 %v4770, %v4763
    %v5282 = vpack.c.b16 %v4771, %v4764
    %v5283 = vpack.c.b16 %v4772, %v4765
    %v5284 = vpack.c.b16 %v4773, %v4766
    %v5285 = vpack.c.b16 %v4774, %v4767
    %v5286 = vpack.c.b16 %v4775, %v4768
    %v5287 = vpack.c.b16 %v4783, %v4776
    %v5288 = vpack.c.b16 %v4784, %v4777
    %v5289 = vpack.c.b16 %v4785, %v4778
    %v5290 = vpack.c.b16 %v4786, %v4779
    %v5291 = vpack.c.b16 %v4787, %v4780
    %v5292 = vpack.c.b16 %v4788, %v4781
    %v5293 = vpack.c.b16 %v4789, %v4782
    %v5294 = vpack.c.b16 %v4797, %v4790
    %v5295 = vpack.c.b16 %v4798, %v4791
    %v5296 = vpack.c.b16 %v4799, %v4792
    %v5297 = vpack.c.b16 %v4800, %v4793
    %v5298 = vpack.c.b16 %v4801, %v4794
    %v5299 = vpack.c.b16 %v4802, %v4795
    %v5300 = vpack.c.b16 %v4803, %v4796
    %v5301 = vpack.c.b16 %v4811, %v4804
    %v5302 = vpack.c.b16 %v4812, %v4805
    %v5303 = vpack.c.b16 %v4813, %v4806
    %v5304 = vpack.c.b16 %v4814, %v4807
    %v5305 = vpack.c.b16 %v4815, %v4808
    %v5306 = vpack.c.b16 %v4816, %v4809
    %v5307 = vpack.c.b16 %v4817, %v4810
    %v5308 = vpack.c.b16 %v4825, %v4818
    %v5309 = vpack.c.b16 %v4826, %v4819
    %v5310 = vpack.c.b16 %v4827, %v4820
    %v5311 = vpack.c.b16 %v4828, %v4821
    %v5312 = vpack.c.b16 %v4829, %v4822
    %v5313 = vpack.c.b16 %v4830, %v4823
    %v5314 = vpack.c.b16 %v4831, %v4824
    %v5315 = vpack.c.b16 %v4839, %v4832
    %v5316 = vpack.c.b16 %v4840, %v4833
    %v5317 = vpack.c.b16 %v4841, %v4834
    %v5318 = vpack.c.b16 %v4842, %v4835
    %v5319 = vpack.c.b16 %v4843, %v4836
    %v5320 = vpack.c.b16 %v4844, %v4837
    %v5321 = vpack.c.b16 %v4845, %v4838
    %v5322 = vpack.c.b16 %v4853, %v4846
    %v5323 = vpack.c.b16 %v4854, %v4847
    %v5324 = vpack.c.b16 %v4855, %v4848
    %v5325 = vpack.c.b16 %v4856, %v4849
    %v5326 = vpack.c.b16 %v4857, %v4850
    %v5327 = vpack.c.b16 %v4858, %v4851
    %v5328 = vpack.c.b16 %v4859, %v4852
    %v5329 = vpack.c.b16 %v4867, %v4860
    %v5330 = vpack.c.b16 %v4868, %v4861
    %v5331 = vpack.c.b16 %v4869, %v4862
    %v5332 = vpack.c.b16 %v4870, %v4863
    %v5333 = vpack.c.b16 %v4871, %v4864
    %v5334 = vpack.c.b16 %v4872, %v4865
    %v5335 = vpack.c.b16 %v4873, %v4866
    %v5336 = vpack.c.b16 %v4881, %v4874
    %v5337 = vpack.c.b16 %v4882, %v4875
    %v5338 = vpack.c.b16 %v4883, %v4876
    %v5339 = vpack.c.b16 %v4884, %v4877
    %v5340 = vpack.c.b16 %v4885, %v4878
    %v5341 = vpack.c.b16 %v4886, %v4879
    %v5342 = vpack.c.b16 %v4887, %v4880
    %v5343 = vpack.c.b16 %v4895, %v4888
    %v5344 = vpack.c.b16 %v4896, %v4889
    %v5345 = vpack.c.b16 %v4897, %v4890
    %v5346 = vpack.c.b16 %v4898, %v4891
    %v5347 = vpack.c.b16 %v4899, %v4892
    %v5348 = vpack.c.b16 %v4900, %v4893
    %v5349 = vpack.c.b16 %v4901, %v4894
    %v5350 = vpack.c.b16 %v4909, %v4902
    %v5351 = vpack.c.b16 %v4910, %v4903
    %v5352 = vpack.c.b16 %v4911, %v4904
    %v5353 = vpack.c.b16 %v4912, %v4905
    %v5354 = vpack.c.b16 %v4913, %v4906
    %v5355 = vpack.c.b16 %v4914, %v4907
    %v5356 = vpack.c.b16 %v4915, %v4908
    %v5357 = vpack.c.b16 %v4923, %v4916
    %v5358 = vpack.c.b16 %v4924, %v4917
    %v5359 = vpack.c.b16 %v4925, %v4918
    %v5360 = vpack.c.b16 %v4926, %v4919
    %v5361 = vpack.c.b16 %v4927, %v4920
    %v5362 = vpack.c.b16 %v4928, %v4921
    %v5363 = vpack.c.b16 %v4929, %v4922
    %v5364 = vpack.c.b16 %v4937, %v4930
    %v5365 = vpack.c.b16 %v4938, %v4931
    %v5366 = vpack.c.b16 %v4939, %v4932
    %v5367 = vpack.c.b16 %v4940, %v4933
    %v5368 = vpack.c.b16 %v4941, %v4934
    %v5369 = vpack.c.b16 %v4942, %v4935
    %v5370 = vpack.c.b16 %v4943, %v4936
    %v5371 = vpack.c.b16 %v4951, %v4944
    %v5372 = vpack.c.b16 %v4952, %v4945
    %v5373 = vpack.c.b16 %v4953, %v4946
    %v5374 = vpack.c.b16 %v4954, %v4947
    %v5375 = vpack.c.b16 %v4955, %v4948
    %v5376 = vpack.c.b16 %v4956, %v4949
    %v5377 = vpack.c.b16 %v4957, %v4950
    %v5378 = vpack.c.b16 %v4965, %v4958
    %v5379 = vpack.c.b16 %v4966, %v4959
    %v5380 = vpack.c.b16 %v4967, %v4960
    %v5381 = vpack.c.b16 %v4968, %v4961
    %v5382 = vpack.c.b16 %v4969, %v4962
    %v5383 = vpack.c.b16 %v4970, %v4963
    %v5384 = vpack.c.b16 %v4971, %v4964
    %v5385 = vpack.c.b16 %v4979, %v4972
    %v5386 = vpack.c.b16 %v4980, %v4973
    %v5387 = vpack.c.b16 %v4981, %v4974
    %v5388 = vpack.c.b16 %v4982, %v4975
    %v5389 = vpack.c.b16 %v4983, %v4976
    %v5390 = vpack.c.b16 %v4984, %v4977
    %v5391 = vpack.c.b16 %v4985, %v4978
    %v5392 = vpack.c.b16 %v4993, %v4986
    %v5393 = vpack.c.b16 %v4994, %v4987
    %v5394 = vpack.c.b16 %v4995, %v4988
    %v5395 = vpack.c.b16 %v4996, %v4989
    %v5396 = vpack.c.b16 %v4997, %v4990
    %v5397 = vpack.c.b16 %v4998, %v4991
    %v5398 = vpack.c.b16 %v4999, %v4992
    %v5399 = vpack.c.b16 %v5007, %v5000
    %v5400 = vpack.c.b16 %v5008, %v5001
    %v5401 = vpack.c.b16 %v5009, %v5002
    %v5402 = vpack.c.b16 %v5010, %v5003
    %v5403 = vpack.c.b16 %v5011, %v5004
    %v5404 = vpack.c.b16 %v5012, %v5005
    %v5405 = vpack.c.b16 %v5013, %v5006
    %5798 = vmatpush.bf16.msra.mxu0 %v5063
    %5799 = vmatpush.bf16.msra.mxu0 %v5056
    %5800 = vmatpush.bf16.msra.mxu0 %v5049
    %5801 = vmatpush.bf16.msra.mxu0 %v5042
    %5802 = vmatpush.bf16.msra.mxu0 %v5035
    %5803 = vmatpush.bf16.msra.mxu0 %v5028
    %5804 = vmatpush.bf16.msra.mxu0 %v5021
    %5805 = vmatpush.bf16.msra.mxu0 %v5014
    %5806 = vmatmul.bf16.gmra.mxu0 %v3768
    %v5807 = vpop.f32.mrf.mxu0
    %v5808 = vadd.f32 %v3743, %v5807
    %v5809 = vpop.f32.mrf.mxu0
    %5810 = vdwg.mxu0
    %5811 = vmatpush.bf16.msra.mxu0 %v5119
    %5812 = vmatpush.bf16.msra.mxu0 %v5112
    %5813 = vmatpush.bf16.msra.mxu0 %v5105
    %5814 = vmatpush.bf16.msra.mxu0 %v5098
    %5815 = vmatpush.bf16.msra.mxu0 %v5091
    %5816 = vmatpush.bf16.msra.mxu0 %v5084
    %5817 = vmatpush.bf16.msra.mxu0 %v5077
    %5818 = vmatpush.bf16.msra.mxu0 %v5070
    %5819 = vmatmul.bf16.gmra.mxu0 %v3769
    %v5820 = vpop.f32.mrf.mxu0
    %v5821 = vadd.f32 %v5808, %v5820
    %v5822 = vpop.f32.mrf.mxu0
    %5823 = vdwg.mxu0
    %5824 = vmatpush.bf16.msra.mxu0 %v5175
    %5825 = vmatpush.bf16.msra.mxu0 %v5168
    %5826 = vmatpush.bf16.msra.mxu0 %v5161
    %5827 = vmatpush.bf16.msra.mxu0 %v5154
    %5828 = vmatpush.bf16.msra.mxu0 %v5147
    %5829 = vmatpush.bf16.msra.mxu0 %v5140
    %5830 = vmatpush.bf16.msra.mxu0 %v5133
    %5831 = vmatpush.bf16.msra.mxu0 %v5126
    %5832 = vmatmul.bf16.gmra.mxu0 %v3770
    %v5833 = vpop.f32.mrf.mxu0
    %v5834 = vadd.f32 %v5821, %v5833
    %v5835 = vpop.f32.mrf.mxu0
    %5836 = vdwg.mxu0
    %5837 = vmatpush.bf16.msra.mxu0 %v5231
    %5838 = vmatpush.bf16.msra.mxu0 %v5224
    %5839 = vmatpush.bf16.msra.mxu0 %v5217
    %5840 = vmatpush.bf16.msra.mxu0 %v5210
    %5841 = vmatpush.bf16.msra.mxu0 %v5203
    %5842 = vmatpush.bf16.msra.mxu0 %v5196
    %5843 = vmatpush.bf16.msra.mxu0 %v5189
    %5844 = vmatpush.bf16.msra.mxu0 %v5182
    %5845 = vmatmul.bf16.gmra.mxu0 %v3771
    %v5846 = vpop.f32.mrf.mxu0
    %v5847 = vadd.f32 %v5834, %v5846
    %v5848 = vpop.f32.mrf.mxu0
    %5849 = vdwg.mxu0
    %5850 = vmatpush.bf16.msra.mxu0 %v5287
    %5851 = vmatpush.bf16.msra.mxu0 %v5280
    %5852 = vmatpush.bf16.msra.mxu0 %v5273
    %5853 = vmatpush.bf16.msra.mxu0 %v5266
    %5854 = vmatpush.bf16.msra.mxu0 %v5259
    %5855 = vmatpush.bf16.msra.mxu0 %v5252
    %5856 = vmatpush.bf16.msra.mxu0 %v5245
    %5857 = vmatpush.bf16.msra.mxu0 %v5238
    %5858 = vmatmul.bf16.gmra.mxu0 %v3772
    %v5859 = vpop.f32.mrf.mxu0
    %v5860 = vadd.f32 %v5847, %v5859
    %v5861 = vpop.f32.mrf.mxu0
    %5862 = vdwg.mxu0
    %5863 = vmatpush.bf16.msra.mxu0 %v5343
    %5864 = vmatpush.bf16.msra.mxu0 %v5336
    %5865 = vmatpush.bf16.msra.mxu0 %v5329
    %5866 = vmatpush.bf16.msra.mxu0 %v5322
    %5867 = vmatpush.bf16.msra.mxu0 %v5315
    %5868 = vmatpush.bf16.msra.mxu0 %v5308
    %5869 = vmatpush.bf16.msra.mxu0 %v5301
    %5870 = vmatpush.bf16.msra.mxu0 %v5294
    %5871 = vmatmul.bf16.gmra.mxu0 %v3773
    %v5872 = vpop.f32.mrf.mxu0
    %v5873 = vadd.f32 %v5860, %v5872
    %v5874 = vpop.f32.mrf.mxu0
    %5875 = vdwg.mxu0
    %5876 = vmatpush.bf16.msra.mxu0 %v5399
    %5877 = vmatpush.bf16.msra.mxu0 %v5392
    %5878 = vmatpush.bf16.msra.mxu0 %v5385
    %5879 = vmatpush.bf16.msra.mxu0 %v5378
    %5880 = vmatpush.bf16.msra.mxu0 %v5371
    %5881 = vmatpush.bf16.msra.mxu0 %v5364
    %5882 = vmatpush.bf16.msra.mxu0 %v5357
    %5883 = vmatpush.bf16.msra.mxu0 %v5350
    %5884 = vmatmul.bf16.gmra.mxu0 %v3774
    %v5885 = vpop.f32.mrf.mxu0
    %v5886 = vadd.f32 %v5873, %v5885
    %v5887 = vpop.f32.mrf.mxu0
    %5888 = vdwg.mxu0
    %5889 = vmatpush.bf16.msra.mxu0 %v5064
    %5890 = vmatpush.bf16.msra.mxu0 %v5057
    %5891 = vmatpush.bf16.msra.mxu0 %v5050
    %5892 = vmatpush.bf16.msra.mxu0 %v5043
    %5893 = vmatpush.bf16.msra.mxu0 %v5036
    %5894 = vmatpush.bf16.msra.mxu0 %v5029
    %5895 = vmatpush.bf16.msra.mxu0 %v5022
    %5896 = vmatpush.bf16.msra.mxu0 %v5015
    %5897 = vmatmul.bf16.gmra.mxu0 %v3768
    %v5898 = vpop.f32.mrf.mxu0
    %v5899 = vadd.f32 %v3744, %v5898
    %v5900 = vpop.f32.mrf.mxu0
    %5901 = vdwg.mxu0
    %5902 = vmatpush.bf16.msra.mxu0 %v5120
    %5903 = vmatpush.bf16.msra.mxu0 %v5113
    %5904 = vmatpush.bf16.msra.mxu0 %v5106
    %5905 = vmatpush.bf16.msra.mxu0 %v5099
    %5906 = vmatpush.bf16.msra.mxu0 %v5092
    %5907 = vmatpush.bf16.msra.mxu0 %v5085
    %5908 = vmatpush.bf16.msra.mxu0 %v5078
    %5909 = vmatpush.bf16.msra.mxu0 %v5071
    %5910 = vmatmul.bf16.gmra.mxu0 %v3769
    %v5911 = vpop.f32.mrf.mxu0
    %v5912 = vadd.f32 %v5899, %v5911
    %v5913 = vpop.f32.mrf.mxu0
    %5914 = vdwg.mxu0
    %5915 = vmatpush.bf16.msra.mxu0 %v5176
    %5916 = vmatpush.bf16.msra.mxu0 %v5169
    %5917 = vmatpush.bf16.msra.mxu0 %v5162
    %5918 = vmatpush.bf16.msra.mxu0 %v5155
    %5919 = vmatpush.bf16.msra.mxu0 %v5148
    %5920 = vmatpush.bf16.msra.mxu0 %v5141
    %5921 = vmatpush.bf16.msra.mxu0 %v5134
    %5922 = vmatpush.bf16.msra.mxu0 %v5127
    %5923 = vmatmul.bf16.gmra.mxu0 %v3770
    %v5924 = vpop.f32.mrf.mxu0
    %v5925 = vadd.f32 %v5912, %v5924
    %v5926 = vpop.f32.mrf.mxu0
    %5927 = vdwg.mxu0
    %5928 = vmatpush.bf16.msra.mxu0 %v5232
    %5929 = vmatpush.bf16.msra.mxu0 %v5225
    %5930 = vmatpush.bf16.msra.mxu0 %v5218
    %5931 = vmatpush.bf16.msra.mxu0 %v5211
    %5932 = vmatpush.bf16.msra.mxu0 %v5204
    %5933 = vmatpush.bf16.msra.mxu0 %v5197
    %5934 = vmatpush.bf16.msra.mxu0 %v5190
    %5935 = vmatpush.bf16.msra.mxu0 %v5183
    %5936 = vmatmul.bf16.gmra.mxu0 %v3771
    %v5937 = vpop.f32.mrf.mxu0
    %v5938 = vadd.f32 %v5925, %v5937
    %v5939 = vpop.f32.mrf.mxu0
    %5940 = vdwg.mxu0
    %5941 = vmatpush.bf16.msra.mxu0 %v5288
    %5942 = vmatpush.bf16.msra.mxu0 %v5281
    %5943 = vmatpush.bf16.msra.mxu0 %v5274
    %5944 = vmatpush.bf16.msra.mxu0 %v5267
    %5945 = vmatpush.bf16.msra.mxu0 %v5260
    %5946 = vmatpush.bf16.msra.mxu0 %v5253
    %5947 = vmatpush.bf16.msra.mxu0 %v5246
    %5948 = vmatpush.bf16.msra.mxu0 %v5239
    %5949 = vmatmul.bf16.gmra.mxu0 %v3772
    %v5950 = vpop.f32.mrf.mxu0
    %v5951 = vadd.f32 %v5938, %v5950
    %v5952 = vpop.f32.mrf.mxu0
    %5953 = vdwg.mxu0
    %5954 = vmatpush.bf16.msra.mxu0 %v5344
    %5955 = vmatpush.bf16.msra.mxu0 %v5337
    %5956 = vmatpush.bf16.msra.mxu0 %v5330
    %5957 = vmatpush.bf16.msra.mxu0 %v5323
    %5958 = vmatpush.bf16.msra.mxu0 %v5316
    %5959 = vmatpush.bf16.msra.mxu0 %v5309
    %5960 = vmatpush.bf16.msra.mxu0 %v5302
    %5961 = vmatpush.bf16.msra.mxu0 %v5295
    %5962 = vmatmul.bf16.gmra.mxu0 %v3773
    %v5963 = vpop.f32.mrf.mxu0
    %v5964 = vadd.f32 %v5951, %v5963
    %v5965 = vpop.f32.mrf.mxu0
    %5966 = vdwg.mxu0
    %5967 = vmatpush.bf16.msra.mxu0 %v5400
    %5968 = vmatpush.bf16.msra.mxu0 %v5393
    %5969 = vmatpush.bf16.msra.mxu0 %v5386
    %5970 = vmatpush.bf16.msra.mxu0 %v5379
    %5971 = vmatpush.bf16.msra.mxu0 %v5372
    %5972 = vmatpush.bf16.msra.mxu0 %v5365
    %5973 = vmatpush.bf16.msra.mxu0 %v5358
    %5974 = vmatpush.bf16.msra.mxu0 %v5351
    %5975 = vmatmul.bf16.gmra.mxu0 %v3774
    %v5976 = vpop.f32.mrf.mxu0
    %v5977 = vadd.f32 %v5964, %v5976
    %v5978 = vpop.f32.mrf.mxu0
    %5979 = vdwg.mxu0
    %5980 = vmatpush.bf16.msra.mxu0 %v5065
    %5981 = vmatpush.bf16.msra.mxu0 %v5058
    %5982 = vmatpush.bf16.msra.mxu0 %v5051
    %5983 = vmatpush.bf16.msra.mxu0 %v5044
    %5984 = vmatpush.bf16.msra.mxu0 %v5037
    %5985 = vmatpush.bf16.msra.mxu0 %v5030
    %5986 = vmatpush.bf16.msra.mxu0 %v5023
    %5987 = vmatpush.bf16.msra.mxu0 %v5016
    %5988 = vmatmul.bf16.gmra.mxu0 %v3768
    %v5989 = vpop.f32.mrf.mxu0
    %v5990 = vadd.f32 %v3745, %v5989
    %v5991 = vpop.f32.mrf.mxu0
    %5992 = vdwg.mxu0
    %5993 = vmatpush.bf16.msra.mxu0 %v5121
    %5994 = vmatpush.bf16.msra.mxu0 %v5114
    %5995 = vmatpush.bf16.msra.mxu0 %v5107
    %5996 = vmatpush.bf16.msra.mxu0 %v5100
    %5997 = vmatpush.bf16.msra.mxu0 %v5093
    %5998 = vmatpush.bf16.msra.mxu0 %v5086
    %5999 = vmatpush.bf16.msra.mxu0 %v5079
    %6000 = vmatpush.bf16.msra.mxu0 %v5072
    %6001 = vmatmul.bf16.gmra.mxu0 %v3769
    %v6002 = vpop.f32.mrf.mxu0
    %v6003 = vadd.f32 %v5990, %v6002
    %v6004 = vpop.f32.mrf.mxu0
    %6005 = vdwg.mxu0
    %6006 = vmatpush.bf16.msra.mxu0 %v5177
    %6007 = vmatpush.bf16.msra.mxu0 %v5170
    %6008 = vmatpush.bf16.msra.mxu0 %v5163
    %6009 = vmatpush.bf16.msra.mxu0 %v5156
    %6010 = vmatpush.bf16.msra.mxu0 %v5149
    %6011 = vmatpush.bf16.msra.mxu0 %v5142
    %6012 = vmatpush.bf16.msra.mxu0 %v5135
    %6013 = vmatpush.bf16.msra.mxu0 %v5128
    %6014 = vmatmul.bf16.gmra.mxu0 %v3770
    %v6015 = vpop.f32.mrf.mxu0
    %v6016 = vadd.f32 %v6003, %v6015
    %v6017 = vpop.f32.mrf.mxu0
    %6018 = vdwg.mxu0
    %6019 = vmatpush.bf16.msra.mxu0 %v5233
    %6020 = vmatpush.bf16.msra.mxu0 %v5226
    %6021 = vmatpush.bf16.msra.mxu0 %v5219
    %6022 = vmatpush.bf16.msra.mxu0 %v5212
    %6023 = vmatpush.bf16.msra.mxu0 %v5205
    %6024 = vmatpush.bf16.msra.mxu0 %v5198
    %6025 = vmatpush.bf16.msra.mxu0 %v5191
    %6026 = vmatpush.bf16.msra.mxu0 %v5184
    %6027 = vmatmul.bf16.gmra.mxu0 %v3771
    %v6028 = vpop.f32.mrf.mxu0
    %v6029 = vadd.f32 %v6016, %v6028
    %v6030 = vpop.f32.mrf.mxu0
    %6031 = vdwg.mxu0
    %6032 = vmatpush.bf16.msra.mxu0 %v5289
    %6033 = vmatpush.bf16.msra.mxu0 %v5282
    %6034 = vmatpush.bf16.msra.mxu0 %v5275
    %6035 = vmatpush.bf16.msra.mxu0 %v5268
    %6036 = vmatpush.bf16.msra.mxu0 %v5261
    %6037 = vmatpush.bf16.msra.mxu0 %v5254
    %6038 = vmatpush.bf16.msra.mxu0 %v5247
    %6039 = vmatpush.bf16.msra.mxu0 %v5240
    %6040 = vmatmul.bf16.gmra.mxu0 %v3772
    %v6041 = vpop.f32.mrf.mxu0
    %v6042 = vadd.f32 %v6029, %v6041
    %v6043 = vpop.f32.mrf.mxu0
    %6044 = vdwg.mxu0
    %6045 = vmatpush.bf16.msra.mxu0 %v5345
    %6046 = vmatpush.bf16.msra.mxu0 %v5338
    %6047 = vmatpush.bf16.msra.mxu0 %v5331
    %6048 = vmatpush.bf16.msra.mxu0 %v5324
    %6049 = vmatpush.bf16.msra.mxu0 %v5317
    %6050 = vmatpush.bf16.msra.mxu0 %v5310
    %6051 = vmatpush.bf16.msra.mxu0 %v5303
    %6052 = vmatpush.bf16.msra.mxu0 %v5296
    %6053 = vmatmul.bf16.gmra.mxu0 %v3773
    %v6054 = vpop.f32.mrf.mxu0
    %v6055 = vadd.f32 %v6042, %v6054
    %v6056 = vpop.f32.mrf.mxu0
    %6057 = vdwg.mxu0
    %6058 = vmatpush.bf16.msra.mxu0 %v5401
    %6059 = vmatpush.bf16.msra.mxu0 %v5394
    %6060 = vmatpush.bf16.msra.mxu0 %v5387
    %6061 = vmatpush.bf16.msra.mxu0 %v5380
    %6062 = vmatpush.bf16.msra.mxu0 %v5373
    %6063 = vmatpush.bf16.msra.mxu0 %v5366
    %6064 = vmatpush.bf16.msra.mxu0 %v5359
    %6065 = vmatpush.bf16.msra.mxu0 %v5352
    %6066 = vmatmul.bf16.gmra.mxu0 %v3774
    %v6067 = vpop.f32.mrf.mxu0
    %v6068 = vadd.f32 %v6055, %v6067
    %v6069 = vpop.f32.mrf.mxu0
    %6070 = vdwg.mxu0
    %6071 = vmatpush.bf16.msra.mxu0 %v5066
    %6072 = vmatpush.bf16.msra.mxu0 %v5059
    %6073 = vmatpush.bf16.msra.mxu0 %v5052
    %6074 = vmatpush.bf16.msra.mxu0 %v5045
    %6075 = vmatpush.bf16.msra.mxu0 %v5038
    %6076 = vmatpush.bf16.msra.mxu0 %v5031
    %6077 = vmatpush.bf16.msra.mxu0 %v5024
    %6078 = vmatpush.bf16.msra.mxu0 %v5017
    %6079 = vmatmul.bf16.gmra.mxu0 %v3768
    %v6080 = vpop.f32.mrf.mxu0
    %v6081 = vadd.f32 %v3746, %v6080
    %v6082 = vpop.f32.mrf.mxu0
    %6083 = vdwg.mxu0
    %6084 = vmatpush.bf16.msra.mxu0 %v5122
    %6085 = vmatpush.bf16.msra.mxu0 %v5115
    %6086 = vmatpush.bf16.msra.mxu0 %v5108
    %6087 = vmatpush.bf16.msra.mxu0 %v5101
    %6088 = vmatpush.bf16.msra.mxu0 %v5094
    %6089 = vmatpush.bf16.msra.mxu0 %v5087
    %6090 = vmatpush.bf16.msra.mxu0 %v5080
    %6091 = vmatpush.bf16.msra.mxu0 %v5073
    %6092 = vmatmul.bf16.gmra.mxu0 %v3769
    %v6093 = vpop.f32.mrf.mxu0
    %v6094 = vadd.f32 %v6081, %v6093
    %v6095 = vpop.f32.mrf.mxu0
    %6096 = vdwg.mxu0
    %6097 = vmatpush.bf16.msra.mxu0 %v5178
    %6098 = vmatpush.bf16.msra.mxu0 %v5171
    %6099 = vmatpush.bf16.msra.mxu0 %v5164
    %6100 = vmatpush.bf16.msra.mxu0 %v5157
    %6101 = vmatpush.bf16.msra.mxu0 %v5150
    %6102 = vmatpush.bf16.msra.mxu0 %v5143
    %6103 = vmatpush.bf16.msra.mxu0 %v5136
    %6104 = vmatpush.bf16.msra.mxu0 %v5129
    %6105 = vmatmul.bf16.gmra.mxu0 %v3770
    %v6106 = vpop.f32.mrf.mxu0
    %v6107 = vadd.f32 %v6094, %v6106
    %v6108 = vpop.f32.mrf.mxu0
    %6109 = vdwg.mxu0
    %6110 = vmatpush.bf16.msra.mxu0 %v5234
    %6111 = vmatpush.bf16.msra.mxu0 %v5227
    %6112 = vmatpush.bf16.msra.mxu0 %v5220
    %6113 = vmatpush.bf16.msra.mxu0 %v5213
    %6114 = vmatpush.bf16.msra.mxu0 %v5206
    %6115 = vmatpush.bf16.msra.mxu0 %v5199
    %6116 = vmatpush.bf16.msra.mxu0 %v5192
    %6117 = vmatpush.bf16.msra.mxu0 %v5185
    %6118 = vmatmul.bf16.gmra.mxu0 %v3771
    %v6119 = vpop.f32.mrf.mxu0
    %v6120 = vadd.f32 %v6107, %v6119
    %v6121 = vpop.f32.mrf.mxu0
    %6122 = vdwg.mxu0
    %6123 = vmatpush.bf16.msra.mxu0 %v5290
    %6124 = vmatpush.bf16.msra.mxu0 %v5283
    %6125 = vmatpush.bf16.msra.mxu0 %v5276
    %6126 = vmatpush.bf16.msra.mxu0 %v5269
    %6127 = vmatpush.bf16.msra.mxu0 %v5262
    %6128 = vmatpush.bf16.msra.mxu0 %v5255
    %6129 = vmatpush.bf16.msra.mxu0 %v5248
    %6130 = vmatpush.bf16.msra.mxu0 %v5241
    %6131 = vmatmul.bf16.gmra.mxu0 %v3772
    %v6132 = vpop.f32.mrf.mxu0
    %v6133 = vadd.f32 %v6120, %v6132
    %v6134 = vpop.f32.mrf.mxu0
    %6135 = vdwg.mxu0
    %6136 = vmatpush.bf16.msra.mxu0 %v5346
    %6137 = vmatpush.bf16.msra.mxu0 %v5339
    %6138 = vmatpush.bf16.msra.mxu0 %v5332
    %6139 = vmatpush.bf16.msra.mxu0 %v5325
    %6140 = vmatpush.bf16.msra.mxu0 %v5318
    %6141 = vmatpush.bf16.msra.mxu0 %v5311
    %6142 = vmatpush.bf16.msra.mxu0 %v5304
    %6143 = vmatpush.bf16.msra.mxu0 %v5297
    %6144 = vmatmul.bf16.gmra.mxu0 %v3773
    %v6145 = vpop.f32.mrf.mxu0
    %v6146 = vadd.f32 %v6133, %v6145
    %v6147 = vpop.f32.mrf.mxu0
    %6148 = vdwg.mxu0
    %6149 = vmatpush.bf16.msra.mxu0 %v5402
    %6150 = vmatpush.bf16.msra.mxu0 %v5395
    %6151 = vmatpush.bf16.msra.mxu0 %v5388
    %6152 = vmatpush.bf16.msra.mxu0 %v5381
    %6153 = vmatpush.bf16.msra.mxu0 %v5374
    %6154 = vmatpush.bf16.msra.mxu0 %v5367
    %6155 = vmatpush.bf16.msra.mxu0 %v5360
    %6156 = vmatpush.bf16.msra.mxu0 %v5353
    %6157 = vmatmul.bf16.gmra.mxu0 %v3774
    %v6158 = vpop.f32.mrf.mxu0
    %v6159 = vadd.f32 %v6146, %v6158
    %v6160 = vpop.f32.mrf.mxu0
    %6161 = vdwg.mxu0
    %6162 = vmatpush.bf16.msra.mxu0 %v5067
    %6163 = vmatpush.bf16.msra.mxu0 %v5060
    %6164 = vmatpush.bf16.msra.mxu0 %v5053
    %6165 = vmatpush.bf16.msra.mxu0 %v5046
    %6166 = vmatpush.bf16.msra.mxu0 %v5039
    %6167 = vmatpush.bf16.msra.mxu0 %v5032
    %6168 = vmatpush.bf16.msra.mxu0 %v5025
    %6169 = vmatpush.bf16.msra.mxu0 %v5018
    %6170 = vmatmul.bf16.gmra.mxu0 %v3768
    %v6171 = vpop.f32.mrf.mxu0
    %v6172 = vadd.f32 %v3747, %v6171
    %v6173 = vpop.f32.mrf.mxu0
    %6174 = vdwg.mxu0
    %6175 = vmatpush.bf16.msra.mxu0 %v5123
    %6176 = vmatpush.bf16.msra.mxu0 %v5116
    %6177 = vmatpush.bf16.msra.mxu0 %v5109
    %6178 = vmatpush.bf16.msra.mxu0 %v5102
    %6179 = vmatpush.bf16.msra.mxu0 %v5095
    %6180 = vmatpush.bf16.msra.mxu0 %v5088
    %6181 = vmatpush.bf16.msra.mxu0 %v5081
    %6182 = vmatpush.bf16.msra.mxu0 %v5074
    %6183 = vmatmul.bf16.gmra.mxu0 %v3769
    %v6184 = vpop.f32.mrf.mxu0
    %v6185 = vadd.f32 %v6172, %v6184
    %v6186 = vpop.f32.mrf.mxu0
    %6187 = vdwg.mxu0
    %6188 = vmatpush.bf16.msra.mxu0 %v5179
    %6189 = vmatpush.bf16.msra.mxu0 %v5172
    %6190 = vmatpush.bf16.msra.mxu0 %v5165
    %6191 = vmatpush.bf16.msra.mxu0 %v5158
    %6192 = vmatpush.bf16.msra.mxu0 %v5151
    %6193 = vmatpush.bf16.msra.mxu0 %v5144
    %6194 = vmatpush.bf16.msra.mxu0 %v5137
    %6195 = vmatpush.bf16.msra.mxu0 %v5130
    %6196 = vmatmul.bf16.gmra.mxu0 %v3770
    %v6197 = vpop.f32.mrf.mxu0
    %v6198 = vadd.f32 %v6185, %v6197
    %v6199 = vpop.f32.mrf.mxu0
    %6200 = vdwg.mxu0
    %6201 = vmatpush.bf16.msra.mxu0 %v5235
    %6202 = vmatpush.bf16.msra.mxu0 %v5228
    %6203 = vmatpush.bf16.msra.mxu0 %v5221
    %6204 = vmatpush.bf16.msra.mxu0 %v5214
    %6205 = vmatpush.bf16.msra.mxu0 %v5207
    %6206 = vmatpush.bf16.msra.mxu0 %v5200
    %6207 = vmatpush.bf16.msra.mxu0 %v5193
    %6208 = vmatpush.bf16.msra.mxu0 %v5186
    %6209 = vmatmul.bf16.gmra.mxu0 %v3771
    %v6210 = vpop.f32.mrf.mxu0
    %v6211 = vadd.f32 %v6198, %v6210
    %v6212 = vpop.f32.mrf.mxu0
    %6213 = vdwg.mxu0
    %6214 = vmatpush.bf16.msra.mxu0 %v5291
    %6215 = vmatpush.bf16.msra.mxu0 %v5284
    %6216 = vmatpush.bf16.msra.mxu0 %v5277
    %6217 = vmatpush.bf16.msra.mxu0 %v5270
    %6218 = vmatpush.bf16.msra.mxu0 %v5263
    %6219 = vmatpush.bf16.msra.mxu0 %v5256
    %6220 = vmatpush.bf16.msra.mxu0 %v5249
    %6221 = vmatpush.bf16.msra.mxu0 %v5242
    %6222 = vmatmul.bf16.gmra.mxu0 %v3772
    %v6223 = vpop.f32.mrf.mxu0
    %v6224 = vadd.f32 %v6211, %v6223
    %v6225 = vpop.f32.mrf.mxu0
    %6226 = vdwg.mxu0
    %6227 = vmatpush.bf16.msra.mxu0 %v5347
    %6228 = vmatpush.bf16.msra.mxu0 %v5340
    %6229 = vmatpush.bf16.msra.mxu0 %v5333
    %6230 = vmatpush.bf16.msra.mxu0 %v5326
    %6231 = vmatpush.bf16.msra.mxu0 %v5319
    %6232 = vmatpush.bf16.msra.mxu0 %v5312
    %6233 = vmatpush.bf16.msra.mxu0 %v5305
    %6234 = vmatpush.bf16.msra.mxu0 %v5298
    %6235 = vmatmul.bf16.gmra.mxu0 %v3773
    %v6236 = vpop.f32.mrf.mxu0
    %v6237 = vadd.f32 %v6224, %v6236
    %v6238 = vpop.f32.mrf.mxu0
    %6239 = vdwg.mxu0
    %6240 = vmatpush.bf16.msra.mxu0 %v5403
    %6241 = vmatpush.bf16.msra.mxu0 %v5396
    %6242 = vmatpush.bf16.msra.mxu0 %v5389
    %6243 = vmatpush.bf16.msra.mxu0 %v5382
    %6244 = vmatpush.bf16.msra.mxu0 %v5375
    %6245 = vmatpush.bf16.msra.mxu0 %v5368
    %6246 = vmatpush.bf16.msra.mxu0 %v5361
    %6247 = vmatpush.bf16.msra.mxu0 %v5354
    %6248 = vmatmul.bf16.gmra.mxu0 %v3774
    %v6249 = vpop.f32.mrf.mxu0
    %v6250 = vadd.f32 %v6237, %v6249
    %v6251 = vpop.f32.mrf.mxu0
    %6252 = vdwg.mxu0
    %6253 = vmatpush.bf16.msra.mxu0 %v5068
    %6254 = vmatpush.bf16.msra.mxu0 %v5061
    %6255 = vmatpush.bf16.msra.mxu0 %v5054
    %6256 = vmatpush.bf16.msra.mxu0 %v5047
    %6257 = vmatpush.bf16.msra.mxu0 %v5040
    %6258 = vmatpush.bf16.msra.mxu0 %v5033
    %6259 = vmatpush.bf16.msra.mxu0 %v5026
    %6260 = vmatpush.bf16.msra.mxu0 %v5019
    %6261 = vmatmul.bf16.gmra.mxu0 %v3768
    %v6262 = vpop.f32.mrf.mxu0
    %v6263 = vadd.f32 %v3748, %v6262
    %v6264 = vpop.f32.mrf.mxu0
    %6265 = vdwg.mxu0
    %6266 = vmatpush.bf16.msra.mxu0 %v5124
    %6267 = vmatpush.bf16.msra.mxu0 %v5117
    %6268 = vmatpush.bf16.msra.mxu0 %v5110
    %6269 = vmatpush.bf16.msra.mxu0 %v5103
    %6270 = vmatpush.bf16.msra.mxu0 %v5096
    %6271 = vmatpush.bf16.msra.mxu0 %v5089
    %6272 = vmatpush.bf16.msra.mxu0 %v5082
    %6273 = vmatpush.bf16.msra.mxu0 %v5075
    %6274 = vmatmul.bf16.gmra.mxu0 %v3769
    %v6275 = vpop.f32.mrf.mxu0
    %v6276 = vadd.f32 %v6263, %v6275
    %v6277 = vpop.f32.mrf.mxu0
    %6278 = vdwg.mxu0
    %6279 = vmatpush.bf16.msra.mxu0 %v5180
    %6280 = vmatpush.bf16.msra.mxu0 %v5173
    %6281 = vmatpush.bf16.msra.mxu0 %v5166
    %6282 = vmatpush.bf16.msra.mxu0 %v5159
    %6283 = vmatpush.bf16.msra.mxu0 %v5152
    %6284 = vmatpush.bf16.msra.mxu0 %v5145
    %6285 = vmatpush.bf16.msra.mxu0 %v5138
    %6286 = vmatpush.bf16.msra.mxu0 %v5131
    %6287 = vmatmul.bf16.gmra.mxu0 %v3770
    %v6288 = vpop.f32.mrf.mxu0
    %v6289 = vadd.f32 %v6276, %v6288
    %v6290 = vpop.f32.mrf.mxu0
    %6291 = vdwg.mxu0
    %6292 = vmatpush.bf16.msra.mxu0 %v5236
    %6293 = vmatpush.bf16.msra.mxu0 %v5229
    %6294 = vmatpush.bf16.msra.mxu0 %v5222
    %6295 = vmatpush.bf16.msra.mxu0 %v5215
    %6296 = vmatpush.bf16.msra.mxu0 %v5208
    %6297 = vmatpush.bf16.msra.mxu0 %v5201
    %6298 = vmatpush.bf16.msra.mxu0 %v5194
    %6299 = vmatpush.bf16.msra.mxu0 %v5187
    %6300 = vmatmul.bf16.gmra.mxu0 %v3771
    %v6301 = vpop.f32.mrf.mxu0
    %v6302 = vadd.f32 %v6289, %v6301
    %v6303 = vpop.f32.mrf.mxu0
    %6304 = vdwg.mxu0
    %6305 = vmatpush.bf16.msra.mxu0 %v5292
    %6306 = vmatpush.bf16.msra.mxu0 %v5285
    %6307 = vmatpush.bf16.msra.mxu0 %v5278
    %6308 = vmatpush.bf16.msra.mxu0 %v5271
    %6309 = vmatpush.bf16.msra.mxu0 %v5264
    %6310 = vmatpush.bf16.msra.mxu0 %v5257
    %6311 = vmatpush.bf16.msra.mxu0 %v5250
    %6312 = vmatpush.bf16.msra.mxu0 %v5243
    %6313 = vmatmul.bf16.gmra.mxu0 %v3772
    %v6314 = vpop.f32.mrf.mxu0
    %v6315 = vadd.f32 %v6302, %v6314
    %v6316 = vpop.f32.mrf.mxu0
    %6317 = vdwg.mxu0
    %6318 = vmatpush.bf16.msra.mxu0 %v5348
    %6319 = vmatpush.bf16.msra.mxu0 %v5341
    %6320 = vmatpush.bf16.msra.mxu0 %v5334
    %6321 = vmatpush.bf16.msra.mxu0 %v5327
    %6322 = vmatpush.bf16.msra.mxu0 %v5320
    %6323 = vmatpush.bf16.msra.mxu0 %v5313
    %6324 = vmatpush.bf16.msra.mxu0 %v5306
    %6325 = vmatpush.bf16.msra.mxu0 %v5299
    %6326 = vmatmul.bf16.gmra.mxu0 %v3773
    %v6327 = vpop.f32.mrf.mxu0
    %v6328 = vadd.f32 %v6315, %v6327
    %v6329 = vpop.f32.mrf.mxu0
    %6330 = vdwg.mxu0
    %6331 = vmatpush.bf16.msra.mxu0 %v5404
    %6332 = vmatpush.bf16.msra.mxu0 %v5397
    %6333 = vmatpush.bf16.msra.mxu0 %v5390
    %6334 = vmatpush.bf16.msra.mxu0 %v5383
    %6335 = vmatpush.bf16.msra.mxu0 %v5376
    %6336 = vmatpush.bf16.msra.mxu0 %v5369
    %6337 = vmatpush.bf16.msra.mxu0 %v5362
    %6338 = vmatpush.bf16.msra.mxu0 %v5355
    %6339 = vmatmul.bf16.gmra.mxu0 %v3774
    %v6340 = vpop.f32.mrf.mxu0
    %v6341 = vadd.f32 %v6328, %v6340
    %v6342 = vpop.f32.mrf.mxu0
    %6343 = vdwg.mxu0
    %6344 = vmatpush.bf16.msra.mxu0 %v5069
    %6345 = vmatpush.bf16.msra.mxu0 %v5062
    %6346 = vmatpush.bf16.msra.mxu0 %v5055
    %6347 = vmatpush.bf16.msra.mxu0 %v5048
    %6348 = vmatpush.bf16.msra.mxu0 %v5041
    %6349 = vmatpush.bf16.msra.mxu0 %v5034
    %6350 = vmatpush.bf16.msra.mxu0 %v5027
    %6351 = vmatpush.bf16.msra.mxu0 %v5020
    %6352 = vmatmul.bf16.gmra.mxu0 %v3768
    %v6353 = vpop.f32.mrf.mxu0
    %v6354 = vadd.f32 %v3749, %v6353
    %v6355 = vpop.f32.mrf.mxu0
    %6356 = vdwg.mxu0
    %6357 = vmatpush.bf16.msra.mxu0 %v5125
    %6358 = vmatpush.bf16.msra.mxu0 %v5118
    %6359 = vmatpush.bf16.msra.mxu0 %v5111
    %6360 = vmatpush.bf16.msra.mxu0 %v5104
    %6361 = vmatpush.bf16.msra.mxu0 %v5097
    %6362 = vmatpush.bf16.msra.mxu0 %v5090
    %6363 = vmatpush.bf16.msra.mxu0 %v5083
    %6364 = vmatpush.bf16.msra.mxu0 %v5076
    %6365 = vmatmul.bf16.gmra.mxu0 %v3769
    %v6366 = vpop.f32.mrf.mxu0
    %v6367 = vadd.f32 %v6354, %v6366
    %v6368 = vpop.f32.mrf.mxu0
    %6369 = vdwg.mxu0
    %6370 = vmatpush.bf16.msra.mxu0 %v5181
    %6371 = vmatpush.bf16.msra.mxu0 %v5174
    %6372 = vmatpush.bf16.msra.mxu0 %v5167
    %6373 = vmatpush.bf16.msra.mxu0 %v5160
    %6374 = vmatpush.bf16.msra.mxu0 %v5153
    %6375 = vmatpush.bf16.msra.mxu0 %v5146
    %6376 = vmatpush.bf16.msra.mxu0 %v5139
    %6377 = vmatpush.bf16.msra.mxu0 %v5132
    %6378 = vmatmul.bf16.gmra.mxu0 %v3770
    %v6379 = vpop.f32.mrf.mxu0
    %v6380 = vadd.f32 %v6367, %v6379
    %v6381 = vpop.f32.mrf.mxu0
    %6382 = vdwg.mxu0
    %6383 = vmatpush.bf16.msra.mxu0 %v5237
    %6384 = vmatpush.bf16.msra.mxu0 %v5230
    %6385 = vmatpush.bf16.msra.mxu0 %v5223
    %6386 = vmatpush.bf16.msra.mxu0 %v5216
    %6387 = vmatpush.bf16.msra.mxu0 %v5209
    %6388 = vmatpush.bf16.msra.mxu0 %v5202
    %6389 = vmatpush.bf16.msra.mxu0 %v5195
    %6390 = vmatpush.bf16.msra.mxu0 %v5188
    %6391 = vmatmul.bf16.gmra.mxu0 %v3771
    %v6392 = vpop.f32.mrf.mxu0
    %v6393 = vadd.f32 %v6380, %v6392
    %v6394 = vpop.f32.mrf.mxu0
    %6395 = vdwg.mxu0
    %6396 = vmatpush.bf16.msra.mxu0 %v5293
    %6397 = vmatpush.bf16.msra.mxu0 %v5286
    %6398 = vmatpush.bf16.msra.mxu0 %v5279
    %6399 = vmatpush.bf16.msra.mxu0 %v5272
    %6400 = vmatpush.bf16.msra.mxu0 %v5265
    %6401 = vmatpush.bf16.msra.mxu0 %v5258
    %6402 = vmatpush.bf16.msra.mxu0 %v5251
    %6403 = vmatpush.bf16.msra.mxu0 %v5244
    %6404 = vmatmul.bf16.gmra.mxu0 %v3772
    %v6405 = vpop.f32.mrf.mxu0
    %v6406 = vadd.f32 %v6393, %v6405
    %v6407 = vpop.f32.mrf.mxu0
    %6408 = vdwg.mxu0
    %6409 = vmatpush.bf16.msra.mxu0 %v5349
    %6410 = vmatpush.bf16.msra.mxu0 %v5342
    %6411 = vmatpush.bf16.msra.mxu0 %v5335
    %6412 = vmatpush.bf16.msra.mxu0 %v5328
    %6413 = vmatpush.bf16.msra.mxu0 %v5321
    %6414 = vmatpush.bf16.msra.mxu0 %v5314
    %6415 = vmatpush.bf16.msra.mxu0 %v5307
    %6416 = vmatpush.bf16.msra.mxu0 %v5300
    %6417 = vmatmul.bf16.gmra.mxu0 %v3773
    %v6418 = vpop.f32.mrf.mxu0
    %v6419 = vadd.f32 %v6406, %v6418
    %v6420 = vpop.f32.mrf.mxu0
    %6421 = vdwg.mxu0
    %6422 = vmatpush.bf16.msra.mxu0 %v5405
    %6423 = vmatpush.bf16.msra.mxu0 %v5398
    %6424 = vmatpush.bf16.msra.mxu0 %v5391
    %6425 = vmatpush.bf16.msra.mxu0 %v5384
    %6426 = vmatpush.bf16.msra.mxu0 %v5377
    %6427 = vmatpush.bf16.msra.mxu0 %v5370
    %6428 = vmatpush.bf16.msra.mxu0 %v5363
    %6429 = vmatpush.bf16.msra.mxu0 %v5356
    %6430 = vmatmul.bf16.gmra.mxu0 %v3774
    %v6431 = vpop.f32.mrf.mxu0
    %v6432 = vadd.f32 %v6419, %v6431
    %v6433 = vpop.f32.mrf.mxu0
    %6434 = vdwg.mxu0
    %v6435 = vmax.f32 %v5886, 0.0
    %v6436 = vmax.f32 %v5977, 0.0
    %v6437 = vmax.f32 %v6068, 0.0
    %v6438 = vmax.f32 %v6159, 0.0
    %v6439 = vmax.f32 %v6250, 0.0
    %v6440 = vmax.f32 %v6341, 0.0
    %v6441 = vmax.f32 %v6432, 0.0
    %v6442 = vpack.c.bf16 %v6436, %v6435
    %v6443 = vpack.c.bf16 %v6438, %v6437
    %v6444 = vpack.c.bf16 %v6440, %v6439
    %v6445 = vpack.c.bf16 %v6441, %v6441
    %6446 = vst [vmem:[#allocation3] sm:$0xff] %v6442
    %6447 = vst [vmem:[#allocation3 + $0x8] sm:$0xff] %v6443
    %6448 = vst [vmem:[#allocation3 + $0x10] sm:$0xff] %v6444
    %6449 = vst [vmem:[#allocation3 + $0x18] sm:$0xf] %v6445
    %v6450 = vld [vmem:[#allocation3] sm:$0xff]
    %v6451 = vld [vmem:[#allocation3 + $0x8] sm:$0xff]
    %v6452 = vld [vmem:[#allocation3 + $0x10] sm:$0xff]
    %v6453 = vld [vmem:[#allocation3 + $0x18] sm:$0xf]
    %v6454 = vld [vmem:[#allocation13] sm:$0xf]
    %v6455 = vld [vmem:[#allocation13 + $0x4] sm:$0xf]
    %v6456 = vld [vmem:[#allocation13 + $0x8] sm:$0xf]
    %v6457 = vld [vmem:[#allocation13 + $0xc] sm:$0xf]
    %v6458 = vld [vmem:[#allocation13 + $0x10] sm:$0xf]
    %v6459 = vld [vmem:[#allocation13 + $0x14] sm:$0xf]
    %v6460 = vld [vmem:[#allocation13 + $0x18] sm:$0xf]
    %v6461 = vld [vmem:[#allocation13 + $0x1c] sm:$0xf]
    %v6462 = vld [vmem:[#allocation13 + $0x20] sm:$0xf]
    %v6463 = vld [vmem:[#allocation13 + $0x24] sm:$0xf]
    %v6464 = vld [vmem:[#allocation13 + $0x28] sm:$0xf]
    %v6465 = vld [vmem:[#allocation13 + $0x2c] sm:$0xf]
    %v6466 = vld [vmem:[#allocation13 + $0x30] sm:$0xf]
    %v6467 = vld [vmem:[#allocation13 + $0x34] sm:$0xf]
    %v6468 = vld [vmem:[#allocation13 + $0x38] sm:$0xf]
    %v6469 = vld [vmem:[#allocation13 + $0x3c] sm:$0xf]
    %v6470 = vld [vmem:[#allocation13 + $0x40] sm:$0xf]
    %v6471 = vld [vmem:[#allocation13 + $0x44] sm:$0xf]
    %v6472 = vld [vmem:[#allocation13 + $0x48] sm:$0xf]
    %v6473 = vld [vmem:[#allocation13 + $0x4c] sm:$0xf]
    %v6474 = vld [vmem:[#allocation13 + $0x50] sm:$0xf]
    %v6475 = vld [vmem:[#allocation13 + $0x54] sm:$0xf]
    %v6476 = vld [vmem:[#allocation13 + $0x58] sm:$0xf]
    %v6477 = vld [vmem:[#allocation13 + $0x5c] sm:$0xf]
    %v6478 = vld [vmem:[#allocation13 + $0x60] sm:$0xf]
    %v6479 = vld [vmem:[#allocation13 + $0x64] sm:$0xf]
    %v6480 = vld [vmem:[#allocation13 + $0x68] sm:$0xf]
    %v6481 = vld [vmem:[#allocation13 + $0x6c] sm:$0xf]
    %v6482 = vld [vmem:[#allocation13 + $0x70] sm:$0xf]
    %v6483 = vld [vmem:[#allocation13 + $0x74] sm:$0xf]
    %v6484 = vld [vmem:[#allocation13 + $0x78] sm:$0xf]
    %v6485 = vld [vmem:[#allocation13 + $0x7c] sm:$0xf]
    %v6486 = vld [vmem:[#allocation13 + $0x80] sm:$0xf]
    %v6487 = vld [vmem:[#allocation13 + $0x84] sm:$0xf]
    %v6488 = vld [vmem:[#allocation13 + $0x88] sm:$0xf]
    %v6489 = vld [vmem:[#allocation13 + $0x8c] sm:$0xf]
    %v6490 = vld [vmem:[#allocation13 + $0x90] sm:$0xf]
    %v6491 = vld [vmem:[#allocation13 + $0x94] sm:$0xf]
    %v6492 = vld [vmem:[#allocation13 + $0x98] sm:$0xf]
    %v6493 = vld [vmem:[#allocation13 + $0x9c] sm:$0xf]
    %v6494 = vld [vmem:[#allocation13 + $0xa0] sm:$0xf]
    %v6495 = vld [vmem:[#allocation13 + $0xa4] sm:$0xf]
    %v6496 = vld [vmem:[#allocation13 + $0xa8] sm:$0xf]
    %v6497 = vld [vmem:[#allocation13 + $0xac] sm:$0xf]
    %v6498 = vld [vmem:[#allocation13 + $0xb0] sm:$0xf]
    %v6499 = vld [vmem:[#allocation13 + $0xb4] sm:$0xf]
    %v6500 = vld [vmem:[#allocation13 + $0xb8] sm:$0xf]
    %v6501 = vld [vmem:[#allocation13 + $0xbc] sm:$0xf]
    %v6502 = vld [vmem:[#allocation13 + $0xc0] sm:$0xf]
    %v6503 = vld [vmem:[#allocation13 + $0xc4] sm:$0xf]
    %v6504 = vld [vmem:[#allocation13 + $0xc8] sm:$0xf]
    %v6505 = vld [vmem:[#allocation13 + $0xcc] sm:$0xf]
    %v6506 = vld [vmem:[#allocation13 + $0xd0] sm:$0xf]
    %v6507 = vld [vmem:[#allocation13 + $0xd4] sm:$0xf]
    %v6508 = vld [vmem:[#allocation13 + $0xd8] sm:$0xf]
    %v6509 = vld [vmem:[#allocation13 + $0xdc] sm:$0xf]
    %v6510 = vld [vmem:[#allocation13 + $0xe0] sm:$0xf]
    %v6511 = vld [vmem:[#allocation13 + $0xe4] sm:$0xf]
    %v6512 = vld [vmem:[#allocation13 + $0xe8] sm:$0xf]
    %v6513 = vld [vmem:[#allocation13 + $0xec] sm:$0xf]
    %v6514 = vld [vmem:[#allocation13 + $0xf0] sm:$0xf]
    %v6515 = vld [vmem:[#allocation13 + $0xf4] sm:$0xf]
    %v6516 = vld [vmem:[#allocation13 + $0xf8] sm:$0xf]
    %v6517 = vld [vmem:[#allocation13 + $0xfc] sm:$0xf]
    %v6518 = vld [vmem:[#allocation13 + $0x100] sm:$0xf]
    %v6519 = vld [vmem:[#allocation13 + $0x104] sm:$0xf]
    %v6520 = vld [vmem:[#allocation13 + $0x108] sm:$0xf]
    %v6521 = vld [vmem:[#allocation13 + $0x10c] sm:$0xf]
    %v6522 = vld [vmem:[#allocation13 + $0x110] sm:$0xf]
    %v6523 = vld [vmem:[#allocation13 + $0x114] sm:$0xf]
    %v6524 = vld [vmem:[#allocation13 + $0x118] sm:$0xf]
    %v6525 = vld [vmem:[#allocation13 + $0x11c] sm:$0xf]
    %v6526 = vld [vmem:[#allocation13 + $0x120] sm:$0xf]
    %v6527 = vld [vmem:[#allocation13 + $0x124] sm:$0xf]
    %v6528 = vld [vmem:[#allocation13 + $0x128] sm:$0xf]
    %v6529 = vld [vmem:[#allocation13 + $0x12c] sm:$0xf]
    %v6530 = vld [vmem:[#allocation13 + $0x130] sm:$0xf]
    %v6531 = vld [vmem:[#allocation13 + $0x134] sm:$0xf]
    %v6532 = vld [vmem:[#allocation13 + $0x138] sm:$0xf]
    %v6533 = vld [vmem:[#allocation13 + $0x13c] sm:$0xf]
    %v6534 = vld [vmem:[#allocation13 + $0x140] sm:$0xf]
    %v6535 = vld [vmem:[#allocation13 + $0x144] sm:$0xf]
    %v6536 = vld [vmem:[#allocation13 + $0x148] sm:$0xf]
    %v6537 = vld [vmem:[#allocation13 + $0x14c] sm:$0xf]
    %v6538 = vld [vmem:[#allocation13 + $0x150] sm:$0xf]
    %v6539 = vld [vmem:[#allocation13 + $0x154] sm:$0xf]
    %v6540 = vld [vmem:[#allocation13 + $0x158] sm:$0xf]
    %v6541 = vld [vmem:[#allocation13 + $0x15c] sm:$0xf]
    %v6542 = vld [vmem:[#allocation13 + $0x160] sm:$0xf]
    %v6543 = vld [vmem:[#allocation13 + $0x164] sm:$0xf]
    %v6544 = vld [vmem:[#allocation13 + $0x168] sm:$0xf]
    %v6545 = vld [vmem:[#allocation13 + $0x16c] sm:$0xf]
    %v6546 = vld [vmem:[#allocation13 + $0x170] sm:$0xf]
    %v6547 = vld [vmem:[#allocation13 + $0x174] sm:$0xf]
    %v6548 = vld [vmem:[#allocation13 + $0x178] sm:$0xf]
    %v6549 = vld [vmem:[#allocation13 + $0x17c] sm:$0xf]
    %v6550 = vld [vmem:[#allocation13 + $0x180] sm:$0xf]
    %v6551 = vld [vmem:[#allocation13 + $0x184] sm:$0xf]
    %v6552 = vld [vmem:[#allocation13 + $0x188] sm:$0xf]
    %v6553 = vld [vmem:[#allocation13 + $0x18c] sm:$0xf]
    %v6554 = vld [vmem:[#allocation13 + $0x190] sm:$0xf]
    %v6555 = vld [vmem:[#allocation13 + $0x194] sm:$0xf]
    %v6556 = vld [vmem:[#allocation13 + $0x198] sm:$0xf]
    %v6557 = vld [vmem:[#allocation13 + $0x19c] sm:$0xf]
    %v6558 = vld [vmem:[#allocation13 + $0x1a0] sm:$0xf]
    %v6559 = vld [vmem:[#allocation13 + $0x1a4] sm:$0xf]
    %v6560 = vld [vmem:[#allocation13 + $0x1a8] sm:$0xf]
    %v6561 = vld [vmem:[#allocation13 + $0x1ac] sm:$0xf]
    %v6562 = vld [vmem:[#allocation13 + $0x1b0] sm:$0xf]
    %v6563 = vld [vmem:[#allocation13 + $0x1b4] sm:$0xf]
    %v6564 = vld [vmem:[#allocation13 + $0x1b8] sm:$0xf]
    %v6565 = vld [vmem:[#allocation13 + $0x1bc] sm:$0xf]
    %v6566 = vld [vmem:[#allocation15] sm:$0x1]
    %v6568 = vperm.slane %v6566, 0
    %v6574 = vunpack.c.l.b16 %v6450
    %v6575 = vunpack.c.h.b16 %v6450
    %v6576 = vunpack.c.l.b16 %v6451
    %v6577 = vunpack.c.h.b16 %v6451
    %v6578 = vunpack.c.l.b16 %v6452
    %v6579 = vunpack.c.h.b16 %v6452
    %v6580 = vunpack.c.l.b16 %v6453
    %v6581 = vpack.c.b16 %v6574, %v6574
    %v6582 = vpack.c.b16 %v6575, %v6575
    %v6583 = vpack.c.b16 %v6576, %v6576
    %v6584 = vpack.c.b16 %v6577, %v6577
    %v6585 = vpack.c.b16 %v6578, %v6578
    %v6586 = vpack.c.b16 %v6579, %v6579
    %v6587 = vpack.c.b16 %v6580, %v6580
    %v6707 = vunpack.c.l.b16 %v6454
    %v6708 = vunpack.c.l.b16 %v6455
    %v6709 = vunpack.c.l.b16 %v6456
    %v6710 = vunpack.c.l.b16 %v6457
    %v6711 = vunpack.c.l.b16 %v6458
    %v6712 = vunpack.c.l.b16 %v6459
    %v6713 = vunpack.c.l.b16 %v6460
    %v6714 = vunpack.c.l.b16 %v6461
    %v6715 = vunpack.c.l.b16 %v6462
    %v6716 = vunpack.c.l.b16 %v6463
    %v6717 = vunpack.c.l.b16 %v6464
    %v6718 = vunpack.c.l.b16 %v6465
    %v6719 = vunpack.c.l.b16 %v6466
    %v6720 = vunpack.c.l.b16 %v6467
    %v6721 = vunpack.c.l.b16 %v6468
    %v6722 = vunpack.c.l.b16 %v6469
    %v6723 = vunpack.c.l.b16 %v6470
    %v6724 = vunpack.c.l.b16 %v6471
    %v6725 = vunpack.c.l.b16 %v6472
    %v6726 = vunpack.c.l.b16 %v6473
    %v6727 = vunpack.c.l.b16 %v6474
    %v6728 = vunpack.c.l.b16 %v6475
    %v6729 = vunpack.c.l.b16 %v6476
    %v6730 = vunpack.c.l.b16 %v6477
    %v6731 = vunpack.c.l.b16 %v6478
    %v6732 = vunpack.c.l.b16 %v6479
    %v6733 = vunpack.c.l.b16 %v6480
    %v6734 = vunpack.c.l.b16 %v6481
    %v6735 = vunpack.c.l.b16 %v6482
    %v6736 = vunpack.c.l.b16 %v6483
    %v6737 = vunpack.c.l.b16 %v6484
    %v6738 = vunpack.c.l.b16 %v6485
    %v6739 = vunpack.c.l.b16 %v6486
    %v6740 = vunpack.c.l.b16 %v6487
    %v6741 = vunpack.c.l.b16 %v6488
    %v6742 = vunpack.c.l.b16 %v6489
    %v6743 = vunpack.c.l.b16 %v6490
    %v6744 = vunpack.c.l.b16 %v6491
    %v6745 = vunpack.c.l.b16 %v6492
    %v6746 = vunpack.c.l.b16 %v6493
    %v6747 = vunpack.c.l.b16 %v6494
    %v6748 = vunpack.c.l.b16 %v6495
    %v6749 = vunpack.c.l.b16 %v6496
    %v6750 = vunpack.c.l.b16 %v6497
    %v6751 = vunpack.c.l.b16 %v6498
    %v6752 = vunpack.c.l.b16 %v6499
    %v6753 = vunpack.c.l.b16 %v6500
    %v6754 = vunpack.c.l.b16 %v6501
    %v6755 = vunpack.c.l.b16 %v6502
    %v6756 = vunpack.c.l.b16 %v6503
    %v6757 = vunpack.c.l.b16 %v6504
    %v6758 = vunpack.c.l.b16 %v6505
    %v6759 = vunpack.c.l.b16 %v6506
    %v6760 = vunpack.c.l.b16 %v6507
    %v6761 = vunpack.c.l.b16 %v6508
    %v6762 = vunpack.c.l.b16 %v6509
    %v6763 = vunpack.c.l.b16 %v6510
    %v6764 = vunpack.c.l.b16 %v6511
    %v6765 = vunpack.c.l.b16 %v6512
    %v6766 = vunpack.c.l.b16 %v6513
    %v6767 = vunpack.c.l.b16 %v6514
    %v6768 = vunpack.c.l.b16 %v6515
    %v6769 = vunpack.c.l.b16 %v6516
    %v6770 = vunpack.c.l.b16 %v6517
    %v6771 = vunpack.c.l.b16 %v6518
    %v6772 = vunpack.c.l.b16 %v6519
    %v6773 = vunpack.c.l.b16 %v6520
    %v6774 = vunpack.c.l.b16 %v6521
    %v6775 = vunpack.c.l.b16 %v6522
    %v6776 = vunpack.c.l.b16 %v6523
    %v6777 = vunpack.c.l.b16 %v6524
    %v6778 = vunpack.c.l.b16 %v6525
    %v6779 = vunpack.c.l.b16 %v6526
    %v6780 = vunpack.c.l.b16 %v6527
    %v6781 = vunpack.c.l.b16 %v6528
    %v6782 = vunpack.c.l.b16 %v6529
    %v6783 = vunpack.c.l.b16 %v6530
    %v6784 = vunpack.c.l.b16 %v6531
    %v6785 = vunpack.c.l.b16 %v6532
    %v6786 = vunpack.c.l.b16 %v6533
    %v6787 = vunpack.c.l.b16 %v6534
    %v6788 = vunpack.c.l.b16 %v6535
    %v6789 = vunpack.c.l.b16 %v6536
    %v6790 = vunpack.c.l.b16 %v6537
    %v6791 = vunpack.c.l.b16 %v6538
    %v6792 = vunpack.c.l.b16 %v6539
    %v6793 = vunpack.c.l.b16 %v6540
    %v6794 = vunpack.c.l.b16 %v6541
    %v6795 = vunpack.c.l.b16 %v6542
    %v6796 = vunpack.c.l.b16 %v6543
    %v6797 = vunpack.c.l.b16 %v6544
    %v6798 = vunpack.c.l.b16 %v6545
    %v6799 = vunpack.c.l.b16 %v6546
    %v6800 = vunpack.c.l.b16 %v6547
    %v6801 = vunpack.c.l.b16 %v6548
    %v6802 = vunpack.c.l.b16 %v6549
    %v6803 = vunpack.c.l.b16 %v6550
    %v6804 = vunpack.c.l.b16 %v6551
    %v6805 = vunpack.c.l.b16 %v6552
    %v6806 = vunpack.c.l.b16 %v6553
    %v6807 = vunpack.c.l.b16 %v6554
    %v6808 = vunpack.c.l.b16 %v6555
    %v6809 = vunpack.c.l.b16 %v6556
    %v6810 = vunpack.c.l.b16 %v6557
    %v6811 = vunpack.c.l.b16 %v6558
    %v6812 = vunpack.c.l.b16 %v6559
    %v6813 = vunpack.c.l.b16 %v6560
    %v6814 = vunpack.c.l.b16 %v6561
    %v6815 = vunpack.c.l.b16 %v6562
    %v6816 = vunpack.c.l.b16 %v6563
    %v6817 = vunpack.c.l.b16 %v6564
    %v6818 = vunpack.c.l.b16 %v6565
    %v6819 = vpack.c.b16 %v6708, %v6707
    %v6820 = vpack.c.b16 %v6710, %v6709
    %v6821 = vpack.c.b16 %v6712, %v6711
    %v6822 = vpack.c.b16 %v6714, %v6713
    %v6823 = vpack.c.b16 %v6716, %v6715
    %v6824 = vpack.c.b16 %v6718, %v6717
    %v6825 = vpack.c.b16 %v6720, %v6719
    %v6826 = vpack.c.b16 %v6722, %v6721
    %v6827 = vpack.c.b16 %v6724, %v6723
    %v6828 = vpack.c.b16 %v6726, %v6725
    %v6829 = vpack.c.b16 %v6728, %v6727
    %v6830 = vpack.c.b16 %v6730, %v6729
    %v6831 = vpack.c.b16 %v6732, %v6731
    %v6832 = vpack.c.b16 %v6734, %v6733
    %v6833 = vpack.c.b16 %v6736, %v6735
    %v6834 = vpack.c.b16 %v6738, %v6737
    %v6835 = vpack.c.b16 %v6740, %v6739
    %v6836 = vpack.c.b16 %v6742, %v6741
    %v6837 = vpack.c.b16 %v6744, %v6743
    %v6838 = vpack.c.b16 %v6746, %v6745
    %v6839 = vpack.c.b16 %v6748, %v6747
    %v6840 = vpack.c.b16 %v6750, %v6749
    %v6841 = vpack.c.b16 %v6752, %v6751
    %v6842 = vpack.c.b16 %v6754, %v6753
    %v6843 = vpack.c.b16 %v6756, %v6755
    %v6844 = vpack.c.b16 %v6758, %v6757
    %v6845 = vpack.c.b16 %v6760, %v6759
    %v6846 = vpack.c.b16 %v6762, %v6761
    %v6847 = vpack.c.b16 %v6764, %v6763
    %v6848 = vpack.c.b16 %v6766, %v6765
    %v6849 = vpack.c.b16 %v6768, %v6767
    %v6850 = vpack.c.b16 %v6770, %v6769
    %v6851 = vpack.c.b16 %v6772, %v6771
    %v6852 = vpack.c.b16 %v6774, %v6773
    %v6853 = vpack.c.b16 %v6776, %v6775
    %v6854 = vpack.c.b16 %v6778, %v6777
    %v6855 = vpack.c.b16 %v6780, %v6779
    %v6856 = vpack.c.b16 %v6782, %v6781
    %v6857 = vpack.c.b16 %v6784, %v6783
    %v6858 = vpack.c.b16 %v6786, %v6785
    %v6859 = vpack.c.b16 %v6788, %v6787
    %v6860 = vpack.c.b16 %v6790, %v6789
    %v6861 = vpack.c.b16 %v6792, %v6791
    %v6862 = vpack.c.b16 %v6794, %v6793
    %v6863 = vpack.c.b16 %v6796, %v6795
    %v6864 = vpack.c.b16 %v6798, %v6797
    %v6865 = vpack.c.b16 %v6800, %v6799
    %v6866 = vpack.c.b16 %v6802, %v6801
    %v6867 = vpack.c.b16 %v6804, %v6803
    %v6868 = vpack.c.b16 %v6806, %v6805
    %v6869 = vpack.c.b16 %v6808, %v6807
    %v6870 = vpack.c.b16 %v6810, %v6809
    %v6871 = vpack.c.b16 %v6812, %v6811
    %v6872 = vpack.c.b16 %v6814, %v6813
    %v6873 = vpack.c.b16 %v6816, %v6815
    %v6874 = vpack.c.b16 %v6818, %v6817
    %6931 = vmatpush.bf16.msra.mxu0 %v6826
    %6932 = vmatpush.bf16.msra.mxu0 %v6825
    %6933 = vmatpush.bf16.msra.mxu0 %v6824
    %6934 = vmatpush.bf16.msra.mxu0 %v6823
    %6935 = vmatpush.bf16.msra.mxu0 %v6822
    %6936 = vmatpush.bf16.msra.mxu0 %v6821
    %6937 = vmatpush.bf16.msra.mxu0 %v6820
    %6938 = vmatpush.bf16.msra.mxu0 %v6819
    %6939 = vmatmul.bf16.gmra.mxu0 %v6581
    %v6940 = vpop.f32.mrf.mxu0
    %v6941 = vadd.f32 %v6568, %v6940
    %v6942 = vpop.f32.mrf.mxu0
    %6943 = vdwg.mxu0
    %6944 = vmatpush.bf16.msra.mxu0 %v6834
    %6945 = vmatpush.bf16.msra.mxu0 %v6833
    %6946 = vmatpush.bf16.msra.mxu0 %v6832
    %6947 = vmatpush.bf16.msra.mxu0 %v6831
    %6948 = vmatpush.bf16.msra.mxu0 %v6830
    %6949 = vmatpush.bf16.msra.mxu0 %v6829
    %6950 = vmatpush.bf16.msra.mxu0 %v6828
    %6951 = vmatpush.bf16.msra.mxu0 %v6827
    %6952 = vmatmul.bf16.gmra.mxu0 %v6582
    %v6953 = vpop.f32.mrf.mxu0
    %v6954 = vadd.f32 %v6941, %v6953
    %v6955 = vpop.f32.mrf.mxu0
    %6956 = vdwg.mxu0
    %6957 = vmatpush.bf16.msra.mxu0 %v6842
    %6958 = vmatpush.bf16.msra.mxu0 %v6841
    %6959 = vmatpush.bf16.msra.mxu0 %v6840
    %6960 = vmatpush.bf16.msra.mxu0 %v6839
    %6961 = vmatpush.bf16.msra.mxu0 %v6838
    %6962 = vmatpush.bf16.msra.mxu0 %v6837
    %6963 = vmatpush.bf16.msra.mxu0 %v6836
    %6964 = vmatpush.bf16.msra.mxu0 %v6835
    %6965 = vmatmul.bf16.gmra.mxu0 %v6583
    %v6966 = vpop.f32.mrf.mxu0
    %v6967 = vadd.f32 %v6954, %v6966
    %v6968 = vpop.f32.mrf.mxu0
    %6969 = vdwg.mxu0
    %6970 = vmatpush.bf16.msra.mxu0 %v6850
    %6971 = vmatpush.bf16.msra.mxu0 %v6849
    %6972 = vmatpush.bf16.msra.mxu0 %v6848
    %6973 = vmatpush.bf16.msra.mxu0 %v6847
    %6974 = vmatpush.bf16.msra.mxu0 %v6846
    %6975 = vmatpush.bf16.msra.mxu0 %v6845
    %6976 = vmatpush.bf16.msra.mxu0 %v6844
    %6977 = vmatpush.bf16.msra.mxu0 %v6843
    %6978 = vmatmul.bf16.gmra.mxu0 %v6584
    %v6979 = vpop.f32.mrf.mxu0
    %v6980 = vadd.f32 %v6967, %v6979
    %v6981 = vpop.f32.mrf.mxu0
    %6982 = vdwg.mxu0
    %6983 = vmatpush.bf16.msra.mxu0 %v6858
    %6984 = vmatpush.bf16.msra.mxu0 %v6857
    %6985 = vmatpush.bf16.msra.mxu0 %v6856
    %6986 = vmatpush.bf16.msra.mxu0 %v6855
    %6987 = vmatpush.bf16.msra.mxu0 %v6854
    %6988 = vmatpush.bf16.msra.mxu0 %v6853
    %6989 = vmatpush.bf16.msra.mxu0 %v6852
    %6990 = vmatpush.bf16.msra.mxu0 %v6851
    %6991 = vmatmul.bf16.gmra.mxu0 %v6585
    %v6992 = vpop.f32.mrf.mxu0
    %v6993 = vadd.f32 %v6980, %v6992
    %v6994 = vpop.f32.mrf.mxu0
    %6995 = vdwg.mxu0
    %6996 = vmatpush.bf16.msra.mxu0 %v6866
    %6997 = vmatpush.bf16.msra.mxu0 %v6865
    %6998 = vmatpush.bf16.msra.mxu0 %v6864
    %6999 = vmatpush.bf16.msra.mxu0 %v6863
    %7000 = vmatpush.bf16.msra.mxu0 %v6862
    %7001 = vmatpush.bf16.msra.mxu0 %v6861
    %7002 = vmatpush.bf16.msra.mxu0 %v6860
    %7003 = vmatpush.bf16.msra.mxu0 %v6859
    %7004 = vmatmul.bf16.gmra.mxu0 %v6586
    %v7005 = vpop.f32.mrf.mxu0
    %v7006 = vadd.f32 %v6993, %v7005
    %v7007 = vpop.f32.mrf.mxu0
    %7008 = vdwg.mxu0
    %7009 = vmatpush.bf16.msra.mxu0 %v6874
    %7010 = vmatpush.bf16.msra.mxu0 %v6873
    %7011 = vmatpush.bf16.msra.mxu0 %v6872
    %7012 = vmatpush.bf16.msra.mxu0 %v6871
    %7013 = vmatpush.bf16.msra.mxu0 %v6870
    %7014 = vmatpush.bf16.msra.mxu0 %v6869
    %7015 = vmatpush.bf16.msra.mxu0 %v6868
    %7016 = vmatpush.bf16.msra.mxu0 %v6867
    %7017 = vmatmul.bf16.gmra.mxu0 %v6587
    %v7018 = vpop.f32.mrf.mxu0
    %v7019 = vadd.f32 %v7006, %v7018
    %v7020 = vpop.f32.mrf.mxu0
    %7021 = vdwg.mxu0
    %7022 = vst [vmem:[#allocation16] sm:$0xff] %v7019
    // Predicated region
    $region58: #{tpu_custom_call.1} parent=1 // pred_check
      _
    $region59: #{tpu_custom_call.1} parent=1 // pred_check_branch
      %7024 = sbr.rel (0) target = $region61
    $region60: #{tpu_custom_call.1} parent=1 // pred_region
      %7026 = vsyncadd [#allocation6], 0
      %s7028 = sshll.u32 [#allocation16], 4
      %s7029 = int_to_ptr.vmem [resolvable:$true] %s7028
      %s7030 = sshll.u32 %s7, 4
      %s7031 = int_to_ptr.hbm [resolvable:$true] %s7030
      %7033 = dma.vmem_to_hbm [thread:$0]  %s7029, 128, %s7031, [#allocation6]
    $region61: #{tpu_custom_call.1} parent=1 // pred_fallthru
      _
    // Predicated region
    $region62: #{tpu_custom_call.1} parent=1 // pred_check
      _
    $region63: #{tpu_custom_call.1} parent=1 // pred_check_branch
      %7035 = sbr.rel (0) target = $region65
    $region64: #{tpu_custom_call.1} parent=1 // pred_region
      %7037 = dma.done [#allocation6], 128
    $region65: #{tpu_custom_call.1} parent=1 // pred_fallthru
      _
    %7038 = vsyncpa [#allocation5], 1
    %7039 = vsyncpa [#allocation8], 1
    %7040 = vsyncpa [#allocation11], 1
    %7041 = vsyncpa [#allocation14], 1
    %7042 = vsyncpa [#allocation6], 1

</llo_original>
